<compile_context>
chip_gen: v6e
topology: v6e:2x2x1
jax: 0.10.0
libtpu: 0.0.40
codegen_flags: <defaults>
</compile_context>

<pallas_src>
import jax
import jax.numpy as jnp
from jax import lax
from jax.experimental import pallas as pl
from jax.experimental.pallas import tpu as pltpu

# ---- small, module-consistent dimensions (module uses 512 channels; scaled down) ----
B = 2          # batch
L = 80         # Conv1d length axis (sequence length)
POST_CH = 128  # hidden channels (512 in the module, scaled down; lane-aligned)
K = 5          # kernel size (as in the module)
PAD = (K - 1) // 2
EPS = 1e-5


def _round_up(x, m):
    return ((x + m - 1) // m) * m


# ================================ fused Pallas kernel ================================

def _postnet_kernel(x_ref, w1_ref, b1_ref,
                    w2_ref, b2_ref, w3_ref, b3_ref, w4_ref, b4_ref,
                    w5_ref, b5_ref,
                    o_ref,
                    xb, buf0, buf1, cols):
    """One batch row of the whole PostNet per grid step.

    x_ref : (1, L, 1)    f32   input row, channel-last
    w1    : (K, C)       f32   conv1 weight, BN-folded
    w2..4 : (K*C, C)     bf16  conv2..4 weights, BN-folded, im2col-flattened
    w5    : (K, C)       f32   conv5 weight
    b*    : (1,C)/(1,1)  f32   per-layer bias (BN-folded)
    o_ref : (1, 1, 128)  f32   lane-dense output row (first L lanes valid)
    xb    : (Lp, C)      f32   scratch: lane-broadcast, zero-padded input
    buf0/1: (Lp, C)      bf16  scratch: ping-pong padded activations
    cols  : (L, K*C)     bf16  scratch: im2col matrix (reused by conv2..4)
    """
    Lp, C = buf0.shape
    Ln = cols.shape[0]
    Kk = w1_ref.shape[0]
    pad = (Kk - 1) // 2
    f32 = jnp.float32
    bf16 = jnp.bfloat16

    # ---- zero only the halo rows (interior is fully rewritten every layer) ----
    # Scratch is per-core, so do this every grid step (it is a handful of rows).
    lo = pad
    hi = Lp - (pad + Ln)
    if lo > 0:
        xb[0:lo, :] = jnp.zeros((lo, C), f32)
    if hi > 0:
        xb[pad + Ln:Lp, :] = jnp.zeros((hi, C), f32)
    for buf in (buf0, buf1):
        if lo > 0:
            buf[0:lo, :] = jnp.zeros((lo, C), bf16)
        if hi > 0:
            buf[pad + Ln:Lp, :] = jnp.zeros((hi, C), bf16)

    # ---- conv1 (1 -> C) + folded BN + tanh -------------------------------------
    # Broadcast x across the 128 lanes ONCE, then 5 shifted f32 VPU FMAs.
    xb[pad:pad + Ln, :] = jnp.broadcast_to(x_ref[0], (Ln, C))
    acc = jnp.zeros((Ln, C), f32)
    for k in range(Kk):
        acc = acc + xb[k:k + Ln, :] * w1_ref[k:k + 1, :]
    buf0[pad:pad + Ln, :] = jnp.tanh(acc + b1_ref[...]).astype(bf16)

    # ---- conv2..conv4 (C -> C) + folded BN + tanh ------------------------------
    # bf16 im2col (pure copies, no casts) -> ONE 2-D MXU matmul -> f32 bias + tanh.
    for src, dst, w_ref, b_ref in ((buf0, buf1, w2_ref, b2_ref),
                                   (buf1, buf0, w3_ref, b3_ref),
                                   (buf0, buf1, w4_ref, b4_ref)):
        for k in range(Kk):
            cols[:, k * C:(k + 1) * C] = src[k:k + Ln, :]
        y = jnp.dot(cols[...], w_ref[...], preferred_element_type=f32)   # (L, C)
        dst[pad:pad + Ln, :] = jnp.tanh(y + b_ref[...]).astype(bf16)

    # ---- conv5 (C -> 1), no BN / tanh ------------------------------------------
    # 5 f32 tap FMAs straight off buf1, then ONE lane reduction over C.
    acc5 = jnp.zeros((Ln, C), f32)
    for k in range(Kk):
        acc5 = acc5 + buf1[k:k + Ln, :].astype(f32) * w5_ref[k:k + 1, :]
    row = jnp.sum(acc5[None, :, :], axis=-1) + b5_ref[...]      # (1, L) in lanes
    o_ref[...] = jnp.zeros(o_ref.shape, f32)
    o_ref[:, :, 0:Ln] = row.reshape(1, 1, Ln)


# ================================ pallas_call wrapper ================================

def _postnet_call(params, x_bl1):
    Bn, Ln, _ = x_bl1.shape
    Kc, C = params["w2"].shape
    Kk = params["w1"].shape[0]
    Lp = _round_up(Ln + Kk - 1, 8)            # padded length, sublane-aligned
    OUTW = max(128, _round_up(Ln, 128))       # lane-dense output width

    const2 = lambda b: (0, 0)                 # weights/biases: stay resident in VMEM
    out = pl.pallas_call(
        _postnet_kernel,
        out_shape=jax.ShapeDtypeStruct((Bn, 1, OUTW), jnp.float32),
        grid_spec=pltpu.PrefetchScalarGridSpec(
            num_scalar_prefetch=0,
            grid=(Bn,),
            in_specs=[
                pl.BlockSpec((1, Ln, 1), lambda b: (b, 0, 0)),   # x (one batch row)
                pl.BlockSpec((Kk, C), const2),                   # w1
                pl.BlockSpec((1, C), const2),                    # b1
                pl.BlockSpec((Kc, C), const2),                   # w2
                pl.BlockSpec((1, C), const2),                    # b2
                pl.BlockSpec((Kc, C), const2),                   # w3
                pl.BlockSpec((1, C), const2),                    # b3
                pl.BlockSpec((Kc, C), const2),                   # w4
                pl.BlockSpec((1, C), const2),                    # b4
                pl.BlockSpec((Kk, C), const2),                   # w5
                pl.BlockSpec((1, 1), const2),                    # b5
            ],
            out_specs=pl.BlockSpec((1, 1, OUTW), lambda b: (b, 0, 0)),
            scratch_shapes=[
                pltpu.VMEM((Lp, C), jnp.float32),     # xb  (broadcast padded input)
                pltpu.VMEM((Lp, C), jnp.bfloat16),    # buf0
                pltpu.VMEM((Lp, C), jnp.bfloat16),    # buf1
                pltpu.VMEM((Ln, Kc), jnp.bfloat16),   # cols (im2col, reused)
            ]),
        compiler_params=pltpu.CompilerParams(
            dimension_semantics=("parallel",)),       # both TCs on v7x
    )(x_bl1, params["w1"], params["b1"],
      params["w2"], params["b2"], params["w3"], params["b3"],
      params["w4"], params["b4"], params["w5"], params["b5"])
    return out[:, 0, :Ln]                             # (B, L)


@jax.jit
def postnet_forward(params, x_ncl):
    """PostNet forward. x_ncl: (B, 1, L) as in the PyTorch module. Returns (B, 1, L)."""
    Bn, _, Ln = x_ncl.shape
    x = x_ncl.reshape(Bn, Ln, 1)          # channel dim is 1 -> pure reshape, no copy
    y = _postnet_call(params, x)          # (B, L)
    return y.reshape(Bn, 1, Ln)


# ================================ parameters ================================

def init_raw_params(key, *, channels=POST_CH, kernel_size=K):
    """PyTorch-layout params: Conv1d weight (Cout, Cin, K), bias (Cout,);
    BatchNorm1d gamma/beta and synthetic running stats (eval mode)."""
    def nrm(k, shape, scale=0.05):
        return scale * jax.random.normal(k, shape, jnp.float32)

    keys = iter(jax.random.split(key, 40))
    chans = [(1, channels), (channels, channels), (channels, channels),
             (channels, channels), (channels, 1)]
    raw = []
    for i, (cin, cout) in enumerate(chans):
        blk = {"w": nrm(next(keys), (cout, cin, kernel_size)),
               "b": nrm(next(keys), (cout,))}
        if i < 4:  # ConvTanhBlock: conv -> BatchNorm1d -> tanh
            blk["gamma"] = 1.0 + nrm(next(keys), (cout,))
            blk["beta"] = nrm(next(keys), (cout,))
            blk["mean"] = nrm(next(keys), (cout,))
            blk["var"] = 1.0 + jnp.abs(nrm(next(keys), (cout,)))
        raw.append(blk)
    return raw


def prepare_params(raw, eps=EPS):
    """One-time prep (hoisted out of the per-call path): fold eval-mode BatchNorm
    into the conv weight/bias, flatten for im2col, cast MXU weights to bf16."""
    def fold(blk):
        w = jnp.transpose(blk["w"], (2, 1, 0))                 # -> (K, Cin, Cout)
        b = blk["b"]
        if "gamma" in blk:
            scale = blk["gamma"] * lax.rsqrt(blk["var"] + eps)
            w = w * scale[None, None, :]
            b = (b - blk["mean"]) * scale + blk["beta"]
        return w, b

    p = {}
    w, b = fold(raw[0])                                         # (K, 1, C)
    p["w1"] = w[:, 0, :].astype(jnp.float32)                    # (K, C)
    p["b1"] = b.reshape(1, -1).astype(jnp.float32)
    for i in (1, 2, 3):                                         # (K, C, C) -> (K*C, C) bf16
        w, b = fold(raw[i])
        kk, cin, cout = w.shape
        p[f"w{i + 1}"] = w.reshape(kk * cin, cout).astype(jnp.bfloat16)
        p[f"b{i + 1}"] = b.reshape(1, -1).astype(jnp.float32)
    w, b = fold(raw[4])                                         # (K, C, 1) -> (K, C)
    p["w5"] = w[:, :, 0].astype(jnp.float32)
    p["b5"] = b.reshape(1, 1).astype(jnp.float32)
    return p


# ================================ pure-JAX reference ================================

def postnet_reference(raw, x_ncl, eps=EPS):
    """f32 reference matching the PyTorch module (eval-mode BatchNorm)."""
    x = x_ncl
    for blk in raw:
        y = lax.conv_general_dilated(
            x, blk["w"], window_strides=(1,), padding=[(PAD, PAD)],
            dimension_numbers=("NCH", "OIH", "NCH"),
            precision=lax.Precision.HIGHEST)
        y = y + blk["b"][None, :, None]
        if "gamma" in blk:
            scale = blk["gamma"] / jnp.sqrt(blk["var"] + eps)
            y = (y - blk["mean"][None, :, None]) * scale[None, :, None] \
                + blk["beta"][None, :, None]
            y = jnp.tanh(y)
        x = y
    return x


# ================================ main ================================

if __name__ == "__main__":
    key = jax.random.PRNGKey(0)
    kp, kx = jax.random.split(key)
    raw = init_raw_params(kp)
    params = prepare_params(raw)

    x = jax.random.normal(kx, (B, 1, L), jnp.float32)   # PyTorch NCL input, Cin = 1

    y = postnet_forward(params, x)
    jax.block_until_ready(y)
    assert y.shape == (B, 1, L)

    y_ref = postnet_reference(raw, x)
    err = float(jnp.max(jnp.abs(y - y_ref)))
    assert err < 5e-2, f"mismatch vs reference: {err}"

    print("KERNEL_OK")
</pallas_src>

<mosaic_0001>
module attributes {stable_mosaic.version = 11 : i64} {
  func.func @_postnet_kernel(%arg0: i32, %arg1: memref<1x80x1xf32, #tpu.memory_space<vmem>>, %arg2: memref<5x128xf32, #tpu.memory_space<vmem>>, %arg3: memref<1x128xf32, #tpu.memory_space<vmem>>, %arg4: memref<640x128xbf16, #tpu.memory_space<vmem>>, %arg5: memref<1x128xf32, #tpu.memory_space<vmem>>, %arg6: memref<640x128xbf16, #tpu.memory_space<vmem>>, %arg7: memref<1x128xf32, #tpu.memory_space<vmem>>, %arg8: memref<640x128xbf16, #tpu.memory_space<vmem>>, %arg9: memref<1x128xf32, #tpu.memory_space<vmem>>, %arg10: memref<5x128xf32, #tpu.memory_space<vmem>>, %arg11: memref<1x1xf32, #tpu.memory_space<vmem>>, %arg12: memref<1x1x128xf32, #tpu.memory_space<vmem>>, %arg13: memref<88x128xf32, #tpu.memory_space<vmem>>, %arg14: memref<88x128xbf16, #tpu.memory_space<vmem>>, %arg15: memref<88x128xbf16, #tpu.memory_space<vmem>>, %arg16: memref<80x640xbf16, #tpu.memory_space<vmem>>) attributes {dimension_semantics = [#tpu.dimension_semantics<parallel>], iteration_bounds = array<i64: 2>, scalar_prefetch = 0 : i64, scratch_operands = 4 : i64, tpu.core_type = #tpu.core_type<tc>, window_params = [{transform_indices = @transform_0, window_bounds = array<i64: 1, 80, 1>}, {pipeline_mode = #tpu.pipeline_mode<synchronous>, transform_indices = @transform_1, window_bounds = array<i64: 5, 128>}, {pipeline_mode = #tpu.pipeline_mode<synchronous>, transform_indices = @transform_2, window_bounds = array<i64: 1, 128>}, {pipeline_mode = #tpu.pipeline_mode<synchronous>, transform_indices = @transform_3, window_bounds = array<i64: 640, 128>}, {pipeline_mode = #tpu.pipeline_mode<synchronous>, transform_indices = @transform_4, window_bounds = array<i64: 1, 128>}, {pipeline_mode = #tpu.pipeline_mode<synchronous>, transform_indices = @transform_5, window_bounds = array<i64: 640, 128>}, {pipeline_mode = #tpu.pipeline_mode<synchronous>, transform_indices = @transform_6, window_bounds = array<i64: 1, 128>}, {pipeline_mode = #tpu.pipeline_mode<synchronous>, transform_indices = @transform_7, window_bounds = array<i64: 640, 128>}, {pipeline_mode = #tpu.pipeline_mode<synchronous>, transform_indices = @transform_8, window_bounds = array<i64: 1, 128>}, {pipeline_mode = #tpu.pipeline_mode<synchronous>, transform_indices = @transform_9, window_bounds = array<i64: 5, 128>}, {pipeline_mode = #tpu.pipeline_mode<synchronous>, transform_indices = @transform_10, window_bounds = array<i64: 1, 1>}, {transform_indices = @transform_11, window_bounds = array<i64: 1, 1, 128>}]} {
    %cst = arith.constant 0.000000e+00 : f32
    %0 = vector.broadcast %cst : f32 to vector<2x128xf32>
    %c0 = arith.constant 0 : index
    %c0_0 = arith.constant 0 : index
    %1 = vector.load %arg13[%c0, %c0_0] : memref<88x128xf32, #tpu.memory_space<vmem>>, vector<2x128xf32>
    tpu.vector_store %arg13[%c0, %c0_0], %0 {strides = array<i32>} : memref<88x128xf32, #tpu.memory_space<vmem>>, vector<2x128xf32>,
    %cst_1 = arith.constant 0.000000e+00 : f32
    %2 = vector.broadcast %cst_1 : f32 to vector<6x128xf32>
    %c82 = arith.constant 82 : index
    %c0_2 = arith.constant 0 : index
    %3 = vector.load %arg13[%c82, %c0_2] : memref<88x128xf32, #tpu.memory_space<vmem>>, vector<6x128xf32>
    tpu.vector_store %arg13[%c82, %c0_2], %2 {strides = array<i32>} : memref<88x128xf32, #tpu.memory_space<vmem>>, vector<6x128xf32>,
    %cst_3 = arith.constant 0.000000e+00 : bf16
    %4 = vector.broadcast %cst_3 : bf16 to vector<2x128xbf16>
    %c0_4 = arith.constant 0 : index
    %c0_5 = arith.constant 0 : index
    %5 = vector.load %arg14[%c0_4, %c0_5] : memref<88x128xbf16, #tpu.memory_space<vmem>>, vector<2x128xbf16>
    tpu.vector_store %arg14[%c0_4, %c0_5], %4 {strides = array<i32>} : memref<88x128xbf16, #tpu.memory_space<vmem>>, vector<2x128xbf16>,
    %cst_6 = arith.constant 0.000000e+00 : bf16
    %6 = vector.broadcast %cst_6 : bf16 to vector<6x128xbf16>
    %c82_7 = arith.constant 82 : index
    %c0_8 = arith.constant 0 : index
    %7 = vector.load %arg14[%c82_7, %c0_8] : memref<88x128xbf16, #tpu.memory_space<vmem>>, vector<6x128xbf16>
    tpu.vector_store %arg14[%c82_7, %c0_8], %6 {strides = array<i32>} : memref<88x128xbf16, #tpu.memory_space<vmem>>, vector<6x128xbf16>,
    %cst_9 = arith.constant 0.000000e+00 : bf16
    %8 = vector.broadcast %cst_9 : bf16 to vector<2x128xbf16>
    %c0_10 = arith.constant 0 : index
    %c0_11 = arith.constant 0 : index
    %9 = vector.load %arg15[%c0_10, %c0_11] : memref<88x128xbf16, #tpu.memory_space<vmem>>, vector<2x128xbf16>
    tpu.vector_store %arg15[%c0_10, %c0_11], %8 {strides = array<i32>} : memref<88x128xbf16, #tpu.memory_space<vmem>>, vector<2x128xbf16>,
    %cst_12 = arith.constant 0.000000e+00 : bf16
    %10 = vector.broadcast %cst_12 : bf16 to vector<6x128xbf16>
    %c82_13 = arith.constant 82 : index
    %c0_14 = arith.constant 0 : index
    %11 = vector.load %arg15[%c82_13, %c0_14] : memref<88x128xbf16, #tpu.memory_space<vmem>>, vector<6x128xbf16>
    tpu.vector_store %arg15[%c82_13, %c0_14], %10 {strides = array<i32>} : memref<88x128xbf16, #tpu.memory_space<vmem>>, vector<6x128xbf16>,
    %c0_15 = arith.constant 0 : index
    %c0_16 = arith.constant 0 : index
    %c0_17 = arith.constant 0 : index
    %12 = vector.load %arg1[%c0_15, %c0_16, %c0_17] : memref<1x80x1xf32, #tpu.memory_space<vmem>>, vector<1x80x1xf32>
    %13 = vector.shape_cast %12 : vector<1x80x1xf32> to vector<80x1xf32>
    %14 = vector.shape_cast %13 : vector<80x1xf32> to vector<80x1xf32>
    %15 = vector.broadcast %14 : vector<80x1xf32> to vector<80x128xf32>
    %c2 = arith.constant 2 : index
    %c0_18 = arith.constant 0 : index
    %16 = vector.load %arg13[%c2, %c0_18] : memref<88x128xf32, #tpu.memory_space<vmem>>, vector<80x128xf32>
    tpu.vector_store %arg13[%c2, %c0_18], %15 {strides = array<i32>} : memref<88x128xf32, #tpu.memory_space<vmem>>, vector<80x128xf32>,
    %cst_19 = arith.constant 0.000000e+00 : f32
    %17 = vector.broadcast %cst_19 : f32 to vector<80x128xf32>
    %c0_20 = arith.constant 0 : index
    %c0_21 = arith.constant 0 : index
    %18 = vector.load %arg13[%c0_20, %c0_21] : memref<88x128xf32, #tpu.memory_space<vmem>>, vector<80x128xf32>
    %c0_22 = arith.constant 0 : index
    %c0_23 = arith.constant 0 : index
    %19 = vector.load %arg2[%c0_22, %c0_23] : memref<5x128xf32, #tpu.memory_space<vmem>>, vector<1x128xf32>
    %20 = vector.broadcast %19 : vector<1x128xf32> to vector<80x128xf32>
    %21 = arith.mulf %18, %20 : vector<80x128xf32>
    %22 = arith.addf %17, %21 : vector<80x128xf32>
    %c1 = arith.constant 1 : index
    %c0_24 = arith.constant 0 : index
    %23 = vector.load %arg13[%c1, %c0_24] : memref<88x128xf32, #tpu.memory_space<vmem>>, vector<80x128xf32>
    %c1_25 = arith.constant 1 : index
    %c0_26 = arith.constant 0 : index
    %24 = vector.load %arg2[%c1_25, %c0_26] : memref<5x128xf32, #tpu.memory_space<vmem>>, vector<1x128xf32>
    %25 = vector.broadcast %24 : vector<1x128xf32> to vector<80x128xf32>
    %26 = arith.mulf %23, %25 : vector<80x128xf32>
    %27 = arith.addf %22, %26 : vector<80x128xf32>
    %c2_27 = arith.constant 2 : index
    %c0_28 = arith.constant 0 : index
    %28 = vector.load %arg13[%c2_27, %c0_28] : memref<88x128xf32, #tpu.memory_space<vmem>>, vector<80x128xf32>
    %c2_29 = arith.constant 2 : index
    %c0_30 = arith.constant 0 : index
    %29 = vector.load %arg2[%c2_29, %c0_30] : memref<5x128xf32, #tpu.memory_space<vmem>>, vector<1x128xf32>
    %30 = vector.broadcast %29 : vector<1x128xf32> to vector<80x128xf32>
    %31 = arith.mulf %28, %30 : vector<80x128xf32>
    %32 = arith.addf %27, %31 : vector<80x128xf32>
    %c3 = arith.constant 3 : index
    %c0_31 = arith.constant 0 : index
    %33 = vector.load %arg13[%c3, %c0_31] : memref<88x128xf32, #tpu.memory_space<vmem>>, vector<80x128xf32>
    %c3_32 = arith.constant 3 : index
    %c0_33 = arith.constant 0 : index
    %34 = vector.load %arg2[%c3_32, %c0_33] : memref<5x128xf32, #tpu.memory_space<vmem>>, vector<1x128xf32>
    %35 = vector.broadcast %34 : vector<1x128xf32> to vector<80x128xf32>
    %36 = arith.mulf %33, %35 : vector<80x128xf32>
    %37 = arith.addf %32, %36 : vector<80x128xf32>
    %c4 = arith.constant 4 : index
    %c0_34 = arith.constant 0 : index
    %38 = vector.load %arg13[%c4, %c0_34] : memref<88x128xf32, #tpu.memory_space<vmem>>, vector<80x128xf32>
    %c4_35 = arith.constant 4 : index
    %c0_36 = arith.constant 0 : index
    %39 = vector.load %arg2[%c4_35, %c0_36] : memref<5x128xf32, #tpu.memory_space<vmem>>, vector<1x128xf32>
    %40 = vector.broadcast %39 : vector<1x128xf32> to vector<80x128xf32>
    %41 = arith.mulf %38, %40 : vector<80x128xf32>
    %42 = arith.addf %37, %41 : vector<80x128xf32>
    %c0_37 = arith.constant 0 : index
    %c0_38 = arith.constant 0 : index
    %43 = vector.load %arg3[%c0_37, %c0_38] : memref<1x128xf32, #tpu.memory_space<vmem>>, vector<1x128xf32>
    %44 = vector.broadcast %43 : vector<1x128xf32> to vector<80x128xf32>
    %45 = arith.addf %42, %44 : vector<80x128xf32>
    %46 = math.tanh %45 : vector<80x128xf32>
    %47 = arith.truncf %46 : vector<80x128xf32> to vector<80x128xbf16>
    %c2_39 = arith.constant 2 : index
    %c0_40 = arith.constant 0 : index
    %48 = vector.load %arg14[%c2_39, %c0_40] : memref<88x128xbf16, #tpu.memory_space<vmem>>, vector<80x128xbf16>
    tpu.vector_store %arg14[%c2_39, %c0_40], %47 {strides = array<i32>} : memref<88x128xbf16, #tpu.memory_space<vmem>>, vector<80x128xbf16>,
    %c0_41 = arith.constant 0 : index
    %c0_42 = arith.constant 0 : index
    %49 = vector.load %arg14[%c0_41, %c0_42] : memref<88x128xbf16, #tpu.memory_space<vmem>>, vector<80x128xbf16>
    %c0_43 = arith.constant 0 : index
    %c0_44 = arith.constant 0 : index
    %50 = vector.load %arg16[%c0_43, %c0_44] : memref<80x640xbf16, #tpu.memory_space<vmem>>, vector<80x128xbf16>
    tpu.vector_store %arg16[%c0_43, %c0_44], %49 {strides = array<i32>} : memref<80x640xbf16, #tpu.memory_space<vmem>>, vector<80x128xbf16>,
    %c1_45 = arith.constant 1 : index
    %c0_46 = arith.constant 0 : index
    %51 = vector.load %arg14[%c1_45, %c0_46] : memref<88x128xbf16, #tpu.memory_space<vmem>>, vector<80x128xbf16>
    %c0_47 = arith.constant 0 : index
    %c128 = arith.constant 128 : index
    %52 = vector.load %arg16[%c0_47, %c128] : memref<80x640xbf16, #tpu.memory_space<vmem>>, vector<80x128xbf16>
    tpu.vector_store %arg16[%c0_47, %c128], %51 {strides = array<i32>} : memref<80x640xbf16, #tpu.memory_space<vmem>>, vector<80x128xbf16>,
    %c2_48 = arith.constant 2 : index
    %c0_49 = arith.constant 0 : index
    %53 = vector.load %arg14[%c2_48, %c0_49] : memref<88x128xbf16, #tpu.memory_space<vmem>>, vector<80x128xbf16>
    %c0_50 = arith.constant 0 : index
    %c256 = arith.constant 256 : index
    %54 = vector.load %arg16[%c0_50, %c256] : memref<80x640xbf16, #tpu.memory_space<vmem>>, vector<80x128xbf16>
    tpu.vector_store %arg16[%c0_50, %c256], %53 {strides = array<i32>} : memref<80x640xbf16, #tpu.memory_space<vmem>>, vector<80x128xbf16>,
    %c3_51 = arith.constant 3 : index
    %c0_52 = arith.constant 0 : index
    %55 = vector.load %arg14[%c3_51, %c0_52] : memref<88x128xbf16, #tpu.memory_space<vmem>>, vector<80x128xbf16>
    %c0_53 = arith.constant 0 : index
    %c384 = arith.constant 384 : index
    %56 = vector.load %arg16[%c0_53, %c384] : memref<80x640xbf16, #tpu.memory_space<vmem>>, vector<80x128xbf16>
    tpu.vector_store %arg16[%c0_53, %c384], %55 {strides = array<i32>} : memref<80x640xbf16, #tpu.memory_space<vmem>>, vector<80x128xbf16>,
    %c4_54 = arith.constant 4 : index
    %c0_55 = arith.constant 0 : index
    %57 = vector.load %arg14[%c4_54, %c0_55] : memref<88x128xbf16, #tpu.memory_space<vmem>>, vector<80x128xbf16>
    %c0_56 = arith.constant 0 : index
    %c512 = arith.constant 512 : index
    %58 = vector.load %arg16[%c0_56, %c512] : memref<80x640xbf16, #tpu.memory_space<vmem>>, vector<80x128xbf16>
    tpu.vector_store %arg16[%c0_56, %c512], %57 {strides = array<i32>} : memref<80x640xbf16, #tpu.memory_space<vmem>>, vector<80x128xbf16>,
    %c0_57 = arith.constant 0 : index
    %c0_58 = arith.constant 0 : index
    %59 = vector.load %arg16[%c0_57, %c0_58] : memref<80x640xbf16, #tpu.memory_space<vmem>>, vector<80x640xbf16>
    %c0_59 = arith.constant 0 : index
    %c0_60 = arith.constant 0 : index
    %60 = vector.load %arg4[%c0_59, %c0_60] : memref<640x128xbf16, #tpu.memory_space<vmem>>, vector<640x128xbf16>
    %cst_61 = arith.constant dense<0.000000e+00> : vector<80x128xf32>
    %61 = tpu.matmul %59, %60, %cst_61 {dimension_numbers = #tpu.dot_dimension_numbers<[1], [0], [0], [1], [0, 0, 1, 1], [], []>} : vector<80x640xbf16>, vector<640x128xbf16>, vector<80x128xf32> -> vector<80x128xf32>
    %c0_62 = arith.constant 0 : index
    %c0_63 = arith.constant 0 : index
    %62 = vector.load %arg5[%c0_62, %c0_63] : memref<1x128xf32, #tpu.memory_space<vmem>>, vector<1x128xf32>
    %63 = vector.broadcast %62 : vector<1x128xf32> to vector<80x128xf32>
    %64 = arith.addf %61, %63 : vector<80x128xf32>
    %65 = math.tanh %64 : vector<80x128xf32>
    %66 = arith.truncf %65 : vector<80x128xf32> to vector<80x128xbf16>
    %c2_64 = arith.constant 2 : index
    %c0_65 = arith.constant 0 : index
    %67 = vector.load %arg15[%c2_64, %c0_65] : memref<88x128xbf16, #tpu.memory_space<vmem>>, vector<80x128xbf16>
    tpu.vector_store %arg15[%c2_64, %c0_65], %66 {strides = array<i32>} : memref<88x128xbf16, #tpu.memory_space<vmem>>, vector<80x128xbf16>,
    %c0_66 = arith.constant 0 : index
    %c0_67 = arith.constant 0 : index
    %68 = vector.load %arg15[%c0_66, %c0_67] : memref<88x128xbf16, #tpu.memory_space<vmem>>, vector<80x128xbf16>
    %c0_68 = arith.constant 0 : index
    %c0_69 = arith.constant 0 : index
    %69 = vector.load %arg16[%c0_68, %c0_69] : memref<80x640xbf16, #tpu.memory_space<vmem>>, vector<80x128xbf16>
    tpu.vector_store %arg16[%c0_68, %c0_69], %68 {strides = array<i32>} : memref<80x640xbf16, #tpu.memory_space<vmem>>, vector<80x128xbf16>,
    %c1_70 = arith.constant 1 : index
    %c0_71 = arith.constant 0 : index
    %70 = vector.load %arg15[%c1_70, %c0_71] : memref<88x128xbf16, #tpu.memory_space<vmem>>, vector<80x128xbf16>
    %c0_72 = arith.constant 0 : index
    %c128_73 = arith.constant 128 : index
    %71 = vector.load %arg16[%c0_72, %c128_73] : memref<80x640xbf16, #tpu.memory_space<vmem>>, vector<80x128xbf16>
    tpu.vector_store %arg16[%c0_72, %c128_73], %70 {strides = array<i32>} : memref<80x640xbf16, #tpu.memory_space<vmem>>, vector<80x128xbf16>,
    %c2_74 = arith.constant 2 : index
    %c0_75 = arith.constant 0 : index
    %72 = vector.load %arg15[%c2_74, %c0_75] : memref<88x128xbf16, #tpu.memory_space<vmem>>, vector<80x128xbf16>
    %c0_76 = arith.constant 0 : index
    %c256_77 = arith.constant 256 : index
    %73 = vector.load %arg16[%c0_76, %c256_77] : memref<80x640xbf16, #tpu.memory_space<vmem>>, vector<80x128xbf16>
    tpu.vector_store %arg16[%c0_76, %c256_77], %72 {strides = array<i32>} : memref<80x640xbf16, #tpu.memory_space<vmem>>, vector<80x128xbf16>,
    %c3_78 = arith.constant 3 : index
    %c0_79 = arith.constant 0 : index
    %74 = vector.load %arg15[%c3_78, %c0_79] : memref<88x128xbf16, #tpu.memory_space<vmem>>, vector<80x128xbf16>
    %c0_80 = arith.constant 0 : index
    %c384_81 = arith.constant 384 : index
    %75 = vector.load %arg16[%c0_80, %c384_81] : memref<80x640xbf16, #tpu.memory_space<vmem>>, vector<80x128xbf16>
    tpu.vector_store %arg16[%c0_80, %c384_81], %74 {strides = array<i32>} : memref<80x640xbf16, #tpu.memory_space<vmem>>, vector<80x128xbf16>,
    %c4_82 = arith.constant 4 : index
    %c0_83 = arith.constant 0 : index
    %76 = vector.load %arg15[%c4_82, %c0_83] : memref<88x128xbf16, #tpu.memory_space<vmem>>, vector<80x128xbf16>
    %c0_84 = arith.constant 0 : index
    %c512_85 = arith.constant 512 : index
    %77 = vector.load %arg16[%c0_84, %c512_85] : memref<80x640xbf16, #tpu.memory_space<vmem>>, vector<80x128xbf16>
    tpu.vector_store %arg16[%c0_84, %c512_85], %76 {strides = array<i32>} : memref<80x640xbf16, #tpu.memory_space<vmem>>, vector<80x128xbf16>,
    %c0_86 = arith.constant 0 : index
    %c0_87 = arith.constant 0 : index
    %78 = vector.load %arg16[%c0_86, %c0_87] : memref<80x640xbf16, #tpu.memory_space<vmem>>, vector<80x640xbf16>
    %c0_88 = arith.constant 0 : index
    %c0_89 = arith.constant 0 : index
    %79 = vector.load %arg6[%c0_88, %c0_89] : memref<640x128xbf16, #tpu.memory_space<vmem>>, vector<640x128xbf16>
    %cst_90 = arith.constant dense<0.000000e+00> : vector<80x128xf32>
    %80 = tpu.matmul %78, %79, %cst_90 {dimension_numbers = #tpu.dot_dimension_numbers<[1], [0], [0], [1], [0, 0, 1, 1], [], []>} : vector<80x640xbf16>, vector<640x128xbf16>, vector<80x128xf32> -> vector<80x128xf32>
    %c0_91 = arith.constant 0 : index
    %c0_92 = arith.constant 0 : index
    %81 = vector.load %arg7[%c0_91, %c0_92] : memref<1x128xf32, #tpu.memory_space<vmem>>, vector<1x128xf32>
    %82 = vector.broadcast %81 : vector<1x128xf32> to vector<80x128xf32>
    %83 = arith.addf %80, %82 : vector<80x128xf32>
    %84 = math.tanh %83 : vector<80x128xf32>
    %85 = arith.truncf %84 : vector<80x128xf32> to vector<80x128xbf16>
    %c2_93 = arith.constant 2 : index
    %c0_94 = arith.constant 0 : index
    %86 = vector.load %arg14[%c2_93, %c0_94] : memref<88x128xbf16, #tpu.memory_space<vmem>>, vector<80x128xbf16>
    tpu.vector_store %arg14[%c2_93, %c0_94], %85 {strides = array<i32>} : memref<88x128xbf16, #tpu.memory_space<vmem>>, vector<80x128xbf16>,
    %c0_95 = arith.constant 0 : index
    %c0_96 = arith.constant 0 : index
    %87 = vector.load %arg14[%c0_95, %c0_96] : memref<88x128xbf16, #tpu.memory_space<vmem>>, vector<80x128xbf16>
    %c0_97 = arith.constant 0 : index
    %c0_98 = arith.constant 0 : index
    %88 = vector.load %arg16[%c0_97, %c0_98] : memref<80x640xbf16, #tpu.memory_space<vmem>>, vector<80x128xbf16>
    tpu.vector_store %arg16[%c0_97, %c0_98], %87 {strides = array<i32>} : memref<80x640xbf16, #tpu.memory_space<vmem>>, vector<80x128xbf16>,
    %c1_99 = arith.constant 1 : index
    %c0_100 = arith.constant 0 : index
    %89 = vector.load %arg14[%c1_99, %c0_100] : memref<88x128xbf16, #tpu.memory_space<vmem>>, vector<80x128xbf16>
    %c0_101 = arith.constant 0 : index
    %c128_102 = arith.constant 128 : index
    %90 = vector.load %arg16[%c0_101, %c128_102] : memref<80x640xbf16, #tpu.memory_space<vmem>>, vector<80x128xbf16>
    tpu.vector_store %arg16[%c0_101, %c128_102], %89 {strides = array<i32>} : memref<80x640xbf16, #tpu.memory_space<vmem>>, vector<80x128xbf16>,
    %c2_103 = arith.constant 2 : index
    %c0_104 = arith.constant 0 : index
    %91 = vector.load %arg14[%c2_103, %c0_104] : memref<88x128xbf16, #tpu.memory_space<vmem>>, vector<80x128xbf16>
    %c0_105 = arith.constant 0 : index
    %c256_106 = arith.constant 256 : index
    %92 = vector.load %arg16[%c0_105, %c256_106] : memref<80x640xbf16, #tpu.memory_space<vmem>>, vector<80x128xbf16>
    tpu.vector_store %arg16[%c0_105, %c256_106], %91 {strides = array<i32>} : memref<80x640xbf16, #tpu.memory_space<vmem>>, vector<80x128xbf16>,
    %c3_107 = arith.constant 3 : index
    %c0_108 = arith.constant 0 : index
    %93 = vector.load %arg14[%c3_107, %c0_108] : memref<88x128xbf16, #tpu.memory_space<vmem>>, vector<80x128xbf16>
    %c0_109 = arith.constant 0 : index
    %c384_110 = arith.constant 384 : index
    %94 = vector.load %arg16[%c0_109, %c384_110] : memref<80x640xbf16, #tpu.memory_space<vmem>>, vector<80x128xbf16>
    tpu.vector_store %arg16[%c0_109, %c384_110], %93 {strides = array<i32>} : memref<80x640xbf16, #tpu.memory_space<vmem>>, vector<80x128xbf16>,
    %c4_111 = arith.constant 4 : index
    %c0_112 = arith.constant 0 : index
    %95 = vector.load %arg14[%c4_111, %c0_112] : memref<88x128xbf16, #tpu.memory_space<vmem>>, vector<80x128xbf16>
    %c0_113 = arith.constant 0 : index
    %c512_114 = arith.constant 512 : index
    %96 = vector.load %arg16[%c0_113, %c512_114] : memref<80x640xbf16, #tpu.memory_space<vmem>>, vector<80x128xbf16>
    tpu.vector_store %arg16[%c0_113, %c512_114], %95 {strides = array<i32>} : memref<80x640xbf16, #tpu.memory_space<vmem>>, vector<80x128xbf16>,
    %c0_115 = arith.constant 0 : index
    %c0_116 = arith.constant 0 : index
    %97 = vector.load %arg16[%c0_115, %c0_116] : memref<80x640xbf16, #tpu.memory_space<vmem>>, vector<80x640xbf16>
    %c0_117 = arith.constant 0 : index
    %c0_118 = arith.constant 0 : index
    %98 = vector.load %arg8[%c0_117, %c0_118] : memref<640x128xbf16, #tpu.memory_space<vmem>>, vector<640x128xbf16>
    %cst_119 = arith.constant dense<0.000000e+00> : vector<80x128xf32>
    %99 = tpu.matmul %97, %98, %cst_119 {dimension_numbers = #tpu.dot_dimension_numbers<[1], [0], [0], [1], [0, 0, 1, 1], [], []>} : vector<80x640xbf16>, vector<640x128xbf16>, vector<80x128xf32> -> vector<80x128xf32>
    %c0_120 = arith.constant 0 : index
    %c0_121 = arith.constant 0 : index
    %100 = vector.load %arg9[%c0_120, %c0_121] : memref<1x128xf32, #tpu.memory_space<vmem>>, vector<1x128xf32>
    %101 = vector.broadcast %100 : vector<1x128xf32> to vector<80x128xf32>
    %102 = arith.addf %99, %101 : vector<80x128xf32>
    %103 = math.tanh %102 : vector<80x128xf32>
    %104 = arith.truncf %103 : vector<80x128xf32> to vector<80x128xbf16>
    %c2_122 = arith.constant 2 : index
    %c0_123 = arith.constant 0 : index
    %105 = vector.load %arg15[%c2_122, %c0_123] : memref<88x128xbf16, #tpu.memory_space<vmem>>, vector<80x128xbf16>
    tpu.vector_store %arg15[%c2_122, %c0_123], %104 {strides = array<i32>} : memref<88x128xbf16, #tpu.memory_space<vmem>>, vector<80x128xbf16>,
    %cst_124 = arith.constant 0.000000e+00 : f32
    %106 = vector.broadcast %cst_124 : f32 to vector<80x128xf32>
    %c0_125 = arith.constant 0 : index
    %c0_126 = arith.constant 0 : index
    %107 = vector.load %arg15[%c0_125, %c0_126] : memref<88x128xbf16, #tpu.memory_space<vmem>>, vector<80x128xbf16>
    %108 = arith.extf %107 : vector<80x128xbf16> to vector<80x128xf32>
    %c0_127 = arith.constant 0 : index
    %c0_128 = arith.constant 0 : index
    %109 = vector.load %arg10[%c0_127, %c0_128] : memref<5x128xf32, #tpu.memory_space<vmem>>, vector<1x128xf32>
    %110 = vector.broadcast %109 : vector<1x128xf32> to vector<80x128xf32>
    %111 = arith.mulf %108, %110 : vector<80x128xf32>
    %112 = arith.addf %106, %111 : vector<80x128xf32>
    %c1_129 = arith.constant 1 : index
    %c0_130 = arith.constant 0 : index
    %113 = vector.load %arg15[%c1_129, %c0_130] : memref<88x128xbf16, #tpu.memory_space<vmem>>, vector<80x128xbf16>
    %114 = arith.extf %113 : vector<80x128xbf16> to vector<80x128xf32>
    %c1_131 = arith.constant 1 : index
    %c0_132 = arith.constant 0 : index
    %115 = vector.load %arg10[%c1_131, %c0_132] : memref<5x128xf32, #tpu.memory_space<vmem>>, vector<1x128xf32>
    %116 = vector.broadcast %115 : vector<1x128xf32> to vector<80x128xf32>
    %117 = arith.mulf %114, %116 : vector<80x128xf32>
    %118 = arith.addf %112, %117 : vector<80x128xf32>
    %c2_133 = arith.constant 2 : index
    %c0_134 = arith.constant 0 : index
    %119 = vector.load %arg15[%c2_133, %c0_134] : memref<88x128xbf16, #tpu.memory_space<vmem>>, vector<80x128xbf16>
    %120 = arith.extf %119 : vector<80x128xbf16> to vector<80x128xf32>
    %c2_135 = arith.constant 2 : index
    %c0_136 = arith.constant 0 : index
    %121 = vector.load %arg10[%c2_135, %c0_136] : memref<5x128xf32, #tpu.memory_space<vmem>>, vector<1x128xf32>
    %122 = vector.broadcast %121 : vector<1x128xf32> to vector<80x128xf32>
    %123 = arith.mulf %120, %122 : vector<80x128xf32>
    %124 = arith.addf %118, %123 : vector<80x128xf32>
    %c3_137 = arith.constant 3 : index
    %c0_138 = arith.constant 0 : index
    %125 = vector.load %arg15[%c3_137, %c0_138] : memref<88x128xbf16, #tpu.memory_space<vmem>>, vector<80x128xbf16>
    %126 = arith.extf %125 : vector<80x128xbf16> to vector<80x128xf32>
    %c3_139 = arith.constant 3 : index
    %c0_140 = arith.constant 0 : index
    %127 = vector.load %arg10[%c3_139, %c0_140] : memref<5x128xf32, #tpu.memory_space<vmem>>, vector<1x128xf32>
    %128 = vector.broadcast %127 : vector<1x128xf32> to vector<80x128xf32>
    %129 = arith.mulf %126, %128 : vector<80x128xf32>
    %130 = arith.addf %124, %129 : vector<80x128xf32>
    %c4_141 = arith.constant 4 : index
    %c0_142 = arith.constant 0 : index
    %131 = vector.load %arg15[%c4_141, %c0_142] : memref<88x128xbf16, #tpu.memory_space<vmem>>, vector<80x128xbf16>
    %132 = arith.extf %131 : vector<80x128xbf16> to vector<80x128xf32>
    %c4_143 = arith.constant 4 : index
    %c0_144 = arith.constant 0 : index
    %133 = vector.load %arg10[%c4_143, %c0_144] : memref<5x128xf32, #tpu.memory_space<vmem>>, vector<1x128xf32>
    %134 = vector.broadcast %133 : vector<1x128xf32> to vector<80x128xf32>
    %135 = arith.mulf %132, %134 : vector<80x128xf32>
    %136 = arith.addf %130, %135 : vector<80x128xf32>
    %137 = vector.shape_cast %136 : vector<80x128xf32> to vector<1x80x128xf32>
    %cst_145 = arith.constant dense<0.000000e+00> : vector<1x80xf32>
    %138 = vector.multi_reduction <add>, %137, %cst_145 [2] : vector<1x80x128xf32> to vector<1x80xf32>
    %c0_146 = arith.constant 0 : index
    %c0_147 = arith.constant 0 : index
    %139 = vector.load %arg11[%c0_146, %c0_147] : memref<1x1xf32, #tpu.memory_space<vmem>>, vector<1x1xf32>
    %140 = vector.broadcast %139 : vector<1x1xf32> to vector<1x80xf32>
    %141 = arith.addf %138, %140 : vector<1x80xf32>
    %cst_148 = arith.constant 0.000000e+00 : f32
    %142 = vector.broadcast %cst_148 : f32 to vector<1x1x128xf32>
    %c0_149 = arith.constant 0 : index
    %c0_150 = arith.constant 0 : index
    %c0_151 = arith.constant 0 : index
    %143 = vector.load %arg12[%c0_149, %c0_150, %c0_151] : memref<1x1x128xf32, #tpu.memory_space<vmem>>, vector<1x1x128xf32>
    tpu.vector_store %arg12[%c0_149, %c0_150, %c0_151], %142 {strides = array<i32>} : memref<1x1x128xf32, #tpu.memory_space<vmem>>, vector<1x1x128xf32>,
    %144 = vector.shape_cast %141 : vector<1x80xf32> to vector<1x1x80xf32>
    %c0_152 = arith.constant 0 : index
    %c0_153 = arith.constant 0 : index
    %c0_154 = arith.constant 0 : index
    %145 = vector.load %arg12[%c0_152, %c0_153, %c0_154] : memref<1x1x128xf32, #tpu.memory_space<vmem>>, vector<1x1x80xf32>
    tpu.vector_store %arg12[%c0_152, %c0_153, %c0_154], %144 {strides = array<i32>} : memref<1x1x128xf32, #tpu.memory_space<vmem>>, vector<1x1x80xf32>,
    return
  }
  func.func @transform_0(%arg0: i32) -> (i32, i32, i32) {
    %c0_i32 = arith.constant 0 : i32
    %c0_i32_0 = arith.constant 0 : i32
    %c0_i32_1 = arith.constant 0 : i32
    return %arg0, %c0_i32, %c0_i32_0 : i32, i32, i32
  }
  func.func @transform_1(%arg0: i32) -> (i32, i32) {
    %c0_i32 = arith.constant 0 : i32
    %c0_i32_0 = arith.constant 0 : i32
    %c0_i32_1 = arith.constant 0 : i32
    return %c0_i32, %c0_i32_0 : i32, i32
  }
  func.func @transform_2(%arg0: i32) -> (i32, i32) {
    %c0_i32 = arith.constant 0 : i32
    %c0_i32_0 = arith.constant 0 : i32
    %c0_i32_1 = arith.constant 0 : i32
    return %c0_i32, %c0_i32_0 : i32, i32
  }
  func.func @transform_3(%arg0: i32) -> (i32, i32) {
    %c0_i32 = arith.constant 0 : i32
    %c0_i32_0 = arith.constant 0 : i32
    %c0_i32_1 = arith.constant 0 : i32
    return %c0_i32, %c0_i32_0 : i32, i32
  }
  func.func @transform_4(%arg0: i32) -> (i32, i32) {
    %c0_i32 = arith.constant 0 : i32
    %c0_i32_0 = arith.constant 0 : i32
    %c0_i32_1 = arith.constant 0 : i32
    return %c0_i32, %c0_i32_0 : i32, i32
  }
  func.func @transform_5(%arg0: i32) -> (i32, i32) {
    %c0_i32 = arith.constant 0 : i32
    %c0_i32_0 = arith.constant 0 : i32
    %c0_i32_1 = arith.constant 0 : i32
    return %c0_i32, %c0_i32_0 : i32, i32
  }
  func.func @transform_6(%arg0: i32) -> (i32, i32) {
    %c0_i32 = arith.constant 0 : i32
    %c0_i32_0 = arith.constant 0 : i32
    %c0_i32_1 = arith.constant 0 : i32
    return %c0_i32, %c0_i32_0 : i32, i32
  }
  func.func @transform_7(%arg0: i32) -> (i32, i32) {
    %c0_i32 = arith.constant 0 : i32
    %c0_i32_0 = arith.constant 0 : i32
    %c0_i32_1 = arith.constant 0 : i32
    return %c0_i32, %c0_i32_0 : i32, i32
  }
  func.func @transform_8(%arg0: i32) -> (i32, i32) {
    %c0_i32 = arith.constant 0 : i32
    %c0_i32_0 = arith.constant 0 : i32
    %c0_i32_1 = arith.constant 0 : i32
    return %c0_i32, %c0_i32_0 : i32, i32
  }
  func.func @transform_9(%arg0: i32) -> (i32, i32) {
    %c0_i32 = arith.constant 0 : i32
    %c0_i32_0 = arith.constant 0 : i32
    %c0_i32_1 = arith.constant 0 : i32
    return %c0_i32, %c0_i32_0 : i32, i32
  }
  func.func @transform_10(%arg0: i32) -> (i32, i32) {
    %c0_i32 = arith.constant 0 : i32
    %c0_i32_0 = arith.constant 0 : i32
    %c0_i32_1 = arith.constant 0 : i32
    return %c0_i32, %c0_i32_0 : i32, i32
  }
  func.func @transform_11(%arg0: i32) -> (i32, i32, i32) {
    %c0_i32 = arith.constant 0 : i32
    %c0_i32_0 = arith.constant 0 : i32
    %c0_i32_1 = arith.constant 0 : i32
    return %arg0, %c0_i32, %c0_i32_0 : i32, i32, i32
  }
}

</mosaic_0001>

<llo_original>
// kernel: postnet_forward.1
$region0: #{postnet_forward.1}
  #allocation0 [shape = 'u32[]', space=smem, size = 0x4, offset = 0x4, fixed_abs, tag = 'smem constant byte address 0x4 - core index']
  #allocation1 [shape = 'u32[144,128]{1,0:T(1,128)}', space=vmem, size = 0x12000, scoped, tag = 'internal scratch']
  #allocation2 [shape = 'f32[88,128]{1,0:T(8,128)}', space=vmem, size = 0xb000, scoped, tag = 'scratch operand']
  #allocation3 [shape = 'bf16[88,128]{1,0:T(8,128)(2,1)}', space=vmem, size = 0x5800, scoped, tag = 'scratch operand']
  #allocation4 [shape = 'bf16[88,128]{1,0:T(8,128)(2,1)}', space=vmem, size = 0x5800, scoped, tag = 'scratch operand']
  #allocation5 [shape = 'bf16[80,640]{1,0:T(8,128)(2,1)}', space=vmem, size = 0x19000, scoped, tag = 'scratch operand']
  #allocation6 [shape = 'f32[1,1]{1,0:T(1,128)S(1)}', space=vmem, size = 0x200, scoped, tag = 'scoped memory for postnet_forward.1']
  %s0 = inlined_call_operand.vmem [shape: f32[2,80,1], index: 0, kind: input, shape index: {}]
  %s1 = inlined_call_operand.vmem [shape: f32[5,128], index: 1, kind: input, shape index: {}]
  %s2 = inlined_call_operand.vmem [shape: f32[1,128], index: 2, kind: input, shape index: {}]
  %s3 = inlined_call_operand.hbm [shape: bf16[640,128], index: 3, kind: input, shape index: {}]
  %s4 = inlined_call_operand.vmem [shape: f32[1,128], index: 4, kind: input, shape index: {}]
  %s5 = inlined_call_operand.hbm [shape: bf16[640,128], index: 5, kind: input, shape index: {}]
  %s6 = inlined_call_operand.vmem [shape: f32[1,128], index: 6, kind: input, shape index: {}]
  %s7 = inlined_call_operand.hbm [shape: bf16[640,128], index: 7, kind: input, shape index: {}]
  %s8 = inlined_call_operand.vmem [shape: f32[1,128], index: 8, kind: input, shape index: {}]
  %s9 = inlined_call_operand.vmem [shape: f32[5,128], index: 9, kind: input, shape index: {}]
  %s10 = inlined_call_operand.<no memory space> [shape: f32[1,1], index: 10, kind: input, shape index: {}]
  %s11 = inlined_call_operand.hbm [shape: f32[2,1,128], index: 11, kind: output, shape index: {}]
  %s12 = sld [smem:[#allocation0]]
  $region89: #{postnet_forward.1} parent=0
    _
  %s14 = ssub.s32 1, %s12
  %s15 = scalar_select 0, %s14, %s12
  %v16 = vstv %s10
  %17 = vst [vmem:[#allocation6] sm:$0x1] %v16
  $region1: #{postnet_forward.1} parent=0
    #allocation7 [shape = 'u8[163840]{0}', space=vmem, size = 0x28000, scoped, tag = 'input window, operand 3, single buffered']
    #allocation8 [shape = 's32[2]{0}', space=sflag, size = 0x8, scoped, tag = 'scoped memory for postnet_forward.1']
    #allocation9 [shape = 's32[2]{0}', space=sflag, size = 0x8, scoped, tag = 'scoped memory for postnet_forward.1']
    #allocation10 [shape = 'u8[163840]{0}', space=vmem, size = 0x28000, scoped, tag = 'input window, operand 5, single buffered']
    #allocation11 [shape = 's32[1]{0}', space=sflag, size = 0x4, scoped, tag = 'scoped memory for postnet_forward.1']
    #allocation12 [shape = 'u8[163840]{0}', space=vmem, size = 0x28000, scoped, tag = 'input window, operand 7, single buffered']
    #allocation13 [shape = 'u8[1024]{0}', space=vmem, size = 0x400, scoped, tag = 'output window, operand 0']
    %18 = vsyncpa [#allocation8], 0
    %19 = vsyncpa [#allocation11], 0
    %20 = vsyncpa [#allocation9], 0
    %s21 = scalar_lea.sflag [#allocation9], 1
    %22 = vsyncpa %s21, 0
    loop: start=0, step=1, limit=4
    $region2: #{postnet_forward.1} parent=1 // loop_pre_header
      _
    $region3: #{postnet_forward.1} parent=1 // loop_header
      %s24 = sphi 0, %s28
      %p25 = scmp.ge.s32.totalorder %s24, 4
      %s34 = sphi 0, %s36
      %s37 = sphi 0, %s34
      %s38 = sphi 0, %s37
      %s54 = sphi 0, %s38
      %s58 = sphi 0, %s58
      %s60 = sphi 0, %s58
      %s61 = sphi 0, %s60
      %s75 = sphi 0, %s61
      %s79 = sphi 0, %s79
      %s81 = sphi 0, %s79
      %s82 = sphi 0, %s81
      %s96 = sphi 0, %s82
      %s100 = sphi 0, %s100
      %s102 = sphi 0, %s100
      %s103 = sphi 0, %s102
      %s117 = sphi 0, %s103
      %s121 = sphi 0, %s121
      %s123 = sphi 0, %s121
      %s124 = sphi 0, %s123
      %s138 = sphi 0, %s124
      %s142 = sphi 0, %s142
      %s144 = sphi 0, %s142
      %s145 = sphi 0, %s144
      %s159 = sphi 0, %s145
      %s163 = sphi 0, %s163
      %s165 = sphi 0, %s163
      %s166 = sphi 0, %s165
      %s180 = sphi 0, %s166
      %s184 = sphi 0, %s184
      %s186 = sphi 0, %s184
      %s187 = sphi 0, %s186
      %s201 = sphi 0, %s187
      %s205 = sphi 0, %s205
      %s207 = sphi 0, %s205
      %s208 = sphi 0, %s207
      %s222 = sphi 0, %s208
      %s226 = sphi 0, %s226
      %s228 = sphi 0, %s226
      %s229 = sphi 0, %s228
      %s243 = sphi 0, %s229
      %s247 = sphi 0, %s247
      %s249 = sphi 0, %s247
      %s250 = sphi 0, %s249
      %s264 = sphi 0, %s250
      %s270 = sphi 0, %s272
      %s273 = sphi 0, %s270
      %s274 = sphi 0, %s273
      %s290 = sphi 0, %s274
    $region4: #{postnet_forward.1} parent=1 // loop_header_branch
      %27 = sbr.rel (%p25) target = $region8
    $region5: #{postnet_forward.1} parent=1 // loop_body
      %s29 = ssub.s32 %s24, 1
      %s30 = ssub.s32 %s24, 2
      %s31 = sadd.s32 %s24, 1
      %s32 = ssub.s32 %s24, %s31
      %p33 = scmp.eq.s32.totalorder %s32, 0
      %s35 = sadd.s32 %s34, 1
      %s36 = scalar_select %p33, %s34, %s35
      %p39 = pneg %p33
      %p40 = scmp.eq.s32.totalorder %s24, 1
      %p41 = por %p39, %p40
      %p42 = scmp.ne.s32.totalorder %s34, %s37
      %p43 = scmp.eq.s32.totalorder %s24, 0
      %p44 = por %p42, %p43
      %p45 = scmp.ne.s32.totalorder %s34, %s37
      %p46 = scmp.eq.s32.totalorder %s29, 1
      %p47 = por %p45, %p46
      %p48 = scmp.ne.s32.totalorder %s37, %s38
      %p49 = scmp.eq.s32.totalorder %s29, 0
      %p50 = por %p48, %p49
      %p51 = scmp.ne.s32.totalorder %s37, %s38
      %p52 = scmp.eq.s32.totalorder %s30, 1
      %p53 = por %p51, %p52
      %p55 = scmp.ne.s32.totalorder %s38, %s54
      %p56 = scmp.eq.s32.totalorder %s30, 0
      %p57 = por %p55, %p56
      %s59 = sadd.s32 %s58, 1
      %p62 = scmp.eq.s32.totalorder %s24, 1
      %p63 = scmp.ne.s32.totalorder %s58, %s60
      %p64 = scmp.eq.s32.totalorder %s24, 0
      %p65 = por %p63, %p64
      %p66 = scmp.ne.s32.totalorder %s58, %s60
      %p67 = scmp.eq.s32.totalorder %s29, 1
      %p68 = por %p66, %p67
      %p69 = scmp.ne.s32.totalorder %s60, %s61
      %p70 = scmp.eq.s32.totalorder %s29, 0
      %p71 = por %p69, %p70
      %p72 = scmp.ne.s32.totalorder %s60, %s61
      %p73 = scmp.eq.s32.totalorder %s30, 1
      %p74 = por %p72, %p73
      %p76 = scmp.ne.s32.totalorder %s61, %s75
      %p77 = scmp.eq.s32.totalorder %s30, 0
      %p78 = por %p76, %p77
      %s80 = sadd.s32 %s79, 1
      %p83 = scmp.eq.s32.totalorder %s24, 1
      %p84 = scmp.ne.s32.totalorder %s79, %s81
      %p85 = scmp.eq.s32.totalorder %s24, 0
      %p86 = por %p84, %p85
      %p87 = scmp.ne.s32.totalorder %s79, %s81
      %p88 = scmp.eq.s32.totalorder %s29, 1
      %p89 = por %p87, %p88
      %p90 = scmp.ne.s32.totalorder %s81, %s82
      %p91 = scmp.eq.s32.totalorder %s29, 0
      %p92 = por %p90, %p91
      %p93 = scmp.ne.s32.totalorder %s81, %s82
      %p94 = scmp.eq.s32.totalorder %s30, 1
      %p95 = por %p93, %p94
      %p97 = scmp.ne.s32.totalorder %s82, %s96
      %p98 = scmp.eq.s32.totalorder %s30, 0
      %p99 = por %p97, %p98
      %s101 = sadd.s32 %s100, 1
      %p104 = scmp.eq.s32.totalorder %s24, 1
      %p105 = scmp.ne.s32.totalorder %s100, %s102
      %p106 = scmp.eq.s32.totalorder %s24, 0
      %p107 = por %p105, %p106
      %p108 = scmp.ne.s32.totalorder %s100, %s102
      %p109 = scmp.eq.s32.totalorder %s29, 1
      %p110 = por %p108, %p109
      %p111 = scmp.ne.s32.totalorder %s102, %s103
      %p112 = scmp.eq.s32.totalorder %s29, 0
      %p113 = por %p111, %p112
      %p114 = scmp.ne.s32.totalorder %s102, %s103
      %p115 = scmp.eq.s32.totalorder %s30, 1
      %p116 = por %p114, %p115
      %p118 = scmp.ne.s32.totalorder %s103, %s117
      %p119 = scmp.eq.s32.totalorder %s30, 0
      %p120 = por %p118, %p119
      %s122 = sadd.s32 %s121, 1
      %p125 = scmp.eq.s32.totalorder %s24, 1
      %p126 = scmp.ne.s32.totalorder %s121, %s123
      %p127 = scmp.eq.s32.totalorder %s24, 0
      %p128 = por %p126, %p127
      %p129 = scmp.ne.s32.totalorder %s121, %s123
      %p130 = scmp.eq.s32.totalorder %s29, 1
      %p131 = por %p129, %p130
      %p132 = scmp.ne.s32.totalorder %s123, %s124
      %p133 = scmp.eq.s32.totalorder %s29, 0
      %p134 = por %p132, %p133
      %p135 = scmp.ne.s32.totalorder %s123, %s124
      %p136 = scmp.eq.s32.totalorder %s30, 1
      %p137 = por %p135, %p136
      %p139 = scmp.ne.s32.totalorder %s124, %s138
      %p140 = scmp.eq.s32.totalorder %s30, 0
      %p141 = por %p139, %p140
      %s143 = sadd.s32 %s142, 1
      %p146 = scmp.eq.s32.totalorder %s24, 1
      %p147 = scmp.ne.s32.totalorder %s142, %s144
      %p148 = scmp.eq.s32.totalorder %s24, 0
      %p149 = por %p147, %p148
      %p150 = scmp.ne.s32.totalorder %s142, %s144
      %p151 = scmp.eq.s32.totalorder %s29, 1
      %p152 = por %p150, %p151
      %p153 = scmp.ne.s32.totalorder %s144, %s145
      %p154 = scmp.eq.s32.totalorder %s29, 0
      %p155 = por %p153, %p154
      %p156 = scmp.ne.s32.totalorder %s144, %s145
      %p157 = scmp.eq.s32.totalorder %s30, 1
      %p158 = por %p156, %p157
      %p160 = scmp.ne.s32.totalorder %s145, %s159
      %p161 = scmp.eq.s32.totalorder %s30, 0
      %p162 = por %p160, %p161
      %s164 = sadd.s32 %s163, 1
      %p167 = scmp.eq.s32.totalorder %s24, 1
      %p168 = scmp.ne.s32.totalorder %s163, %s165
      %p169 = scmp.eq.s32.totalorder %s24, 0
      %p170 = por %p168, %p169
      %p171 = scmp.ne.s32.totalorder %s163, %s165
      %p172 = scmp.eq.s32.totalorder %s29, 1
      %p173 = por %p171, %p172
      %p174 = scmp.ne.s32.totalorder %s165, %s166
      %p175 = scmp.eq.s32.totalorder %s29, 0
      %p176 = por %p174, %p175
      %p177 = scmp.ne.s32.totalorder %s165, %s166
      %p178 = scmp.eq.s32.totalorder %s30, 1
      %p179 = por %p177, %p178
      %p181 = scmp.ne.s32.totalorder %s166, %s180
      %p182 = scmp.eq.s32.totalorder %s30, 0
      %p183 = por %p181, %p182
      %s185 = sadd.s32 %s184, 1
      %p188 = scmp.eq.s32.totalorder %s24, 1
      %p189 = scmp.ne.s32.totalorder %s184, %s186
      %p190 = scmp.eq.s32.totalorder %s24, 0
      %p191 = por %p189, %p190
      %p192 = scmp.ne.s32.totalorder %s184, %s186
      %p193 = scmp.eq.s32.totalorder %s29, 1
      %p194 = por %p192, %p193
      %p195 = scmp.ne.s32.totalorder %s186, %s187
      %p196 = scmp.eq.s32.totalorder %s29, 0
      %p197 = por %p195, %p196
      %p198 = scmp.ne.s32.totalorder %s186, %s187
      %p199 = scmp.eq.s32.totalorder %s30, 1
      %p200 = por %p198, %p199
      %p202 = scmp.ne.s32.totalorder %s187, %s201
      %p203 = scmp.eq.s32.totalorder %s30, 0
      %p204 = por %p202, %p203
      %s206 = sadd.s32 %s205, 1
      %p209 = scmp.eq.s32.totalorder %s24, 1
      %p210 = scmp.ne.s32.totalorder %s205, %s207
      %p211 = scmp.eq.s32.totalorder %s24, 0
      %p212 = por %p210, %p211
      %p213 = scmp.ne.s32.totalorder %s205, %s207
      %p214 = scmp.eq.s32.totalorder %s29, 1
      %p215 = por %p213, %p214
      %p216 = scmp.ne.s32.totalorder %s207, %s208
      %p217 = scmp.eq.s32.totalorder %s29, 0
      %p218 = por %p216, %p217
      %p219 = scmp.ne.s32.totalorder %s207, %s208
      %p220 = scmp.eq.s32.totalorder %s30, 1
      %p221 = por %p219, %p220
      %p223 = scmp.ne.s32.totalorder %s208, %s222
      %p224 = scmp.eq.s32.totalorder %s30, 0
      %p225 = por %p223, %p224
      %s227 = sadd.s32 %s226, 1
      %p230 = scmp.eq.s32.totalorder %s24, 1
      %p231 = scmp.ne.s32.totalorder %s226, %s228
      %p232 = scmp.eq.s32.totalorder %s24, 0
      %p233 = por %p231, %p232
      %p234 = scmp.ne.s32.totalorder %s226, %s228
      %p235 = scmp.eq.s32.totalorder %s29, 1
      %p236 = por %p234, %p235
      %p237 = scmp.ne.s32.totalorder %s228, %s229
      %p238 = scmp.eq.s32.totalorder %s29, 0
      %p239 = por %p237, %p238
      %p240 = scmp.ne.s32.totalorder %s228, %s229
      %p241 = scmp.eq.s32.totalorder %s30, 1
      %p242 = por %p240, %p241
      %p244 = scmp.ne.s32.totalorder %s229, %s243
      %p245 = scmp.eq.s32.totalorder %s30, 0
      %p246 = por %p244, %p245
      %s248 = sadd.s32 %s247, 1
      %p251 = scmp.eq.s32.totalorder %s24, 1
      %p252 = scmp.ne.s32.totalorder %s247, %s249
      %p253 = scmp.eq.s32.totalorder %s24, 0
      %p254 = por %p252, %p253
      %p255 = scmp.ne.s32.totalorder %s247, %s249
      %p256 = scmp.eq.s32.totalorder %s29, 1
      %p257 = por %p255, %p256
      %p258 = scmp.ne.s32.totalorder %s249, %s250
      %p259 = scmp.eq.s32.totalorder %s29, 0
      %p260 = por %p258, %p259
      %p261 = scmp.ne.s32.totalorder %s249, %s250
      %p262 = scmp.eq.s32.totalorder %s30, 1
      %p263 = por %p261, %p262
      %p265 = scmp.ne.s32.totalorder %s250, %s264
      %p266 = scmp.eq.s32.totalorder %s30, 0
      %p267 = por %p265, %p266
      %s268 = ssub.s32 %s24, %s31
      %p269 = scmp.eq.s32.totalorder %s268, 0
      %s271 = sadd.s32 %s270, 1
      %s272 = scalar_select %p269, %s270, %s271
      %p275 = pneg %p269
      %p276 = scmp.eq.s32.totalorder %s24, 1
      %p277 = por %p275, %p276
      %p278 = scmp.ne.s32.totalorder %s270, %s273
      %p279 = scmp.eq.s32.totalorder %s24, 0
      %p280 = por %p278, %p279
      %p281 = scmp.ne.s32.totalorder %s270, %s273
      %p282 = scmp.eq.s32.totalorder %s29, 1
      %p283 = por %p281, %p282
      %p284 = scmp.ne.s32.totalorder %s273, %s274
      %p285 = scmp.eq.s32.totalorder %s29, 0
      %p286 = por %p284, %p285
      %p287 = scmp.ne.s32.totalorder %s273, %s274
      %p288 = scmp.eq.s32.totalorder %s30, 1
      %p289 = por %p287, %p288
      %p291 = scmp.ne.s32.totalorder %s274, %s290
      %p292 = scmp.eq.s32.totalorder %s30, 0
      %p293 = por %p291, %p292
      %p294 = scmp.le.s32.totalorder 1, %s24
      %p295 = scmp.lt.s32.totalorder %s24, 3
      %p296 = pnand %p294, %p295
      %p297 = pneg %p296
      // Predicated region
      $region9: #{postnet_forward.1} parent=5 // pred_check
        _
      $region10: #{postnet_forward.1} parent=5 // pred_check_branch
        %299 = sbr.rel (%p296) target = $region12
      $region11: #{postnet_forward.1} parent=5 // pred_region
        %s300 = ssub.s32 %s24, 1
        // Predicated region
        $region13: #{postnet_forward.1} parent=11 // pred_check
          %p301 = pneg %p71
        $region14: #{postnet_forward.1} parent=11 // pred_check_branch
          %303 = sbr.rel (%p301) target = $region16
        $region15: #{postnet_forward.1} parent=11 // pred_region
          _
        $region16: #{postnet_forward.1} parent=11 // pred_fallthru
          _
        // Predicated region
        $region17: #{postnet_forward.1} parent=11 // pred_check
          %p304 = pneg %p92
        $region18: #{postnet_forward.1} parent=11 // pred_check_branch
          %306 = sbr.rel (%p304) target = $region20
        $region19: #{postnet_forward.1} parent=11 // pred_region
          _
        $region20: #{postnet_forward.1} parent=11 // pred_fallthru
          _
        // Predicated region
        $region21: #{postnet_forward.1} parent=11 // pred_check
          %p307 = pneg %p113
        $region22: #{postnet_forward.1} parent=11 // pred_check_branch
          %309 = sbr.rel (%p307) target = $region24
        $region23: #{postnet_forward.1} parent=11 // pred_region
          %s311 = ssub.s32 5120, 5120
          %312 = vsyncadd [#allocation8], %s311
          %s313 = sshll.u32 [#allocation7], 4
          %s314 = int_to_ptr.vmem [resolvable:$true] %s313
          %319 = dma.hbm_to_vmem [thread:$0]  %s3, 5120, %s314, [#allocation8], 64, 64, 4
        $region24: #{postnet_forward.1} parent=11 // pred_fallthru
          _
        // Predicated region
        $region25: #{postnet_forward.1} parent=11 // pred_check
          %p320 = pneg %p134
        $region26: #{postnet_forward.1} parent=11 // pred_check_branch
          %322 = sbr.rel (%p320) target = $region28
        $region27: #{postnet_forward.1} parent=11 // pred_region
          _
        $region28: #{postnet_forward.1} parent=11 // pred_fallthru
          _
        // Predicated region
        $region29: #{postnet_forward.1} parent=11 // pred_check
          %p323 = pneg %p155
        $region30: #{postnet_forward.1} parent=11 // pred_check_branch
          %325 = sbr.rel (%p323) target = $region32
        $region31: #{postnet_forward.1} parent=11 // pred_region
          %s327 = ssub.s32 5120, 5120
          %328 = vsyncadd [#allocation11], %s327
          %s329 = sshll.u32 [#allocation10], 4
          %s330 = int_to_ptr.vmem [resolvable:$true] %s329
          %335 = dma.hbm_to_vmem [thread:$0]  %s5, 5120, %s330, [#allocation11], 64, 64, 4
        $region32: #{postnet_forward.1} parent=11 // pred_fallthru
          _
        // Predicated region
        $region33: #{postnet_forward.1} parent=11 // pred_check
          %p336 = pneg %p176
        $region34: #{postnet_forward.1} parent=11 // pred_check_branch
          %338 = sbr.rel (%p336) target = $region36
        $region35: #{postnet_forward.1} parent=11 // pred_region
          _
        $region36: #{postnet_forward.1} parent=11 // pred_fallthru
          _
        // Predicated region
        $region37: #{postnet_forward.1} parent=11 // pred_check
          %p339 = pneg %p197
        $region38: #{postnet_forward.1} parent=11 // pred_check_branch
          %341 = sbr.rel (%p339) target = $region40
        $region39: #{postnet_forward.1} parent=11 // pred_region
          %s343 = ssub.s32 5120, 5120
          %344 = vsyncadd [#allocation11], %s343
          %s345 = sshll.u32 [#allocation12], 4
          %s346 = int_to_ptr.vmem [resolvable:$true] %s345
          %351 = dma.hbm_to_vmem [thread:$0]  %s7, 5120, %s346, [#allocation11], 64, 64, 4
        $region40: #{postnet_forward.1} parent=11 // pred_fallthru
          _
        // Predicated region
        $region41: #{postnet_forward.1} parent=11 // pred_check
          %p352 = pneg %p218
        $region42: #{postnet_forward.1} parent=11 // pred_check_branch
          %354 = sbr.rel (%p352) target = $region44
        $region43: #{postnet_forward.1} parent=11 // pred_region
          _
        $region44: #{postnet_forward.1} parent=11 // pred_fallthru
          _
        // Predicated region
        $region45: #{postnet_forward.1} parent=11 // pred_check
          %p355 = pneg %p239
        $region46: #{postnet_forward.1} parent=11 // pred_check_branch
          %357 = sbr.rel (%p355) target = $region48
        $region47: #{postnet_forward.1} parent=11 // pred_region
          _
        $region48: #{postnet_forward.1} parent=11 // pred_fallthru
          _
        // Predicated region
        $region49: #{postnet_forward.1} parent=11 // pred_check
          %p358 = pneg %p260
        $region50: #{postnet_forward.1} parent=11 // pred_check_branch
          %360 = sbr.rel (%p358) target = $region52
        $region51: #{postnet_forward.1} parent=11 // pred_region
          _
        $region52: #{postnet_forward.1} parent=11 // pred_fallthru
          _
      $region12: #{postnet_forward.1} parent=5 // pred_fallthru
        _
      %p361 = scmp.lt.s32.totalorder %s24, 2
      // Predicated region
      $region53: #{postnet_forward.1} parent=5 // pred_check
        %p362 = pneg %p361
      $region54: #{postnet_forward.1} parent=5 // pred_check_branch
        %364 = sbr.rel (%p362) target = $region56
      $region55: #{postnet_forward.1} parent=5 // pred_region
        // Predicated region
        $region57: #{postnet_forward.1} parent=55 // pred_check
          %p365 = pneg %p44
        $region58: #{postnet_forward.1} parent=55 // pred_check_branch
          %367 = sbr.rel (%p365) target = $region60
        $region59: #{postnet_forward.1} parent=55 // pred_region
          %p368 = scmp.lt.s32.totalorder %s24, 1
          %s369 = scalar_select %p368, %s24, 1
          %s370 = smul.addr %s369, 10
          %s371 = smul.addr %s370, 8
          %s372 = scalar_lea.vmem %s0, %s371
        $region60: #{postnet_forward.1} parent=55 // pred_fallthru
          _
      $region56: #{postnet_forward.1} parent=5 // pred_fallthru
        _
      %p373 = scmp.le.s32.totalorder 1, %s24
      %p374 = scmp.lt.s32.totalorder %s24, 3
      %p375 = pnand %p373, %p374
      %p376 = pneg %p375
      // Predicated region
      $region61: #{postnet_forward.1} parent=5 // pred_check
        _
      $region62: #{postnet_forward.1} parent=5 // pred_check_branch
        %378 = sbr.rel (%p375) target = $region64
      $region63: #{postnet_forward.1} parent=5 // pred_region
        %s379 = ssub.s32 %s24, 1
        // Predicated region
        $region65: #{postnet_forward.1} parent=63 // pred_check
          %p380 = pneg %p113
        $region66: #{postnet_forward.1} parent=63 // pred_check_branch
          %382 = sbr.rel (%p380) target = $region68
        $region67: #{postnet_forward.1} parent=63 // pred_region
          %383 = dma.done [#allocation8], 5120
        $region68: #{postnet_forward.1} parent=63 // pred_fallthru
          _
        // Predicated region
        $region69: #{postnet_forward.1} parent=63 // pred_check
          %p384 = pneg %p155
        $region70: #{postnet_forward.1} parent=63 // pred_check_branch
          %386 = sbr.rel (%p384) target = $region72
        $region71: #{postnet_forward.1} parent=63 // pred_region
          %387 = dma.done [#allocation11], 5120
        $region72: #{postnet_forward.1} parent=63 // pred_fallthru
          _
        // Predicated region
        $region73: #{postnet_forward.1} parent=63 // pred_check
          %p388 = pneg %p197
        $region74: #{postnet_forward.1} parent=63 // pred_check_branch
          %390 = sbr.rel (%p388) target = $region76
        $region75: #{postnet_forward.1} parent=63 // pred_region
          %391 = dma.done [#allocation11], 5120
        $region76: #{postnet_forward.1} parent=63 // pred_fallthru
          _
        %p392 = scmp.lt.s32.totalorder %s29, 1
        %s393 = scalar_select %p392, %s29, 1
        %s394 = smul.addr %s393, 10
        %s395 = smul.addr %s394, 8
        %s396 = scalar_lea.vmem %s0, %s395
        %p397 = pneg %p50
        %p398 = pneg %p47
        %p399 = pneg %p71
        %p400 = pneg %p68
        %p401 = pneg %p92
        %p402 = pneg %p89
        %p403 = pneg %p113
        %p404 = pneg %p110
        %p405 = pneg %p134
        %p406 = pneg %p131
        %p407 = pneg %p155
        %p408 = pneg %p152
        %p409 = pneg %p176
        %p410 = pneg %p173
        %p411 = pneg %p197
        %p412 = pneg %p194
        %p413 = pneg %p218
        %p414 = pneg %p215
        %p415 = pneg %p239
        %p416 = pneg %p236
        %p417 = pneg %p260
        %p418 = pneg %p257
        %p419 = pneg %p286
        %p420 = pneg %p283
        %s421 = sand.u32 %s273, 1
        %s422 = scalar_lea.sflag [#allocation9], %s421
        %s423 = sand.u32 %s273, 1
        %s424 = scalar_lea.vmem [#allocation13], %s423
        %p425 = scmp.lt.s32.totalorder %s29, 1
        %s426 = scalar_select %p425, %s29, 1
        %s427 = smul.addr %s426, 10
        %s428 = smul.addr %s427, 8
        %s429 = scalar_lea.vmem %s0, %s428
        %431 = vst [vmem:[#allocation2] sm:$0x3] 0.0
        %432 = vst [vmem:[#allocation2 + $0x52] sm:$0x3f] 0.0
        %433 = vst [vmem:[#allocation3] sm:$0x1] 0
        %434 = vst [vmem:[#allocation3 + $0x28] sm:$0xe] 0
        %435 = vst [vmem:[#allocation4] sm:$0x1] 0
        %436 = vst [vmem:[#allocation4 + $0x28] sm:$0xe] 0
        %v437 = vld [vmem:[%s429] sm:$0xff]
        %v438 = vld [vmem:[%s429 + $0x8] sm:$0xff]
        %v439 = vld [vmem:[%s429 + $0x10] sm:$0xff]
        %v440 = vld [vmem:[%s429 + $0x18] sm:$0xff]
        %v441 = vld [vmem:[%s429 + $0x20] sm:$0xff]
        %v442 = vld [vmem:[%s429 + $0x28] sm:$0xff]
        %v443 = vld [vmem:[%s429 + $0x30] sm:$0xff]
        %v444 = vld [vmem:[%s429 + $0x38] sm:$0xff]
        %v445 = vld [vmem:[%s429 + $0x40] sm:$0xff]
        %v446 = vld [vmem:[%s429 + $0x48] sm:$0xff]
        %448 = vset.pattern.permute.xlu0 0
        %449 = vperm.xlu0 %448, %v437
        %v450 = vpop.permute.xlu0 %449
        %453 = vset.pattern.permute.xlu0 0
        %454 = vperm.xlu0 %453, %v438
        %v455 = vpop.permute.xlu0 %454
        %458 = vset.pattern.permute.xlu0 0
        %459 = vperm.xlu0 %458, %v439
        %v460 = vpop.permute.xlu0 %459
        %463 = vset.pattern.permute.xlu0 0
        %464 = vperm.xlu0 %463, %v440
        %v465 = vpop.permute.xlu0 %464
        %468 = vset.pattern.permute.xlu0 0
        %469 = vperm.xlu0 %468, %v441
        %v470 = vpop.permute.xlu0 %469
        %473 = vset.pattern.permute.xlu0 0
        %474 = vperm.xlu0 %473, %v442
        %v475 = vpop.permute.xlu0 %474
        %478 = vset.pattern.permute.xlu0 0
        %479 = vperm.xlu0 %478, %v443
        %v480 = vpop.permute.xlu0 %479
        %483 = vset.pattern.permute.xlu0 0
        %484 = vperm.xlu0 %483, %v444
        %v485 = vpop.permute.xlu0 %484
        %488 = vset.pattern.permute.xlu0 0
        %489 = vperm.xlu0 %488, %v445
        %v490 = vpop.permute.xlu0 %489
        %493 = vset.pattern.permute.xlu0 0
        %494 = vperm.xlu0 %493, %v446
        %v495 = vpop.permute.xlu0 %494
        %497 = vst [vmem:[#allocation2 + $0x2] sm:$0xff] %v450
        %498 = vst [vmem:[#allocation2 + $0xa] sm:$0xff] %v455
        %499 = vst [vmem:[#allocation2 + $0x12] sm:$0xff] %v460
        %500 = vst [vmem:[#allocation2 + $0x1a] sm:$0xff] %v465
        %501 = vst [vmem:[#allocation2 + $0x22] sm:$0xff] %v470
        %502 = vst [vmem:[#allocation2 + $0x2a] sm:$0xff] %v475
        %503 = vst [vmem:[#allocation2 + $0x32] sm:$0xff] %v480
        %504 = vst [vmem:[#allocation2 + $0x3a] sm:$0xff] %v485
        %505 = vst [vmem:[#allocation2 + $0x42] sm:$0xff] %v490
        %506 = vst [vmem:[#allocation2 + $0x4a] sm:$0xff] %v495
        %v507 = vld [vmem:[#allocation2] sm:$0xff]
        %v508 = vld [vmem:[#allocation2 + $0x8] sm:$0xff]
        %v509 = vld [vmem:[#allocation2 + $0x10] sm:$0xff]
        %v510 = vld [vmem:[#allocation2 + $0x18] sm:$0xff]
        %v511 = vld [vmem:[#allocation2 + $0x20] sm:$0xff]
        %v512 = vld [vmem:[#allocation2 + $0x28] sm:$0xff]
        %v513 = vld [vmem:[#allocation2 + $0x30] sm:$0xff]
        %v514 = vld [vmem:[#allocation2 + $0x38] sm:$0xff]
        %v515 = vld [vmem:[#allocation2 + $0x40] sm:$0xff]
        %v516 = vld [vmem:[#allocation2 + $0x48] sm:$0xff]
        %v517 = vld [vmem:[%s1] sm:$0x1]
        %v518 = vlaneseq
        %v519 = vshrl.u32 %v518, 7
        %v520 = vsub.s32 0, %v519
        %v521 = vrot.slane %v517, %v520
        %v522 = vmul.f32 %v507, %v521
        %v523 = vmul.f32 %v508, %v521
        %v524 = vmul.f32 %v509, %v521
        %v525 = vmul.f32 %v510, %v521
        %v526 = vmul.f32 %v511, %v521
        %v527 = vmul.f32 %v512, %v521
        %v528 = vmul.f32 %v513, %v521
        %v529 = vmul.f32 %v514, %v521
        %v530 = vmul.f32 %v515, %v521
        %v531 = vmul.f32 %v516, %v521
        %v532 = vadd.f32 %v522, 0.0
        %v533 = vadd.f32 %v523, 0.0
        %v534 = vadd.f32 %v524, 0.0
        %v535 = vadd.f32 %v525, 0.0
        %v536 = vadd.f32 %v526, 0.0
        %v537 = vadd.f32 %v527, 0.0
        %v538 = vadd.f32 %v528, 0.0
        %v539 = vadd.f32 %v529, 0.0
        %v540 = vadd.f32 %v530, 0.0
        %v541 = vadd.f32 %v531, 0.0
        %v542 = vld [vmem:[#allocation2 + $0x1] sm:$0xff]
        %v543 = vld [vmem:[#allocation2 + $0x9] sm:$0xff]
        %v544 = vld [vmem:[#allocation2 + $0x11] sm:$0xff]
        %v545 = vld [vmem:[#allocation2 + $0x19] sm:$0xff]
        %v546 = vld [vmem:[#allocation2 + $0x21] sm:$0xff]
        %v547 = vld [vmem:[#allocation2 + $0x29] sm:$0xff]
        %v548 = vld [vmem:[#allocation2 + $0x31] sm:$0xff]
        %v549 = vld [vmem:[#allocation2 + $0x39] sm:$0xff]
        %v550 = vld [vmem:[#allocation2 + $0x41] sm:$0xff]
        %v551 = vld [vmem:[#allocation2 + $0x49] sm:$0xff]
        %v552 = vld [vmem:[%s1 + $0x1] sm:$0x1]
        %v553 = vlaneseq
        %v554 = vshrl.u32 %v553, 7
        %v555 = vsub.s32 0, %v554
        %v556 = vrot.slane %v552, %v555
        %v557 = vmul.f32 %v542, %v556
        %v558 = vmul.f32 %v543, %v556
        %v559 = vmul.f32 %v544, %v556
        %v560 = vmul.f32 %v545, %v556
        %v561 = vmul.f32 %v546, %v556
        %v562 = vmul.f32 %v547, %v556
        %v563 = vmul.f32 %v548, %v556
        %v564 = vmul.f32 %v549, %v556
        %v565 = vmul.f32 %v550, %v556
        %v566 = vmul.f32 %v551, %v556
        %v567 = vadd.f32 %v532, %v557
        %v568 = vadd.f32 %v533, %v558
        %v569 = vadd.f32 %v534, %v559
        %v570 = vadd.f32 %v535, %v560
        %v571 = vadd.f32 %v536, %v561
        %v572 = vadd.f32 %v537, %v562
        %v573 = vadd.f32 %v538, %v563
        %v574 = vadd.f32 %v539, %v564
        %v575 = vadd.f32 %v540, %v565
        %v576 = vadd.f32 %v541, %v566
        %v577 = vld [vmem:[#allocation2 + $0x2] sm:$0xff]
        %v578 = vld [vmem:[#allocation2 + $0xa] sm:$0xff]
        %v579 = vld [vmem:[#allocation2 + $0x12] sm:$0xff]
        %v580 = vld [vmem:[#allocation2 + $0x1a] sm:$0xff]
        %v581 = vld [vmem:[#allocation2 + $0x22] sm:$0xff]
        %v582 = vld [vmem:[#allocation2 + $0x2a] sm:$0xff]
        %v583 = vld [vmem:[#allocation2 + $0x32] sm:$0xff]
        %v584 = vld [vmem:[#allocation2 + $0x3a] sm:$0xff]
        %v585 = vld [vmem:[#allocation2 + $0x42] sm:$0xff]
        %v586 = vld [vmem:[#allocation2 + $0x4a] sm:$0xff]
        %v587 = vld [vmem:[%s1 + $0x2] sm:$0x1]
        %v588 = vlaneseq
        %v589 = vshrl.u32 %v588, 7
        %v590 = vsub.s32 0, %v589
        %v591 = vrot.slane %v587, %v590
        %v592 = vmul.f32 %v577, %v591
        %v593 = vmul.f32 %v578, %v591
        %v594 = vmul.f32 %v579, %v591
        %v595 = vmul.f32 %v580, %v591
        %v596 = vmul.f32 %v581, %v591
        %v597 = vmul.f32 %v582, %v591
        %v598 = vmul.f32 %v583, %v591
        %v599 = vmul.f32 %v584, %v591
        %v600 = vmul.f32 %v585, %v591
        %v601 = vmul.f32 %v586, %v591
        %v602 = vadd.f32 %v567, %v592
        %v603 = vadd.f32 %v568, %v593
        %v604 = vadd.f32 %v569, %v594
        %v605 = vadd.f32 %v570, %v595
        %v606 = vadd.f32 %v571, %v596
        %v607 = vadd.f32 %v572, %v597
        %v608 = vadd.f32 %v573, %v598
        %v609 = vadd.f32 %v574, %v599
        %v610 = vadd.f32 %v575, %v600
        %v611 = vadd.f32 %v576, %v601
        %v612 = vld [vmem:[#allocation2 + $0x3] sm:$0xff]
        %v613 = vld [vmem:[#allocation2 + $0xb] sm:$0xff]
        %v614 = vld [vmem:[#allocation2 + $0x13] sm:$0xff]
        %v615 = vld [vmem:[#allocation2 + $0x1b] sm:$0xff]
        %v616 = vld [vmem:[#allocation2 + $0x23] sm:$0xff]
        %v617 = vld [vmem:[#allocation2 + $0x2b] sm:$0xff]
        %v618 = vld [vmem:[#allocation2 + $0x33] sm:$0xff]
        %v619 = vld [vmem:[#allocation2 + $0x3b] sm:$0xff]
        %v620 = vld [vmem:[#allocation2 + $0x43] sm:$0xff]
        %v621 = vld [vmem:[#allocation2 + $0x4b] sm:$0xff]
        %v622 = vld [vmem:[%s1 + $0x3] sm:$0x1]
        %v623 = vlaneseq
        %v624 = vshrl.u32 %v623, 7
        %v625 = vsub.s32 0, %v624
        %v626 = vrot.slane %v622, %v625
        %v627 = vmul.f32 %v612, %v626
        %v628 = vmul.f32 %v613, %v626
        %v629 = vmul.f32 %v614, %v626
        %v630 = vmul.f32 %v615, %v626
        %v631 = vmul.f32 %v616, %v626
        %v632 = vmul.f32 %v617, %v626
        %v633 = vmul.f32 %v618, %v626
        %v634 = vmul.f32 %v619, %v626
        %v635 = vmul.f32 %v620, %v626
        %v636 = vmul.f32 %v621, %v626
        %v637 = vadd.f32 %v602, %v627
        %v638 = vadd.f32 %v603, %v628
        %v639 = vadd.f32 %v604, %v629
        %v640 = vadd.f32 %v605, %v630
        %v641 = vadd.f32 %v606, %v631
        %v642 = vadd.f32 %v607, %v632
        %v643 = vadd.f32 %v608, %v633
        %v644 = vadd.f32 %v609, %v634
        %v645 = vadd.f32 %v610, %v635
        %v646 = vadd.f32 %v611, %v636
        %v647 = vld [vmem:[#allocation2 + $0x4] sm:$0xff]
        %v648 = vld [vmem:[#allocation2 + $0xc] sm:$0xff]
        %v649 = vld [vmem:[#allocation2 + $0x14] sm:$0xff]
        %v650 = vld [vmem:[#allocation2 + $0x1c] sm:$0xff]
        %v651 = vld [vmem:[#allocation2 + $0x24] sm:$0xff]
        %v652 = vld [vmem:[#allocation2 + $0x2c] sm:$0xff]
        %v653 = vld [vmem:[#allocation2 + $0x34] sm:$0xff]
        %v654 = vld [vmem:[#allocation2 + $0x3c] sm:$0xff]
        %v655 = vld [vmem:[#allocation2 + $0x44] sm:$0xff]
        %v656 = vld [vmem:[#allocation2 + $0x4c] sm:$0xff]
        %v657 = vld [vmem:[%s1 + $0x4] sm:$0x1]
        %v658 = vlaneseq
        %v659 = vshrl.u32 %v658, 7
        %v660 = vsub.s32 0, %v659
        %v661 = vrot.slane %v657, %v660
        %v662 = vmul.f32 %v647, %v661
        %v663 = vmul.f32 %v648, %v661
        %v664 = vmul.f32 %v649, %v661
        %v665 = vmul.f32 %v650, %v661
        %v666 = vmul.f32 %v651, %v661
        %v667 = vmul.f32 %v652, %v661
        %v668 = vmul.f32 %v653, %v661
        %v669 = vmul.f32 %v654, %v661
        %v670 = vmul.f32 %v655, %v661
        %v671 = vmul.f32 %v656, %v661
        %v672 = vadd.f32 %v637, %v662
        %v673 = vadd.f32 %v638, %v663
        %v674 = vadd.f32 %v639, %v664
        %v675 = vadd.f32 %v640, %v665
        %v676 = vadd.f32 %v641, %v666
        %v677 = vadd.f32 %v642, %v667
        %v678 = vadd.f32 %v643, %v668
        %v679 = vadd.f32 %v644, %v669
        %v680 = vadd.f32 %v645, %v670
        %v681 = vadd.f32 %v646, %v671
        %v682 = vld [vmem:[%s2] sm:$0x1]
        %v684 = vlaneseq
        %v685 = vshrl.u32 %v684, 7
        %v686 = vsub.s32 0, %v685
        %v687 = vrot.slane %v682, %v686
        %v689 = vadd.f32 %v672, %v687
        %v690 = vadd.f32 %v673, %v687
        %v691 = vadd.f32 %v674, %v687
        %v692 = vadd.f32 %v675, %v687
        %v693 = vadd.f32 %v676, %v687
        %v694 = vadd.f32 %v677, %v687
        %v695 = vadd.f32 %v678, %v687
        %v696 = vadd.f32 %v679, %v687
        %v697 = vadd.f32 %v680, %v687
        %v698 = vadd.f32 %v681, %v687
        %v699 = vtanh.pop %v689
        %v700 = vtanh.pop %v690
        %v701 = vtanh.pop %v691
        %v702 = vtanh.pop %v692
        %v703 = vtanh.pop %v693
        %v704 = vtanh.pop %v694
        %v705 = vtanh.pop %v695
        %v706 = vtanh.pop %v696
        %v707 = vtanh.pop %v697
        %v708 = vtanh.pop %v698
        %v709 = vpack.c.bf16 %v700, %v699
        %v710 = vpack.c.bf16 %v702, %v701
        %v711 = vpack.c.bf16 %v704, %v703
        %v712 = vpack.c.bf16 %v706, %v705
        %v713 = vpack.c.bf16 %v708, %v707
        %v719 = vunpack.c.l.b16 %v709
        %v720 = vunpack.c.h.b16 %v709
        %v721 = vunpack.c.l.b16 %v710
        %v722 = vunpack.c.h.b16 %v710
        %v723 = vunpack.c.l.b16 %v711
        %v724 = vunpack.c.h.b16 %v711
        %v725 = vunpack.c.l.b16 %v712
        %v726 = vunpack.c.h.b16 %v712
        %v727 = vunpack.c.l.b16 %v713
        %v728 = vunpack.c.h.b16 %v713
        %v729 = vpack.c.b16 %v719, %v719
        %v730 = vpack.c.b16 %v720, %v720
        %v731 = vpack.c.b16 %v721, %v721
        %v732 = vpack.c.b16 %v722, %v722
        %v733 = vpack.c.b16 %v723, %v723
        %v734 = vpack.c.b16 %v724, %v724
        %v735 = vpack.c.b16 %v725, %v725
        %v736 = vpack.c.b16 %v726, %v726
        %v737 = vpack.c.b16 %v727, %v727
        %v738 = vpack.c.b16 %v728, %v728
        %vm739 = vcmask 1040384
        %vm740 = vcmask 1044484
        %vm741 = vmor %vm739, %vm740
        %v742 = vrot.slane %v729, 7
        %v743 = vrot.slane %v742, 4
        %v744 = vrot.slane %v730, 7
        %v745 = vsel %vm741, %v743, %v744
        %v746 = vrot.slane %v744, 4
        %v747 = vrot.slane %v731, 7
        %v748 = vsel %vm741, %v746, %v747
        %v749 = vrot.slane %v747, 4
        %v750 = vrot.slane %v732, 7
        %v751 = vsel %vm741, %v749, %v750
        %v752 = vrot.slane %v750, 4
        %v753 = vrot.slane %v733, 7
        %v754 = vsel %vm741, %v752, %v753
        %v755 = vrot.slane %v753, 4
        %v756 = vrot.slane %v734, 7
        %v757 = vsel %vm741, %v755, %v756
        %v758 = vrot.slane %v756, 4
        %v759 = vrot.slane %v735, 7
        %v760 = vsel %vm741, %v758, %v759
        %v761 = vrot.slane %v759, 4
        %v762 = vrot.slane %v736, 7
        %v763 = vsel %vm741, %v761, %v762
        %v764 = vrot.slane %v762, 4
        %v765 = vrot.slane %v737, 7
        %v766 = vsel %vm741, %v764, %v765
        %v767 = vrot.slane %v765, 4
        %v768 = vrot.slane %v738, 7
        %v769 = vsel %vm741, %v767, %v768
        %v770 = vrot.slane %v768, 4
        %782 = vst [vmem:[#allocation3] sm:$0xe] %v742
        %783 = vst [vmem:[#allocation3 + $0x4] sm:$0xf] %v745
        %784 = vst [vmem:[#allocation3 + $0x8] sm:$0xf] %v748
        %785 = vst [vmem:[#allocation3 + $0xc] sm:$0xf] %v751
        %786 = vst [vmem:[#allocation3 + $0x10] sm:$0xf] %v754
        %787 = vst [vmem:[#allocation3 + $0x14] sm:$0xf] %v757
        %788 = vst [vmem:[#allocation3 + $0x18] sm:$0xf] %v760
        %789 = vst [vmem:[#allocation3 + $0x1c] sm:$0xf] %v763
        %790 = vst [vmem:[#allocation3 + $0x20] sm:$0xf] %v766
        %791 = vst [vmem:[#allocation3 + $0x24] sm:$0xf] %v769
        %792 = vst [vmem:[#allocation3 + $0x28] sm:$0x1] %v770
        %v793 = vld [vmem:[#allocation3] sm:$0xf]
        %v794 = vld [vmem:[#allocation3 + $0x4] sm:$0xf]
        %v795 = vld [vmem:[#allocation3 + $0x8] sm:$0xf]
        %v796 = vld [vmem:[#allocation3 + $0xc] sm:$0xf]
        %v797 = vld [vmem:[#allocation3 + $0x10] sm:$0xf]
        %v798 = vld [vmem:[#allocation3 + $0x14] sm:$0xf]
        %v799 = vld [vmem:[#allocation3 + $0x18] sm:$0xf]
        %v800 = vld [vmem:[#allocation3 + $0x1c] sm:$0xf]
        %v801 = vld [vmem:[#allocation3 + $0x20] sm:$0xf]
        %v802 = vld [vmem:[#allocation3 + $0x24] sm:$0xf]
        %803 = vst [vmem:[#allocation5] sm:$0xf] %v793
        %804 = vst [vmem:[#allocation5 + $0x14] sm:$0xf] %v794
        %805 = vst [vmem:[#allocation5 + $0x28] sm:$0xf] %v795
        %806 = vst [vmem:[#allocation5 + $0x3c] sm:$0xf] %v796
        %807 = vst [vmem:[#allocation5 + $0x50] sm:$0xf] %v797
        %808 = vst [vmem:[#allocation5 + $0x64] sm:$0xf] %v798
        %809 = vst [vmem:[#allocation5 + $0x78] sm:$0xf] %v799
        %810 = vst [vmem:[#allocation5 + $0x8c] sm:$0xf] %v800
        %811 = vst [vmem:[#allocation5 + $0xa0] sm:$0xf] %v801
        %812 = vst [vmem:[#allocation5 + $0xb4] sm:$0xf] %v802
        %v813 = vld [vmem:[#allocation3] sm:$0xf]
        %v814 = vld [vmem:[#allocation3 + $0x4] sm:$0xf]
        %v815 = vld [vmem:[#allocation3 + $0x8] sm:$0xf]
        %v816 = vld [vmem:[#allocation3 + $0xc] sm:$0xf]
        %v817 = vld [vmem:[#allocation3 + $0x10] sm:$0xf]
        %v818 = vld [vmem:[#allocation3 + $0x14] sm:$0xf]
        %v819 = vld [vmem:[#allocation3 + $0x18] sm:$0xf]
        %v820 = vld [vmem:[#allocation3 + $0x1c] sm:$0xf]
        %v821 = vld [vmem:[#allocation3 + $0x20] sm:$0xf]
        %v822 = vld [vmem:[#allocation3 + $0x24] sm:$0xf]
        %v823 = vld [vmem:[#allocation3 + $0x28] sm:$0x1]
        %vm824 = vsmask.f32 3328
        %vm825 = vsmask.f32 7440
        %vm826 = vmor %vm824, %vm825
        %v828 = vshrl.u32 %v813, 16
        %v830 = vrot.slane %v828, 4
        %v831 = vshll.u32 %v813, 16
        %v833 = vrot.slane %v831, 5
        %v834 = vor.u32 %v830, %v833
        %v835 = vrot.slane %v834, 4
        %v837 = vshll.u32 %v814, 16
        %v839 = vrot.slane %v837, 5
        %v840 = vsel %vm826, %v835, %v839
        %v841 = vshrl.u32 %v814, 16
        %v843 = vrot.slane %v841, 4
        %v844 = vor.u32 %v843, %v839
        %v845 = vrot.slane %v844, 4
        %v847 = vshll.u32 %v815, 16
        %v849 = vrot.slane %v847, 5
        %v850 = vsel %vm826, %v845, %v849
        %v851 = vshrl.u32 %v815, 16
        %v853 = vrot.slane %v851, 4
        %v854 = vor.u32 %v853, %v849
        %v855 = vrot.slane %v854, 4
        %v857 = vshll.u32 %v816, 16
        %v859 = vrot.slane %v857, 5
        %v860 = vsel %vm826, %v855, %v859
        %v861 = vshrl.u32 %v816, 16
        %v863 = vrot.slane %v861, 4
        %v864 = vor.u32 %v863, %v859
        %v865 = vrot.slane %v864, 4
        %v867 = vshll.u32 %v817, 16
        %v869 = vrot.slane %v867, 5
        %v870 = vsel %vm826, %v865, %v869
        %v871 = vshrl.u32 %v817, 16
        %v873 = vrot.slane %v871, 4
        %v874 = vor.u32 %v873, %v869
        %v875 = vrot.slane %v874, 4
        %v877 = vshll.u32 %v818, 16
        %v879 = vrot.slane %v877, 5
        %v880 = vsel %vm826, %v875, %v879
        %v881 = vshrl.u32 %v818, 16
        %v883 = vrot.slane %v881, 4
        %v884 = vor.u32 %v883, %v879
        %v885 = vrot.slane %v884, 4
        %v887 = vshll.u32 %v819, 16
        %v889 = vrot.slane %v887, 5
        %v890 = vsel %vm826, %v885, %v889
        %v891 = vshrl.u32 %v819, 16
        %v893 = vrot.slane %v891, 4
        %v894 = vor.u32 %v893, %v889
        %v895 = vrot.slane %v894, 4
        %v897 = vshll.u32 %v820, 16
        %v899 = vrot.slane %v897, 5
        %v900 = vsel %vm826, %v895, %v899
        %v901 = vshrl.u32 %v820, 16
        %v903 = vrot.slane %v901, 4
        %v904 = vor.u32 %v903, %v899
        %v905 = vrot.slane %v904, 4
        %v907 = vshll.u32 %v821, 16
        %v909 = vrot.slane %v907, 5
        %v910 = vsel %vm826, %v905, %v909
        %v911 = vshrl.u32 %v821, 16
        %v913 = vrot.slane %v911, 4
        %v914 = vor.u32 %v913, %v909
        %v915 = vrot.slane %v914, 4
        %v917 = vshll.u32 %v822, 16
        %v919 = vrot.slane %v917, 5
        %v920 = vsel %vm826, %v915, %v919
        %v921 = vshrl.u32 %v822, 16
        %v923 = vrot.slane %v921, 4
        %v924 = vor.u32 %v923, %v919
        %v925 = vrot.slane %v924, 4
        %v927 = vshll.u32 %v823, 16
        %v929 = vrot.slane %v927, 5
        %v930 = vsel %vm826, %v925, %v929
        %941 = vst [vmem:[#allocation5 + $0x4] sm:$0xf] %v840
        %942 = vst [vmem:[#allocation5 + $0x18] sm:$0xf] %v850
        %943 = vst [vmem:[#allocation5 + $0x2c] sm:$0xf] %v860
        %944 = vst [vmem:[#allocation5 + $0x40] sm:$0xf] %v870
        %945 = vst [vmem:[#allocation5 + $0x54] sm:$0xf] %v880
        %946 = vst [vmem:[#allocation5 + $0x68] sm:$0xf] %v890
        %947 = vst [vmem:[#allocation5 + $0x7c] sm:$0xf] %v900
        %948 = vst [vmem:[#allocation5 + $0x90] sm:$0xf] %v910
        %949 = vst [vmem:[#allocation5 + $0xa4] sm:$0xf] %v920
        %950 = vst [vmem:[#allocation5 + $0xb8] sm:$0xf] %v930
        %v951 = vld [vmem:[#allocation3] sm:$0xe]
        %v952 = vld [vmem:[#allocation3 + $0x4] sm:$0xf]
        %v953 = vld [vmem:[#allocation3 + $0x8] sm:$0xf]
        %v954 = vld [vmem:[#allocation3 + $0xc] sm:$0xf]
        %v955 = vld [vmem:[#allocation3 + $0x10] sm:$0xf]
        %v956 = vld [vmem:[#allocation3 + $0x14] sm:$0xf]
        %v957 = vld [vmem:[#allocation3 + $0x18] sm:$0xf]
        %v958 = vld [vmem:[#allocation3 + $0x1c] sm:$0xf]
        %v959 = vld [vmem:[#allocation3 + $0x20] sm:$0xf]
        %v960 = vld [vmem:[#allocation3 + $0x24] sm:$0xf]
        %v961 = vld [vmem:[#allocation3 + $0x28] sm:$0x1]
        %vm973 = vcmask 1042432
        %vm974 = vcmask 1046532
        %vm975 = vmor %vm973, %vm974
        %v976 = vrot.slane %v951, 5
        %v977 = vrot.slane %v976, 4
        %v978 = vrot.slane %v952, 5
        %v979 = vsel %vm975, %v977, %v978
        %v980 = vrot.slane %v978, 4
        %v981 = vrot.slane %v953, 5
        %v982 = vsel %vm975, %v980, %v981
        %v983 = vrot.slane %v981, 4
        %v984 = vrot.slane %v954, 5
        %v985 = vsel %vm975, %v983, %v984
        %v986 = vrot.slane %v984, 4
        %v987 = vrot.slane %v955, 5
        %v988 = vsel %vm975, %v986, %v987
        %v989 = vrot.slane %v987, 4
        %v990 = vrot.slane %v956, 5
        %v991 = vsel %vm975, %v989, %v990
        %v992 = vrot.slane %v990, 4
        %v993 = vrot.slane %v957, 5
        %v994 = vsel %vm975, %v992, %v993
        %v995 = vrot.slane %v993, 4
        %v996 = vrot.slane %v958, 5
        %v997 = vsel %vm975, %v995, %v996
        %v998 = vrot.slane %v996, 4
        %v999 = vrot.slane %v959, 5
        %v1000 = vsel %vm975, %v998, %v999
        %v1001 = vrot.slane %v999, 4
        %v1002 = vrot.slane %v960, 5
        %v1003 = vsel %vm975, %v1001, %v1002
        %v1004 = vrot.slane %v1002, 4
        %v1005 = vrot.slane %v961, 5
        %v1006 = vsel %vm975, %v1004, %v1005
        %1017 = vst [vmem:[#allocation5 + $0x8] sm:$0xf] %v979
        %1018 = vst [vmem:[#allocation5 + $0x1c] sm:$0xf] %v982
        %1019 = vst [vmem:[#allocation5 + $0x30] sm:$0xf] %v985
        %1020 = vst [vmem:[#allocation5 + $0x44] sm:$0xf] %v988
        %1021 = vst [vmem:[#allocation5 + $0x58] sm:$0xf] %v991
        %1022 = vst [vmem:[#allocation5 + $0x6c] sm:$0xf] %v994
        %1023 = vst [vmem:[#allocation5 + $0x80] sm:$0xf] %v997
        %1024 = vst [vmem:[#allocation5 + $0x94] sm:$0xf] %v1000
        %1025 = vst [vmem:[#allocation5 + $0xa8] sm:$0xf] %v1003
        %1026 = vst [vmem:[#allocation5 + $0xbc] sm:$0xf] %v1006
        %v1027 = vld [vmem:[#allocation3] sm:$0xe]
        %v1028 = vld [vmem:[#allocation3 + $0x4] sm:$0xf]
        %v1029 = vld [vmem:[#allocation3 + $0x8] sm:$0xf]
        %v1030 = vld [vmem:[#allocation3 + $0xc] sm:$0xf]
        %v1031 = vld [vmem:[#allocation3 + $0x10] sm:$0xf]
        %v1032 = vld [vmem:[#allocation3 + $0x14] sm:$0xf]
        %v1033 = vld [vmem:[#allocation3 + $0x18] sm:$0xf]
        %v1034 = vld [vmem:[#allocation3 + $0x1c] sm:$0xf]
        %v1035 = vld [vmem:[#allocation3 + $0x20] sm:$0xf]
        %v1036 = vld [vmem:[#allocation3 + $0x24] sm:$0xf]
        %v1037 = vld [vmem:[#allocation3 + $0x28] sm:$0x3]
        %vm1038 = vsmask.f32 2304
        %vm1039 = vsmask.f32 6416
        %vm1040 = vmor %vm1038, %vm1039
        %v1042 = vshrl.u32 %v1027, 16
        %v1044 = vrot.slane %v1042, 5
        %v1045 = vshll.u32 %v1027, 16
        %v1047 = vrot.slane %v1045, 6
        %v1048 = vor.u32 %v1044, %v1047
        %v1049 = vrot.slane %v1048, 4
        %v1051 = vshrl.u32 %v1028, 16
        %v1053 = vrot.slane %v1051, 5
        %v1054 = vshll.u32 %v1028, 16
        %v1056 = vrot.slane %v1054, 6
        %v1057 = vor.u32 %v1053, %v1056
        %v1058 = vsel %vm1040, %v1049, %v1057
        %v1059 = vrot.slane %v1057, 4
        %v1061 = vshrl.u32 %v1029, 16
        %v1063 = vrot.slane %v1061, 5
        %v1064 = vshll.u32 %v1029, 16
        %v1066 = vrot.slane %v1064, 6
        %v1067 = vor.u32 %v1063, %v1066
        %v1068 = vsel %vm1040, %v1059, %v1067
        %v1069 = vrot.slane %v1067, 4
        %v1071 = vshrl.u32 %v1030, 16
        %v1073 = vrot.slane %v1071, 5
        %v1074 = vshll.u32 %v1030, 16
        %v1076 = vrot.slane %v1074, 6
        %v1077 = vor.u32 %v1073, %v1076
        %v1078 = vsel %vm1040, %v1069, %v1077
        %v1079 = vrot.slane %v1077, 4
        %v1081 = vshrl.u32 %v1031, 16
        %v1083 = vrot.slane %v1081, 5
        %v1084 = vshll.u32 %v1031, 16
        %v1086 = vrot.slane %v1084, 6
        %v1087 = vor.u32 %v1083, %v1086
        %v1088 = vsel %vm1040, %v1079, %v1087
        %v1089 = vrot.slane %v1087, 4
        %v1091 = vshrl.u32 %v1032, 16
        %v1093 = vrot.slane %v1091, 5
        %v1094 = vshll.u32 %v1032, 16
        %v1096 = vrot.slane %v1094, 6
        %v1097 = vor.u32 %v1093, %v1096
        %v1098 = vsel %vm1040, %v1089, %v1097
        %v1099 = vrot.slane %v1097, 4
        %v1101 = vshrl.u32 %v1033, 16
        %v1103 = vrot.slane %v1101, 5
        %v1104 = vshll.u32 %v1033, 16
        %v1106 = vrot.slane %v1104, 6
        %v1107 = vor.u32 %v1103, %v1106
        %v1108 = vsel %vm1040, %v1099, %v1107
        %v1109 = vrot.slane %v1107, 4
        %v1111 = vshrl.u32 %v1034, 16
        %v1113 = vrot.slane %v1111, 5
        %v1114 = vshll.u32 %v1034, 16
        %v1116 = vrot.slane %v1114, 6
        %v1117 = vor.u32 %v1113, %v1116
        %v1118 = vsel %vm1040, %v1109, %v1117
        %v1119 = vrot.slane %v1117, 4
        %v1121 = vshrl.u32 %v1035, 16
        %v1123 = vrot.slane %v1121, 5
        %v1124 = vshll.u32 %v1035, 16
        %v1126 = vrot.slane %v1124, 6
        %v1127 = vor.u32 %v1123, %v1126
        %v1128 = vsel %vm1040, %v1119, %v1127
        %v1129 = vrot.slane %v1127, 4
        %v1131 = vshrl.u32 %v1036, 16
        %v1133 = vrot.slane %v1131, 5
        %v1134 = vshll.u32 %v1036, 16
        %v1136 = vrot.slane %v1134, 6
        %v1137 = vor.u32 %v1133, %v1136
        %v1138 = vsel %vm1040, %v1129, %v1137
        %v1139 = vrot.slane %v1137, 4
        %v1141 = vshrl.u32 %v1037, 16
        %v1143 = vrot.slane %v1141, 5
        %v1144 = vshll.u32 %v1037, 16
        %v1146 = vrot.slane %v1144, 6
        %v1147 = vor.u32 %v1143, %v1146
        %v1148 = vsel %vm1040, %v1139, %v1147
        %1159 = vst [vmem:[#allocation5 + $0xc] sm:$0xf] %v1058
        %1160 = vst [vmem:[#allocation5 + $0x20] sm:$0xf] %v1068
        %1161 = vst [vmem:[#allocation5 + $0x34] sm:$0xf] %v1078
        %1162 = vst [vmem:[#allocation5 + $0x48] sm:$0xf] %v1088
        %1163 = vst [vmem:[#allocation5 + $0x5c] sm:$0xf] %v1098
        %1164 = vst [vmem:[#allocation5 + $0x70] sm:$0xf] %v1108
        %1165 = vst [vmem:[#allocation5 + $0x84] sm:$0xf] %v1118
        %1166 = vst [vmem:[#allocation5 + $0x98] sm:$0xf] %v1128
        %1167 = vst [vmem:[#allocation5 + $0xac] sm:$0xf] %v1138
        %1168 = vst [vmem:[#allocation5 + $0xc0] sm:$0xf] %v1148
        %v1169 = vld [vmem:[#allocation3] sm:$0xc]
        %v1170 = vld [vmem:[#allocation3 + $0x4] sm:$0xf]
        %v1171 = vld [vmem:[#allocation3 + $0x8] sm:$0xf]
        %v1172 = vld [vmem:[#allocation3 + $0xc] sm:$0xf]
        %v1173 = vld [vmem:[#allocation3 + $0x10] sm:$0xf]
        %v1174 = vld [vmem:[#allocation3 + $0x14] sm:$0xf]
        %v1175 = vld [vmem:[#allocation3 + $0x18] sm:$0xf]
        %v1176 = vld [vmem:[#allocation3 + $0x1c] sm:$0xf]
        %v1177 = vld [vmem:[#allocation3 + $0x20] sm:$0xf]
        %v1178 = vld [vmem:[#allocation3 + $0x24] sm:$0xf]
        %v1179 = vld [vmem:[#allocation3 + $0x28] sm:$0x3]
        %vm1191 = vcmask 1041408
        %vm1192 = vcmask 1045508
        %vm1193 = vmor %vm1191, %vm1192
        %v1194 = vrot.slane %v1169, 6
        %v1195 = vrot.slane %v1194, 4
        %v1196 = vrot.slane %v1170, 6
        %v1197 = vsel %vm1193, %v1195, %v1196
        %v1198 = vrot.slane %v1196, 4
        %v1199 = vrot.slane %v1171, 6
        %v1200 = vsel %vm1193, %v1198, %v1199
        %v1201 = vrot.slane %v1199, 4
        %v1202 = vrot.slane %v1172, 6
        %v1203 = vsel %vm1193, %v1201, %v1202
        %v1204 = vrot.slane %v1202, 4
        %v1205 = vrot.slane %v1173, 6
        %v1206 = vsel %vm1193, %v1204, %v1205
        %v1207 = vrot.slane %v1205, 4
        %v1208 = vrot.slane %v1174, 6
        %v1209 = vsel %vm1193, %v1207, %v1208
        %v1210 = vrot.slane %v1208, 4
        %v1211 = vrot.slane %v1175, 6
        %v1212 = vsel %vm1193, %v1210, %v1211
        %v1213 = vrot.slane %v1211, 4
        %v1214 = vrot.slane %v1176, 6
        %v1215 = vsel %vm1193, %v1213, %v1214
        %v1216 = vrot.slane %v1214, 4
        %v1217 = vrot.slane %v1177, 6
        %v1218 = vsel %vm1193, %v1216, %v1217
        %v1219 = vrot.slane %v1217, 4
        %v1220 = vrot.slane %v1178, 6
        %v1221 = vsel %vm1193, %v1219, %v1220
        %v1222 = vrot.slane %v1220, 4
        %v1223 = vrot.slane %v1179, 6
        %v1224 = vsel %vm1193, %v1222, %v1223
        %1235 = vst [vmem:[#allocation5 + $0x10] sm:$0xf] %v1197
        %1236 = vst [vmem:[#allocation5 + $0x24] sm:$0xf] %v1200
        %1237 = vst [vmem:[#allocation5 + $0x38] sm:$0xf] %v1203
        %1238 = vst [vmem:[#allocation5 + $0x4c] sm:$0xf] %v1206
        %1239 = vst [vmem:[#allocation5 + $0x60] sm:$0xf] %v1209
        %1240 = vst [vmem:[#allocation5 + $0x74] sm:$0xf] %v1212
        %1241 = vst [vmem:[#allocation5 + $0x88] sm:$0xf] %v1215
        %1242 = vst [vmem:[#allocation5 + $0x9c] sm:$0xf] %v1218
        %1243 = vst [vmem:[#allocation5 + $0xb0] sm:$0xf] %v1221
        %1244 = vst [vmem:[#allocation5 + $0xc4] sm:$0xf] %v1224
        %v1245 = vld [vmem:[#allocation5] sm:$0xff]
        %v1246 = vld [vmem:[#allocation5 + $0x8] sm:$0xff]
        %v1247 = vld [vmem:[#allocation5 + $0x10] sm:$0xf]
        %v1248 = vld [vmem:[#allocation5 + $0x14] sm:$0xff]
        %v1249 = vld [vmem:[#allocation5 + $0x1c] sm:$0xff]
        %v1250 = vld [vmem:[#allocation5 + $0x24] sm:$0xf]
        %v1251 = vld [vmem:[#allocation5 + $0x28] sm:$0xff]
        %v1252 = vld [vmem:[#allocation5 + $0x30] sm:$0xff]
        %v1253 = vld [vmem:[#allocation5 + $0x38] sm:$0xf]
        %v1254 = vld [vmem:[#allocation5 + $0x3c] sm:$0xff]
        %v1255 = vld [vmem:[#allocation5 + $0x44] sm:$0xff]
        %v1256 = vld [vmem:[#allocation5 + $0x4c] sm:$0xf]
        %v1257 = vld [vmem:[#allocation5 + $0x50] sm:$0xff]
        %v1258 = vld [vmem:[#allocation5 + $0x58] sm:$0xff]
        %v1259 = vld [vmem:[#allocation5 + $0x60] sm:$0xf]
        %v1260 = vld [vmem:[#allocation5 + $0x64] sm:$0xff]
        %v1261 = vld [vmem:[#allocation5 + $0x6c] sm:$0xff]
        %v1262 = vld [vmem:[#allocation5 + $0x74] sm:$0xf]
        %v1263 = vld [vmem:[#allocation5 + $0x78] sm:$0xff]
        %v1264 = vld [vmem:[#allocation5 + $0x80] sm:$0xff]
        %v1265 = vld [vmem:[#allocation5 + $0x88] sm:$0xf]
        %v1266 = vld [vmem:[#allocation5 + $0x8c] sm:$0xff]
        %v1267 = vld [vmem:[#allocation5 + $0x94] sm:$0xff]
        %v1268 = vld [vmem:[#allocation5 + $0x9c] sm:$0xf]
        %v1269 = vld [vmem:[#allocation5 + $0xa0] sm:$0xff]
        %v1270 = vld [vmem:[#allocation5 + $0xa8] sm:$0xff]
        %v1271 = vld [vmem:[#allocation5 + $0xb0] sm:$0xf]
        %v1272 = vld [vmem:[#allocation5 + $0xb4] sm:$0xff]
        %v1273 = vld [vmem:[#allocation5 + $0xbc] sm:$0xff]
        %v1274 = vld [vmem:[#allocation5 + $0xc4] sm:$0xf]
        %v1275 = vld [vmem:[#allocation7] sm:$0xf]
        %v1276 = vld [vmem:[#allocation7 + $0x4] sm:$0xf]
        %v1277 = vld [vmem:[#allocation7 + $0x8] sm:$0xf]
        %v1278 = vld [vmem:[#allocation7 + $0xc] sm:$0xf]
        %v1279 = vld [vmem:[#allocation7 + $0x10] sm:$0xf]
        %v1280 = vld [vmem:[#allocation7 + $0x14] sm:$0xf]
        %v1281 = vld [vmem:[#allocation7 + $0x18] sm:$0xf]
        %v1282 = vld [vmem:[#allocation7 + $0x1c] sm:$0xf]
        %v1283 = vld [vmem:[#allocation7 + $0x20] sm:$0xf]
        %v1284 = vld [vmem:[#allocation7 + $0x24] sm:$0xf]
        %v1285 = vld [vmem:[#allocation7 + $0x28] sm:$0xf]
        %v1286 = vld [vmem:[#allocation7 + $0x2c] sm:$0xf]
        %v1287 = vld [vmem:[#allocation7 + $0x30] sm:$0xf]
        %v1288 = vld [vmem:[#allocation7 + $0x34] sm:$0xf]
        %v1289 = vld [vmem:[#allocation7 + $0x38] sm:$0xf]
        %v1290 = vld [vmem:[#allocation7 + $0x3c] sm:$0xf]
        %v1291 = vld [vmem:[#allocation7 + $0x40] sm:$0xf]
        %v1292 = vld [vmem:[#allocation7 + $0x44] sm:$0xf]
        %v1293 = vld [vmem:[#allocation7 + $0x48] sm:$0xf]
        %v1294 = vld [vmem:[#allocation7 + $0x4c] sm:$0xf]
        %v1295 = vld [vmem:[#allocation7 + $0x50] sm:$0xf]
        %v1296 = vld [vmem:[#allocation7 + $0x54] sm:$0xf]
        %v1297 = vld [vmem:[#allocation7 + $0x58] sm:$0xf]
        %v1298 = vld [vmem:[#allocation7 + $0x5c] sm:$0xf]
        %v1299 = vld [vmem:[#allocation7 + $0x60] sm:$0xf]
        %v1300 = vld [vmem:[#allocation7 + $0x64] sm:$0xf]
        %v1301 = vld [vmem:[#allocation7 + $0x68] sm:$0xf]
        %v1302 = vld [vmem:[#allocation7 + $0x6c] sm:$0xf]
        %v1303 = vld [vmem:[#allocation7 + $0x70] sm:$0xf]
        %v1304 = vld [vmem:[#allocation7 + $0x74] sm:$0xf]
        %v1305 = vld [vmem:[#allocation7 + $0x78] sm:$0xf]
        %v1306 = vld [vmem:[#allocation7 + $0x7c] sm:$0xf]
        %v1307 = vld [vmem:[#allocation7 + $0x80] sm:$0xf]
        %v1308 = vld [vmem:[#allocation7 + $0x84] sm:$0xf]
        %v1309 = vld [vmem:[#allocation7 + $0x88] sm:$0xf]
        %v1310 = vld [vmem:[#allocation7 + $0x8c] sm:$0xf]
        %v1311 = vld [vmem:[#allocation7 + $0x90] sm:$0xf]
        %v1312 = vld [vmem:[#allocation7 + $0x94] sm:$0xf]
        %v1313 = vld [vmem:[#allocation7 + $0x98] sm:$0xf]
        %v1314 = vld [vmem:[#allocation7 + $0x9c] sm:$0xf]
        %v1315 = vld [vmem:[#allocation7 + $0xa0] sm:$0xf]
        %v1316 = vld [vmem:[#allocation7 + $0xa4] sm:$0xf]
        %v1317 = vld [vmem:[#allocation7 + $0xa8] sm:$0xf]
        %v1318 = vld [vmem:[#allocation7 + $0xac] sm:$0xf]
        %v1319 = vld [vmem:[#allocation7 + $0xb0] sm:$0xf]
        %v1320 = vld [vmem:[#allocation7 + $0xb4] sm:$0xf]
        %v1321 = vld [vmem:[#allocation7 + $0xb8] sm:$0xf]
        %v1322 = vld [vmem:[#allocation7 + $0xbc] sm:$0xf]
        %v1323 = vld [vmem:[#allocation7 + $0xc0] sm:$0xf]
        %v1324 = vld [vmem:[#allocation7 + $0xc4] sm:$0xf]
        %v1325 = vld [vmem:[#allocation7 + $0xc8] sm:$0xf]
        %v1326 = vld [vmem:[#allocation7 + $0xcc] sm:$0xf]
        %v1327 = vld [vmem:[#allocation7 + $0xd0] sm:$0xf]
        %v1328 = vld [vmem:[#allocation7 + $0xd4] sm:$0xf]
        %v1329 = vld [vmem:[#allocation7 + $0xd8] sm:$0xf]
        %v1330 = vld [vmem:[#allocation7 + $0xdc] sm:$0xf]
        %v1331 = vld [vmem:[#allocation7 + $0xe0] sm:$0xf]
        %v1332 = vld [vmem:[#allocation7 + $0xe4] sm:$0xf]
        %v1333 = vld [vmem:[#allocation7 + $0xe8] sm:$0xf]
        %v1334 = vld [vmem:[#allocation7 + $0xec] sm:$0xf]
        %v1335 = vld [vmem:[#allocation7 + $0xf0] sm:$0xf]
        %v1336 = vld [vmem:[#allocation7 + $0xf4] sm:$0xf]
        %v1337 = vld [vmem:[#allocation7 + $0xf8] sm:$0xf]
        %v1338 = vld [vmem:[#allocation7 + $0xfc] sm:$0xf]
        %v1339 = vld [vmem:[#allocation7 + $0x100] sm:$0xf]
        %v1340 = vld [vmem:[#allocation7 + $0x104] sm:$0xf]
        %v1341 = vld [vmem:[#allocation7 + $0x108] sm:$0xf]
        %v1342 = vld [vmem:[#allocation7 + $0x10c] sm:$0xf]
        %v1343 = vld [vmem:[#allocation7 + $0x110] sm:$0xf]
        %v1344 = vld [vmem:[#allocation7 + $0x114] sm:$0xf]
        %v1345 = vld [vmem:[#allocation7 + $0x118] sm:$0xf]
        %v1346 = vld [vmem:[#allocation7 + $0x11c] sm:$0xf]
        %v1347 = vld [vmem:[#allocation7 + $0x120] sm:$0xf]
        %v1348 = vld [vmem:[#allocation7 + $0x124] sm:$0xf]
        %v1349 = vld [vmem:[#allocation7 + $0x128] sm:$0xf]
        %v1350 = vld [vmem:[#allocation7 + $0x12c] sm:$0xf]
        %v1351 = vld [vmem:[#allocation7 + $0x130] sm:$0xf]
        %v1352 = vld [vmem:[#allocation7 + $0x134] sm:$0xf]
        %v1353 = vld [vmem:[#allocation7 + $0x138] sm:$0xf]
        %v1354 = vld [vmem:[#allocation7 + $0x13c] sm:$0xf]
        %v1355 = vld [vmem:[%s4] sm:$0x1]
        %v1357 = vlaneseq
        %v1358 = vshrl.u32 %v1357, 7
        %v1359 = vsub.s32 0, %v1358
        %v1360 = vrot.slane %v1355, %v1359
        %v1392 = vunpack.c.l.b16 %v1245
        %v1393 = vunpack.c.h.b16 %v1245
        %v1394 = vunpack.c.l.b16 %v1246
        %v1395 = vunpack.c.h.b16 %v1246
        %v1396 = vunpack.c.l.b16 %v1247
        %v1397 = vunpack.c.l.b16 %v1248
        %v1398 = vunpack.c.h.b16 %v1248
        %v1399 = vunpack.c.l.b16 %v1249
        %v1400 = vunpack.c.h.b16 %v1249
        %v1401 = vunpack.c.l.b16 %v1250
        %v1402 = vunpack.c.l.b16 %v1251
        %v1403 = vunpack.c.h.b16 %v1251
        %v1404 = vunpack.c.l.b16 %v1252
        %v1405 = vunpack.c.h.b16 %v1252
        %v1406 = vunpack.c.l.b16 %v1253
        %v1407 = vunpack.c.l.b16 %v1254
        %v1408 = vunpack.c.h.b16 %v1254
        %v1409 = vunpack.c.l.b16 %v1255
        %v1410 = vunpack.c.h.b16 %v1255
        %v1411 = vunpack.c.l.b16 %v1256
        %v1412 = vunpack.c.l.b16 %v1257
        %v1413 = vunpack.c.h.b16 %v1257
        %v1414 = vunpack.c.l.b16 %v1258
        %v1415 = vunpack.c.h.b16 %v1258
        %v1416 = vunpack.c.l.b16 %v1259
        %v1417 = vunpack.c.l.b16 %v1260
        %v1418 = vunpack.c.h.b16 %v1260
        %v1419 = vunpack.c.l.b16 %v1261
        %v1420 = vunpack.c.h.b16 %v1261
        %v1421 = vunpack.c.l.b16 %v1262
        %v1422 = vunpack.c.l.b16 %v1263
        %v1423 = vunpack.c.h.b16 %v1263
        %v1424 = vunpack.c.l.b16 %v1264
        %v1425 = vunpack.c.h.b16 %v1264
        %v1426 = vunpack.c.l.b16 %v1265
        %v1427 = vunpack.c.l.b16 %v1266
        %v1428 = vunpack.c.h.b16 %v1266
        %v1429 = vunpack.c.l.b16 %v1267
        %v1430 = vunpack.c.h.b16 %v1267
        %v1431 = vunpack.c.l.b16 %v1268
        %v1432 = vunpack.c.l.b16 %v1269
        %v1433 = vunpack.c.h.b16 %v1269
        %v1434 = vunpack.c.l.b16 %v1270
        %v1435 = vunpack.c.h.b16 %v1270
        %v1436 = vunpack.c.l.b16 %v1271
        %v1437 = vunpack.c.l.b16 %v1272
        %v1438 = vunpack.c.h.b16 %v1272
        %v1439 = vunpack.c.l.b16 %v1273
        %v1440 = vunpack.c.h.b16 %v1273
        %v1441 = vunpack.c.l.b16 %v1274
        %v1442 = vpack.c.b16 %v1397, %v1392
        %v1443 = vpack.c.b16 %v1398, %v1393
        %v1444 = vpack.c.b16 %v1399, %v1394
        %v1445 = vpack.c.b16 %v1400, %v1395
        %v1446 = vpack.c.b16 %v1401, %v1396
        %v1447 = vpack.c.b16 %v1407, %v1402
        %v1448 = vpack.c.b16 %v1408, %v1403
        %v1449 = vpack.c.b16 %v1409, %v1404
        %v1450 = vpack.c.b16 %v1410, %v1405
        %v1451 = vpack.c.b16 %v1411, %v1406
        %v1452 = vpack.c.b16 %v1417, %v1412
        %v1453 = vpack.c.b16 %v1418, %v1413
        %v1454 = vpack.c.b16 %v1419, %v1414
        %v1455 = vpack.c.b16 %v1420, %v1415
        %v1456 = vpack.c.b16 %v1421, %v1416
        %v1457 = vpack.c.b16 %v1427, %v1422
        %v1458 = vpack.c.b16 %v1428, %v1423
        %v1459 = vpack.c.b16 %v1429, %v1424
        %v1460 = vpack.c.b16 %v1430, %v1425
        %v1461 = vpack.c.b16 %v1431, %v1426
        %v1462 = vpack.c.b16 %v1437, %v1432
        %v1463 = vpack.c.b16 %v1438, %v1433
        %v1464 = vpack.c.b16 %v1439, %v1434
        %v1465 = vpack.c.b16 %v1440, %v1435
        %v1466 = vpack.c.b16 %v1441, %v1436
        %v1572 = vunpack.c.l.b16 %v1275
        %v1573 = vunpack.c.l.b16 %v1276
        %v1574 = vunpack.c.l.b16 %v1277
        %v1575 = vunpack.c.l.b16 %v1278
        %v1576 = vunpack.c.l.b16 %v1279
        %v1577 = vunpack.c.l.b16 %v1280
        %v1578 = vunpack.c.l.b16 %v1281
        %v1579 = vunpack.c.l.b16 %v1282
        %v1580 = vunpack.c.l.b16 %v1283
        %v1581 = vunpack.c.l.b16 %v1284
        %v1582 = vunpack.c.l.b16 %v1285
        %v1583 = vunpack.c.l.b16 %v1286
        %v1584 = vunpack.c.l.b16 %v1287
        %v1585 = vunpack.c.l.b16 %v1288
        %v1586 = vunpack.c.l.b16 %v1289
        %v1587 = vunpack.c.l.b16 %v1290
        %v1588 = vunpack.c.l.b16 %v1291
        %v1589 = vunpack.c.l.b16 %v1292
        %v1590 = vunpack.c.l.b16 %v1293
        %v1591 = vunpack.c.l.b16 %v1294
        %v1592 = vunpack.c.l.b16 %v1295
        %v1593 = vunpack.c.l.b16 %v1296
        %v1594 = vunpack.c.l.b16 %v1297
        %v1595 = vunpack.c.l.b16 %v1298
        %v1596 = vunpack.c.l.b16 %v1299
        %v1597 = vunpack.c.l.b16 %v1300
        %v1598 = vunpack.c.l.b16 %v1301
        %v1599 = vunpack.c.l.b16 %v1302
        %v1600 = vunpack.c.l.b16 %v1303
        %v1601 = vunpack.c.l.b16 %v1304
        %v1602 = vunpack.c.l.b16 %v1305
        %v1603 = vunpack.c.l.b16 %v1306
        %v1604 = vunpack.c.l.b16 %v1307
        %v1605 = vunpack.c.l.b16 %v1308
        %v1606 = vunpack.c.l.b16 %v1309
        %v1607 = vunpack.c.l.b16 %v1310
        %v1608 = vunpack.c.l.b16 %v1311
        %v1609 = vunpack.c.l.b16 %v1312
        %v1610 = vunpack.c.l.b16 %v1313
        %v1611 = vunpack.c.l.b16 %v1314
        %v1612 = vunpack.c.l.b16 %v1315
        %v1613 = vunpack.c.l.b16 %v1316
        %v1614 = vunpack.c.l.b16 %v1317
        %v1615 = vunpack.c.l.b16 %v1318
        %v1616 = vunpack.c.l.b16 %v1319
        %v1617 = vunpack.c.l.b16 %v1320
        %v1618 = vunpack.c.l.b16 %v1321
        %v1619 = vunpack.c.l.b16 %v1322
        %v1620 = vunpack.c.l.b16 %v1323
        %v1621 = vunpack.c.l.b16 %v1324
        %v1622 = vunpack.c.l.b16 %v1325
        %v1623 = vunpack.c.l.b16 %v1326
        %v1624 = vunpack.c.l.b16 %v1327
        %v1625 = vunpack.c.l.b16 %v1328
        %v1626 = vunpack.c.l.b16 %v1329
        %v1627 = vunpack.c.l.b16 %v1330
        %v1628 = vunpack.c.l.b16 %v1331
        %v1629 = vunpack.c.l.b16 %v1332
        %v1630 = vunpack.c.l.b16 %v1333
        %v1631 = vunpack.c.l.b16 %v1334
        %v1632 = vunpack.c.l.b16 %v1335
        %v1633 = vunpack.c.l.b16 %v1336
        %v1634 = vunpack.c.l.b16 %v1337
        %v1635 = vunpack.c.l.b16 %v1338
        %v1636 = vunpack.c.l.b16 %v1339
        %v1637 = vunpack.c.l.b16 %v1340
        %v1638 = vunpack.c.l.b16 %v1341
        %v1639 = vunpack.c.l.b16 %v1342
        %v1640 = vunpack.c.l.b16 %v1343
        %v1641 = vunpack.c.l.b16 %v1344
        %v1642 = vunpack.c.l.b16 %v1345
        %v1643 = vunpack.c.l.b16 %v1346
        %v1644 = vunpack.c.l.b16 %v1347
        %v1645 = vunpack.c.l.b16 %v1348
        %v1646 = vunpack.c.l.b16 %v1349
        %v1647 = vunpack.c.l.b16 %v1350
        %v1648 = vunpack.c.l.b16 %v1351
        %v1649 = vunpack.c.l.b16 %v1352
        %v1650 = vunpack.c.l.b16 %v1353
        %v1651 = vunpack.c.l.b16 %v1354
        %v1652 = vpack.c.b16 %v1573, %v1572
        %v1653 = vpack.c.b16 %v1575, %v1574
        %v1654 = vpack.c.b16 %v1577, %v1576
        %v1655 = vpack.c.b16 %v1579, %v1578
        %v1656 = vpack.c.b16 %v1581, %v1580
        %v1657 = vpack.c.b16 %v1583, %v1582
        %v1658 = vpack.c.b16 %v1585, %v1584
        %v1659 = vpack.c.b16 %v1587, %v1586
        %v1660 = vpack.c.b16 %v1589, %v1588
        %v1661 = vpack.c.b16 %v1591, %v1590
        %v1662 = vpack.c.b16 %v1593, %v1592
        %v1663 = vpack.c.b16 %v1595, %v1594
        %v1664 = vpack.c.b16 %v1597, %v1596
        %v1665 = vpack.c.b16 %v1599, %v1598
        %v1666 = vpack.c.b16 %v1601, %v1600
        %v1667 = vpack.c.b16 %v1603, %v1602
        %v1668 = vpack.c.b16 %v1605, %v1604
        %v1669 = vpack.c.b16 %v1607, %v1606
        %v1670 = vpack.c.b16 %v1609, %v1608
        %v1671 = vpack.c.b16 %v1611, %v1610
        %v1672 = vpack.c.b16 %v1613, %v1612
        %v1673 = vpack.c.b16 %v1615, %v1614
        %v1674 = vpack.c.b16 %v1617, %v1616
        %v1675 = vpack.c.b16 %v1619, %v1618
        %v1676 = vpack.c.b16 %v1621, %v1620
        %v1677 = vpack.c.b16 %v1623, %v1622
        %v1678 = vpack.c.b16 %v1625, %v1624
        %v1679 = vpack.c.b16 %v1627, %v1626
        %v1680 = vpack.c.b16 %v1629, %v1628
        %v1681 = vpack.c.b16 %v1631, %v1630
        %v1682 = vpack.c.b16 %v1633, %v1632
        %v1683 = vpack.c.b16 %v1635, %v1634
        %v1684 = vpack.c.b16 %v1637, %v1636
        %v1685 = vpack.c.b16 %v1639, %v1638
        %v1686 = vpack.c.b16 %v1641, %v1640
        %v1687 = vpack.c.b16 %v1643, %v1642
        %v1688 = vpack.c.b16 %v1645, %v1644
        %v1689 = vpack.c.b16 %v1647, %v1646
        %v1690 = vpack.c.b16 %v1649, %v1648
        %v1691 = vpack.c.b16 %v1651, %v1650
        %1732 = vmatprep.subr.bf16.mxu0 0
        %1733 = vmatpush1.bf16.msra.mxu0 %v1659
        %1734 = vmatprep.subr.bf16.mxu0 0
        %1735 = vmatpush1.bf16.msra.mxu0 %v1658
        %1736 = vmatprep.subr.bf16.mxu0 0
        %1737 = vmatpush1.bf16.msra.mxu0 %v1657
        %1738 = vmatprep.subr.bf16.mxu0 0
        %1739 = vmatpush1.bf16.msra.mxu0 %v1656
        %1740 = vmatprep.subr.bf16.mxu0 0
        %1741 = vmatpush1.bf16.msra.mxu0 %v1655
        %1742 = vmatprep.subr.bf16.mxu0 0
        %1743 = vmatpush1.bf16.msra.mxu0 %v1654
        %1744 = vmatprep.subr.bf16.mxu0 0
        %1745 = vmatpush1.bf16.msra.mxu0 %v1653
        %1746 = vmatprep.subr.bf16.mxu0 0
        %1747 = vmatpush1.bf16.msra.mxu0 %v1652
        %1748 = vmatprep.subr.bf16.mxu0 0
        %1749 = vmatpush2.bf16.msra.mxu0 %v1667
        %1750 = vmatprep.subr.bf16.mxu0 0
        %1751 = vmatpush2.bf16.msra.mxu0 %v1666
        %1752 = vmatprep.subr.bf16.mxu0 0
        %1753 = vmatpush2.bf16.msra.mxu0 %v1665
        %1754 = vmatprep.subr.bf16.mxu0 0
        %1755 = vmatpush2.bf16.msra.mxu0 %v1664
        %1756 = vmatprep.subr.bf16.mxu0 0
        %1757 = vmatpush2.bf16.msra.mxu0 %v1663
        %1758 = vmatprep.subr.bf16.mxu0 0
        %1759 = vmatpush2.bf16.msra.mxu0 %v1662
        %1760 = vmatprep.subr.bf16.mxu0 0
        %1761 = vmatpush2.bf16.msra.mxu0 %v1661
        %1762 = vmatprep.subr.bf16.mxu0 0
        %1763 = vmatpush2.bf16.msra.mxu0 %v1660
        %1764 = vmatprep.mubr.bf16.mxu0 %v1443
        %1765 = vmatmul.mubr.bf16.gmra.mxu0 %v1442
        %v1766 = vpop.f32.mrf.mxu0
        %v1767 = vadd.f32 %v1360, %v1766
        %v1768 = vpop.f32.mrf.mxu0
        %v1769 = vpop.f32.mrf.mxu0
        %v1770 = vadd.f32 %v1360, %v1769
        %v1771 = vpop.f32.mrf.mxu0
        %1772 = vmatprep.mubr.bf16.mxu0 %v1448
        %1773 = vmatmul.mubr.bf16.gmra.mxu0 %v1447
        %v1774 = vpop.f32.mrf.mxu0
        %v1775 = vadd.f32 %v1360, %v1774
        %v1776 = vpop.f32.mrf.mxu0
        %v1777 = vpop.f32.mrf.mxu0
        %v1778 = vadd.f32 %v1360, %v1777
        %v1779 = vpop.f32.mrf.mxu0
        %1780 = vmatprep.mubr.bf16.mxu0 %v1453
        %1781 = vmatmul.mubr.bf16.gmra.mxu0 %v1452
        %v1782 = vpop.f32.mrf.mxu0
        %v1783 = vadd.f32 %v1360, %v1782
        %v1784 = vpop.f32.mrf.mxu0
        %v1785 = vpop.f32.mrf.mxu0
        %v1786 = vadd.f32 %v1360, %v1785
        %v1787 = vpop.f32.mrf.mxu0
        %1788 = vmatprep.mubr.bf16.mxu0 %v1458
        %1789 = vmatmul.mubr.bf16.gmra.mxu0 %v1457
        %v1790 = vpop.f32.mrf.mxu0
        %v1791 = vadd.f32 %v1360, %v1790
        %v1792 = vpop.f32.mrf.mxu0
        %v1793 = vpop.f32.mrf.mxu0
        %v1794 = vadd.f32 %v1360, %v1793
        %v1795 = vpop.f32.mrf.mxu0
        %1796 = vmatprep.mubr.bf16.mxu0 %v1463
        %1797 = vmatmul.mubr.bf16.gmra.mxu0 %v1462
        %v1798 = vpop.f32.mrf.mxu0
        %v1799 = vadd.f32 %v1360, %v1798
        %v1800 = vpop.f32.mrf.mxu0
        %v1801 = vpop.f32.mrf.mxu0
        %v1802 = vadd.f32 %v1360, %v1801
        %v1803 = vpop.f32.mrf.mxu0
        %1804 = vdwg.mxu0
        %1805 = vmatprep.subr.bf16.mxu0 0
        %1806 = vmatpush1.bf16.msra.mxu0 %v1675
        %1807 = vmatprep.subr.bf16.mxu0 0
        %1808 = vmatpush1.bf16.msra.mxu0 %v1674
        %1809 = vmatprep.subr.bf16.mxu0 0
        %1810 = vmatpush1.bf16.msra.mxu0 %v1673
        %1811 = vmatprep.subr.bf16.mxu0 0
        %1812 = vmatpush1.bf16.msra.mxu0 %v1672
        %1813 = vmatprep.subr.bf16.mxu0 0
        %1814 = vmatpush1.bf16.msra.mxu0 %v1671
        %1815 = vmatprep.subr.bf16.mxu0 0
        %1816 = vmatpush1.bf16.msra.mxu0 %v1670
        %1817 = vmatprep.subr.bf16.mxu0 0
        %1818 = vmatpush1.bf16.msra.mxu0 %v1669
        %1819 = vmatprep.subr.bf16.mxu0 0
        %1820 = vmatpush1.bf16.msra.mxu0 %v1668
        %1821 = vmatprep.subr.bf16.mxu0 0
        %1822 = vmatpush2.bf16.msra.mxu0 %v1683
        %1823 = vmatprep.subr.bf16.mxu0 0
        %1824 = vmatpush2.bf16.msra.mxu0 %v1682
        %1825 = vmatprep.subr.bf16.mxu0 0
        %1826 = vmatpush2.bf16.msra.mxu0 %v1681
        %1827 = vmatprep.subr.bf16.mxu0 0
        %1828 = vmatpush2.bf16.msra.mxu0 %v1680
        %1829 = vmatprep.subr.bf16.mxu0 0
        %1830 = vmatpush2.bf16.msra.mxu0 %v1679
        %1831 = vmatprep.subr.bf16.mxu0 0
        %1832 = vmatpush2.bf16.msra.mxu0 %v1678
        %1833 = vmatprep.subr.bf16.mxu0 0
        %1834 = vmatpush2.bf16.msra.mxu0 %v1677
        %1835 = vmatprep.subr.bf16.mxu0 0
        %1836 = vmatpush2.bf16.msra.mxu0 %v1676
        %1837 = vmatprep.mubr.bf16.mxu0 %v1445
        %1838 = vmatmul.mubr.bf16.gmra.mxu0 %v1444
        %v1839 = vpop.f32.mrf.mxu0
        %v1840 = vadd.f32 %v1767, %v1839
        %v1841 = vpop.f32.mrf.mxu0
        %v1842 = vpop.f32.mrf.mxu0
        %v1843 = vadd.f32 %v1770, %v1842
        %v1844 = vpop.f32.mrf.mxu0
        %1845 = vmatprep.mubr.bf16.mxu0 %v1450
        %1846 = vmatmul.mubr.bf16.gmra.mxu0 %v1449
        %v1847 = vpop.f32.mrf.mxu0
        %v1848 = vadd.f32 %v1775, %v1847
        %v1849 = vpop.f32.mrf.mxu0
        %v1850 = vpop.f32.mrf.mxu0
        %v1851 = vadd.f32 %v1778, %v1850
        %v1852 = vpop.f32.mrf.mxu0
        %1853 = vmatprep.mubr.bf16.mxu0 %v1455
        %1854 = vmatmul.mubr.bf16.gmra.mxu0 %v1454
        %v1855 = vpop.f32.mrf.mxu0
        %v1856 = vadd.f32 %v1783, %v1855
        %v1857 = vpop.f32.mrf.mxu0
        %v1858 = vpop.f32.mrf.mxu0
        %v1859 = vadd.f32 %v1786, %v1858
        %v1860 = vpop.f32.mrf.mxu0
        %1861 = vmatprep.mubr.bf16.mxu0 %v1460
        %1862 = vmatmul.mubr.bf16.gmra.mxu0 %v1459
        %v1863 = vpop.f32.mrf.mxu0
        %v1864 = vadd.f32 %v1791, %v1863
        %v1865 = vpop.f32.mrf.mxu0
        %v1866 = vpop.f32.mrf.mxu0
        %v1867 = vadd.f32 %v1794, %v1866
        %v1868 = vpop.f32.mrf.mxu0
        %1869 = vmatprep.mubr.bf16.mxu0 %v1465
        %1870 = vmatmul.mubr.bf16.gmra.mxu0 %v1464
        %v1871 = vpop.f32.mrf.mxu0
        %v1872 = vadd.f32 %v1799, %v1871
        %v1873 = vpop.f32.mrf.mxu0
        %v1874 = vpop.f32.mrf.mxu0
        %v1875 = vadd.f32 %v1802, %v1874
        %v1876 = vpop.f32.mrf.mxu0
        %1877 = vdwg.mxu0
        %1878 = vmatprep.subr.bf16.mxu0 0
        %1879 = vmatpush1.bf16.msra.mxu0 %v1691
        %1880 = vmatprep.subr.bf16.mxu0 0
        %1881 = vmatpush1.bf16.msra.mxu0 %v1690
        %1882 = vmatprep.subr.bf16.mxu0 0
        %1883 = vmatpush1.bf16.msra.mxu0 %v1689
        %1884 = vmatprep.subr.bf16.mxu0 0
        %1885 = vmatpush1.bf16.msra.mxu0 %v1688
        %1886 = vmatprep.subr.bf16.mxu0 0
        %1887 = vmatpush1.bf16.msra.mxu0 %v1687
        %1888 = vmatprep.subr.bf16.mxu0 0
        %1889 = vmatpush1.bf16.msra.mxu0 %v1686
        %1890 = vmatprep.subr.bf16.mxu0 0
        %1891 = vmatpush1.bf16.msra.mxu0 %v1685
        %1892 = vmatprep.subr.bf16.mxu0 0
        %1893 = vmatpush1.bf16.msra.mxu0 %v1684
        %1894 = vmatprep.subr.bf16.mxu0 0
        %1895 = vmatpush2.bf16.msra.mxu0 0
        %1896 = vmatprep.subr.bf16.mxu0 0
        %1897 = vmatpush2.bf16.msra.mxu0 0
        %1898 = vmatprep.subr.bf16.mxu0 0
        %1899 = vmatpush2.bf16.msra.mxu0 0
        %1900 = vmatprep.subr.bf16.mxu0 0
        %1901 = vmatpush2.bf16.msra.mxu0 0
        %1902 = vmatprep.subr.bf16.mxu0 0
        %1903 = vmatpush2.bf16.msra.mxu0 0
        %1904 = vmatprep.subr.bf16.mxu0 0
        %1905 = vmatpush2.bf16.msra.mxu0 0
        %1906 = vmatprep.subr.bf16.mxu0 0
        %1907 = vmatpush2.bf16.msra.mxu0 0
        %1908 = vmatprep.subr.bf16.mxu0 0
        %1909 = vmatpush2.bf16.msra.mxu0 0
        %1910 = vmatprep.mubr.bf16.mxu0 0
        %1911 = vmatmul.mubr.bf16.gmra.mxu0 %v1446
        %v1912 = vpop.f32.mrf.mxu0
        %v1913 = vadd.f32 %v1840, %v1912
        %v1914 = vpop.f32.mrf.mxu0
        %v1915 = vpop.f32.mrf.mxu0
        %v1916 = vadd.f32 %v1843, %v1915
        %v1917 = vpop.f32.mrf.mxu0
        %1918 = vmatprep.mubr.bf16.mxu0 0
        %1919 = vmatmul.mubr.bf16.gmra.mxu0 %v1451
        %v1920 = vpop.f32.mrf.mxu0
        %v1921 = vadd.f32 %v1848, %v1920
        %v1922 = vpop.f32.mrf.mxu0
        %v1923 = vpop.f32.mrf.mxu0
        %v1924 = vadd.f32 %v1851, %v1923
        %v1925 = vpop.f32.mrf.mxu0
        %1926 = vmatprep.mubr.bf16.mxu0 0
        %1927 = vmatmul.mubr.bf16.gmra.mxu0 %v1456
        %v1928 = vpop.f32.mrf.mxu0
        %v1929 = vadd.f32 %v1856, %v1928
        %v1930 = vpop.f32.mrf.mxu0
        %v1931 = vpop.f32.mrf.mxu0
        %v1932 = vadd.f32 %v1859, %v1931
        %v1933 = vpop.f32.mrf.mxu0
        %1934 = vmatprep.mubr.bf16.mxu0 0
        %1935 = vmatmul.mubr.bf16.gmra.mxu0 %v1461
        %v1936 = vpop.f32.mrf.mxu0
        %v1937 = vadd.f32 %v1864, %v1936
        %v1938 = vpop.f32.mrf.mxu0
        %v1939 = vpop.f32.mrf.mxu0
        %v1940 = vadd.f32 %v1867, %v1939
        %v1941 = vpop.f32.mrf.mxu0
        %1942 = vmatprep.mubr.bf16.mxu0 0
        %1943 = vmatmul.mubr.bf16.gmra.mxu0 %v1466
        %v1944 = vpop.f32.mrf.mxu0
        %v1945 = vadd.f32 %v1872, %v1944
        %v1946 = vpop.f32.mrf.mxu0
        %v1947 = vpop.f32.mrf.mxu0
        %v1948 = vadd.f32 %v1875, %v1947
        %v1949 = vpop.f32.mrf.mxu0
        %1950 = vdwg.mxu0
        %v1951 = vtanh.pop %v1913
        %v1952 = vtanh.pop %v1916
        %v1953 = vtanh.pop %v1921
        %v1954 = vtanh.pop %v1924
        %v1955 = vtanh.pop %v1929
        %v1956 = vtanh.pop %v1932
        %v1957 = vtanh.pop %v1937
        %v1958 = vtanh.pop %v1940
        %v1959 = vtanh.pop %v1945
        %v1960 = vtanh.pop %v1948
        %v1961 = vpack.c.bf16 %v1952, %v1951
        %v1962 = vpack.c.bf16 %v1954, %v1953
        %v1963 = vpack.c.bf16 %v1956, %v1955
        %v1964 = vpack.c.bf16 %v1958, %v1957
        %v1965 = vpack.c.bf16 %v1960, %v1959
        %v1971 = vunpack.c.l.b16 %v1961
        %v1972 = vunpack.c.h.b16 %v1961
        %v1973 = vunpack.c.l.b16 %v1962
        %v1974 = vunpack.c.h.b16 %v1962
        %v1975 = vunpack.c.l.b16 %v1963
        %v1976 = vunpack.c.h.b16 %v1963
        %v1977 = vunpack.c.l.b16 %v1964
        %v1978 = vunpack.c.h.b16 %v1964
        %v1979 = vunpack.c.l.b16 %v1965
        %v1980 = vunpack.c.h.b16 %v1965
        %v1981 = vpack.c.b16 %v1971, %v1971
        %v1982 = vpack.c.b16 %v1972, %v1972
        %v1983 = vpack.c.b16 %v1973, %v1973
        %v1984 = vpack.c.b16 %v1974, %v1974
        %v1985 = vpack.c.b16 %v1975, %v1975
        %v1986 = vpack.c.b16 %v1976, %v1976
        %v1987 = vpack.c.b16 %v1977, %v1977
        %v1988 = vpack.c.b16 %v1978, %v1978
        %v1989 = vpack.c.b16 %v1979, %v1979
        %v1990 = vpack.c.b16 %v1980, %v1980
        %v1991 = vrot.slane %v1981, 7
        %v1992 = vrot.slane %v1991, 4
        %v1993 = vrot.slane %v1982, 7
        %v1994 = vsel %vm741, %v1992, %v1993
        %v1995 = vrot.slane %v1993, 4
        %v1996 = vrot.slane %v1983, 7
        %v1997 = vsel %vm741, %v1995, %v1996
        %v1998 = vrot.slane %v1996, 4
        %v1999 = vrot.slane %v1984, 7
        %v2000 = vsel %vm741, %v1998, %v1999
        %v2001 = vrot.slane %v1999, 4
        %v2002 = vrot.slane %v1985, 7
        %v2003 = vsel %vm741, %v2001, %v2002
        %v2004 = vrot.slane %v2002, 4
        %v2005 = vrot.slane %v1986, 7
        %v2006 = vsel %vm741, %v2004, %v2005
        %v2007 = vrot.slane %v2005, 4
        %v2008 = vrot.slane %v1987, 7
        %v2009 = vsel %vm741, %v2007, %v2008
        %v2010 = vrot.slane %v2008, 4
        %v2011 = vrot.slane %v1988, 7
        %v2012 = vsel %vm741, %v2010, %v2011
        %v2013 = vrot.slane %v2011, 4
        %v2014 = vrot.slane %v1989, 7
        %v2015 = vsel %vm741, %v2013, %v2014
        %v2016 = vrot.slane %v2014, 4
        %v2017 = vrot.slane %v1990, 7
        %v2018 = vsel %vm741, %v2016, %v2017
        %v2019 = vrot.slane %v2017, 4
        %2031 = vst [vmem:[#allocation4] sm:$0xe] %v1991
        %2032 = vst [vmem:[#allocation4 + $0x4] sm:$0xf] %v1994
        %2033 = vst [vmem:[#allocation4 + $0x8] sm:$0xf] %v1997
        %2034 = vst [vmem:[#allocation4 + $0xc] sm:$0xf] %v2000
        %2035 = vst [vmem:[#allocation4 + $0x10] sm:$0xf] %v2003
        %2036 = vst [vmem:[#allocation4 + $0x14] sm:$0xf] %v2006
        %2037 = vst [vmem:[#allocation4 + $0x18] sm:$0xf] %v2009
        %2038 = vst [vmem:[#allocation4 + $0x1c] sm:$0xf] %v2012
        %2039 = vst [vmem:[#allocation4 + $0x20] sm:$0xf] %v2015
        %2040 = vst [vmem:[#allocation4 + $0x24] sm:$0xf] %v2018
        %2041 = vst [vmem:[#allocation4 + $0x28] sm:$0x1] %v2019
        %v2042 = vld [vmem:[#allocation4] sm:$0xf]
        %v2043 = vld [vmem:[#allocation4 + $0x4] sm:$0xf]
        %v2044 = vld [vmem:[#allocation4 + $0x8] sm:$0xf]
        %v2045 = vld [vmem:[#allocation4 + $0xc] sm:$0xf]
        %v2046 = vld [vmem:[#allocation4 + $0x10] sm:$0xf]
        %v2047 = vld [vmem:[#allocation4 + $0x14] sm:$0xf]
        %v2048 = vld [vmem:[#allocation4 + $0x18] sm:$0xf]
        %v2049 = vld [vmem:[#allocation4 + $0x1c] sm:$0xf]
        %v2050 = vld [vmem:[#allocation4 + $0x20] sm:$0xf]
        %v2051 = vld [vmem:[#allocation4 + $0x24] sm:$0xf]
        %2052 = vst [vmem:[#allocation5] sm:$0xf] %v2042
        %2053 = vst [vmem:[#allocation5 + $0x14] sm:$0xf] %v2043
        %2054 = vst [vmem:[#allocation5 + $0x28] sm:$0xf] %v2044
        %2055 = vst [vmem:[#allocation5 + $0x3c] sm:$0xf] %v2045
        %2056 = vst [vmem:[#allocation5 + $0x50] sm:$0xf] %v2046
        %2057 = vst [vmem:[#allocation5 + $0x64] sm:$0xf] %v2047
        %2058 = vst [vmem:[#allocation5 + $0x78] sm:$0xf] %v2048
        %2059 = vst [vmem:[#allocation5 + $0x8c] sm:$0xf] %v2049
        %2060 = vst [vmem:[#allocation5 + $0xa0] sm:$0xf] %v2050
        %2061 = vst [vmem:[#allocation5 + $0xb4] sm:$0xf] %v2051
        %v2062 = vld [vmem:[#allocation4] sm:$0xf]
        %v2063 = vld [vmem:[#allocation4 + $0x4] sm:$0xf]
        %v2064 = vld [vmem:[#allocation4 + $0x8] sm:$0xf]
        %v2065 = vld [vmem:[#allocation4 + $0xc] sm:$0xf]
        %v2066 = vld [vmem:[#allocation4 + $0x10] sm:$0xf]
        %v2067 = vld [vmem:[#allocation4 + $0x14] sm:$0xf]
        %v2068 = vld [vmem:[#allocation4 + $0x18] sm:$0xf]
        %v2069 = vld [vmem:[#allocation4 + $0x1c] sm:$0xf]
        %v2070 = vld [vmem:[#allocation4 + $0x20] sm:$0xf]
        %v2071 = vld [vmem:[#allocation4 + $0x24] sm:$0xf]
        %v2072 = vld [vmem:[#allocation4 + $0x28] sm:$0x1]
        %v2074 = vshrl.u32 %v2062, 16
        %v2076 = vrot.slane %v2074, 4
        %v2077 = vshll.u32 %v2062, 16
        %v2079 = vrot.slane %v2077, 5
        %v2080 = vor.u32 %v2076, %v2079
        %v2081 = vrot.slane %v2080, 4
        %v2083 = vshll.u32 %v2063, 16
        %v2085 = vrot.slane %v2083, 5
        %v2086 = vsel %vm826, %v2081, %v2085
        %v2087 = vshrl.u32 %v2063, 16
        %v2089 = vrot.slane %v2087, 4
        %v2090 = vor.u32 %v2089, %v2085
        %v2091 = vrot.slane %v2090, 4
        %v2093 = vshll.u32 %v2064, 16
        %v2095 = vrot.slane %v2093, 5
        %v2096 = vsel %vm826, %v2091, %v2095
        %v2097 = vshrl.u32 %v2064, 16
        %v2099 = vrot.slane %v2097, 4
        %v2100 = vor.u32 %v2099, %v2095
        %v2101 = vrot.slane %v2100, 4
        %v2103 = vshll.u32 %v2065, 16
        %v2105 = vrot.slane %v2103, 5
        %v2106 = vsel %vm826, %v2101, %v2105
        %v2107 = vshrl.u32 %v2065, 16
        %v2109 = vrot.slane %v2107, 4
        %v2110 = vor.u32 %v2109, %v2105
        %v2111 = vrot.slane %v2110, 4
        %v2113 = vshll.u32 %v2066, 16
        %v2115 = vrot.slane %v2113, 5
        %v2116 = vsel %vm826, %v2111, %v2115
        %v2117 = vshrl.u32 %v2066, 16
        %v2119 = vrot.slane %v2117, 4
        %v2120 = vor.u32 %v2119, %v2115
        %v2121 = vrot.slane %v2120, 4
        %v2123 = vshll.u32 %v2067, 16
        %v2125 = vrot.slane %v2123, 5
        %v2126 = vsel %vm826, %v2121, %v2125
        %v2127 = vshrl.u32 %v2067, 16
        %v2129 = vrot.slane %v2127, 4
        %v2130 = vor.u32 %v2129, %v2125
        %v2131 = vrot.slane %v2130, 4
        %v2133 = vshll.u32 %v2068, 16
        %v2135 = vrot.slane %v2133, 5
        %v2136 = vsel %vm826, %v2131, %v2135
        %v2137 = vshrl.u32 %v2068, 16
        %v2139 = vrot.slane %v2137, 4
        %v2140 = vor.u32 %v2139, %v2135
        %v2141 = vrot.slane %v2140, 4
        %v2143 = vshll.u32 %v2069, 16
        %v2145 = vrot.slane %v2143, 5
        %v2146 = vsel %vm826, %v2141, %v2145
        %v2147 = vshrl.u32 %v2069, 16
        %v2149 = vrot.slane %v2147, 4
        %v2150 = vor.u32 %v2149, %v2145
        %v2151 = vrot.slane %v2150, 4
        %v2153 = vshll.u32 %v2070, 16
        %v2155 = vrot.slane %v2153, 5
        %v2156 = vsel %vm826, %v2151, %v2155
        %v2157 = vshrl.u32 %v2070, 16
        %v2159 = vrot.slane %v2157, 4
        %v2160 = vor.u32 %v2159, %v2155
        %v2161 = vrot.slane %v2160, 4
        %v2163 = vshll.u32 %v2071, 16
        %v2165 = vrot.slane %v2163, 5
        %v2166 = vsel %vm826, %v2161, %v2165
        %v2167 = vshrl.u32 %v2071, 16
        %v2169 = vrot.slane %v2167, 4
        %v2170 = vor.u32 %v2169, %v2165
        %v2171 = vrot.slane %v2170, 4
        %v2173 = vshll.u32 %v2072, 16
        %v2175 = vrot.slane %v2173, 5
        %v2176 = vsel %vm826, %v2171, %v2175
        %2187 = vst [vmem:[#allocation5 + $0x4] sm:$0xf] %v2086
        %2188 = vst [vmem:[#allocation5 + $0x18] sm:$0xf] %v2096
        %2189 = vst [vmem:[#allocation5 + $0x2c] sm:$0xf] %v2106
        %2190 = vst [vmem:[#allocation5 + $0x40] sm:$0xf] %v2116
        %2191 = vst [vmem:[#allocation5 + $0x54] sm:$0xf] %v2126
        %2192 = vst [vmem:[#allocation5 + $0x68] sm:$0xf] %v2136
        %2193 = vst [vmem:[#allocation5 + $0x7c] sm:$0xf] %v2146
        %2194 = vst [vmem:[#allocation5 + $0x90] sm:$0xf] %v2156
        %2195 = vst [vmem:[#allocation5 + $0xa4] sm:$0xf] %v2166
        %2196 = vst [vmem:[#allocation5 + $0xb8] sm:$0xf] %v2176
        %v2197 = vld [vmem:[#allocation4] sm:$0xe]
        %v2198 = vld [vmem:[#allocation4 + $0x4] sm:$0xf]
        %v2199 = vld [vmem:[#allocation4 + $0x8] sm:$0xf]
        %v2200 = vld [vmem:[#allocation4 + $0xc] sm:$0xf]
        %v2201 = vld [vmem:[#allocation4 + $0x10] sm:$0xf]
        %v2202 = vld [vmem:[#allocation4 + $0x14] sm:$0xf]
        %v2203 = vld [vmem:[#allocation4 + $0x18] sm:$0xf]
        %v2204 = vld [vmem:[#allocation4 + $0x1c] sm:$0xf]
        %v2205 = vld [vmem:[#allocation4 + $0x20] sm:$0xf]
        %v2206 = vld [vmem:[#allocation4 + $0x24] sm:$0xf]
        %v2207 = vld [vmem:[#allocation4 + $0x28] sm:$0x1]
        %v2219 = vrot.slane %v2197, 5
        %v2220 = vrot.slane %v2219, 4
        %v2221 = vrot.slane %v2198, 5
        %v2222 = vsel %vm975, %v2220, %v2221
        %v2223 = vrot.slane %v2221, 4
        %v2224 = vrot.slane %v2199, 5
        %v2225 = vsel %vm975, %v2223, %v2224
        %v2226 = vrot.slane %v2224, 4
        %v2227 = vrot.slane %v2200, 5
        %v2228 = vsel %vm975, %v2226, %v2227
        %v2229 = vrot.slane %v2227, 4
        %v2230 = vrot.slane %v2201, 5
        %v2231 = vsel %vm975, %v2229, %v2230
        %v2232 = vrot.slane %v2230, 4
        %v2233 = vrot.slane %v2202, 5
        %v2234 = vsel %vm975, %v2232, %v2233
        %v2235 = vrot.slane %v2233, 4
        %v2236 = vrot.slane %v2203, 5
        %v2237 = vsel %vm975, %v2235, %v2236
        %v2238 = vrot.slane %v2236, 4
        %v2239 = vrot.slane %v2204, 5
        %v2240 = vsel %vm975, %v2238, %v2239
        %v2241 = vrot.slane %v2239, 4
        %v2242 = vrot.slane %v2205, 5
        %v2243 = vsel %vm975, %v2241, %v2242
        %v2244 = vrot.slane %v2242, 4
        %v2245 = vrot.slane %v2206, 5
        %v2246 = vsel %vm975, %v2244, %v2245
        %v2247 = vrot.slane %v2245, 4
        %v2248 = vrot.slane %v2207, 5
        %v2249 = vsel %vm975, %v2247, %v2248
        %2260 = vst [vmem:[#allocation5 + $0x8] sm:$0xf] %v2222
        %2261 = vst [vmem:[#allocation5 + $0x1c] sm:$0xf] %v2225
        %2262 = vst [vmem:[#allocation5 + $0x30] sm:$0xf] %v2228
        %2263 = vst [vmem:[#allocation5 + $0x44] sm:$0xf] %v2231
        %2264 = vst [vmem:[#allocation5 + $0x58] sm:$0xf] %v2234
        %2265 = vst [vmem:[#allocation5 + $0x6c] sm:$0xf] %v2237
        %2266 = vst [vmem:[#allocation5 + $0x80] sm:$0xf] %v2240
        %2267 = vst [vmem:[#allocation5 + $0x94] sm:$0xf] %v2243
        %2268 = vst [vmem:[#allocation5 + $0xa8] sm:$0xf] %v2246
        %2269 = vst [vmem:[#allocation5 + $0xbc] sm:$0xf] %v2249
        %v2270 = vld [vmem:[#allocation4] sm:$0xe]
        %v2271 = vld [vmem:[#allocation4 + $0x4] sm:$0xf]
        %v2272 = vld [vmem:[#allocation4 + $0x8] sm:$0xf]
        %v2273 = vld [vmem:[#allocation4 + $0xc] sm:$0xf]
        %v2274 = vld [vmem:[#allocation4 + $0x10] sm:$0xf]
        %v2275 = vld [vmem:[#allocation4 + $0x14] sm:$0xf]
        %v2276 = vld [vmem:[#allocation4 + $0x18] sm:$0xf]
        %v2277 = vld [vmem:[#allocation4 + $0x1c] sm:$0xf]
        %v2278 = vld [vmem:[#allocation4 + $0x20] sm:$0xf]
        %v2279 = vld [vmem:[#allocation4 + $0x24] sm:$0xf]
        %v2280 = vld [vmem:[#allocation4 + $0x28] sm:$0x3]
        %v2282 = vshrl.u32 %v2270, 16
        %v2284 = vrot.slane %v2282, 5
        %v2285 = vshll.u32 %v2270, 16
        %v2287 = vrot.slane %v2285, 6
        %v2288 = vor.u32 %v2284, %v2287
        %v2289 = vrot.slane %v2288, 4
        %v2291 = vshrl.u32 %v2271, 16
        %v2293 = vrot.slane %v2291, 5
        %v2294 = vshll.u32 %v2271, 16
        %v2296 = vrot.slane %v2294, 6
        %v2297 = vor.u32 %v2293, %v2296
        %v2298 = vsel %vm1040, %v2289, %v2297
        %v2299 = vrot.slane %v2297, 4
        %v2301 = vshrl.u32 %v2272, 16
        %v2303 = vrot.slane %v2301, 5
        %v2304 = vshll.u32 %v2272, 16
        %v2306 = vrot.slane %v2304, 6
        %v2307 = vor.u32 %v2303, %v2306
        %v2308 = vsel %vm1040, %v2299, %v2307
        %v2309 = vrot.slane %v2307, 4
        %v2311 = vshrl.u32 %v2273, 16
        %v2313 = vrot.slane %v2311, 5
        %v2314 = vshll.u32 %v2273, 16
        %v2316 = vrot.slane %v2314, 6
        %v2317 = vor.u32 %v2313, %v2316
        %v2318 = vsel %vm1040, %v2309, %v2317
        %v2319 = vrot.slane %v2317, 4
        %v2321 = vshrl.u32 %v2274, 16
        %v2323 = vrot.slane %v2321, 5
        %v2324 = vshll.u32 %v2274, 16
        %v2326 = vrot.slane %v2324, 6
        %v2327 = vor.u32 %v2323, %v2326
        %v2328 = vsel %vm1040, %v2319, %v2327
        %v2329 = vrot.slane %v2327, 4
        %v2331 = vshrl.u32 %v2275, 16
        %v2333 = vrot.slane %v2331, 5
        %v2334 = vshll.u32 %v2275, 16
        %v2336 = vrot.slane %v2334, 6
        %v2337 = vor.u32 %v2333, %v2336
        %v2338 = vsel %vm1040, %v2329, %v2337
        %v2339 = vrot.slane %v2337, 4
        %v2341 = vshrl.u32 %v2276, 16
        %v2343 = vrot.slane %v2341, 5
        %v2344 = vshll.u32 %v2276, 16
        %v2346 = vrot.slane %v2344, 6
        %v2347 = vor.u32 %v2343, %v2346
        %v2348 = vsel %vm1040, %v2339, %v2347
        %v2349 = vrot.slane %v2347, 4
        %v2351 = vshrl.u32 %v2277, 16
        %v2353 = vrot.slane %v2351, 5
        %v2354 = vshll.u32 %v2277, 16
        %v2356 = vrot.slane %v2354, 6
        %v2357 = vor.u32 %v2353, %v2356
        %v2358 = vsel %vm1040, %v2349, %v2357
        %v2359 = vrot.slane %v2357, 4
        %v2361 = vshrl.u32 %v2278, 16
        %v2363 = vrot.slane %v2361, 5
        %v2364 = vshll.u32 %v2278, 16
        %v2366 = vrot.slane %v2364, 6
        %v2367 = vor.u32 %v2363, %v2366
        %v2368 = vsel %vm1040, %v2359, %v2367
        %v2369 = vrot.slane %v2367, 4
        %v2371 = vshrl.u32 %v2279, 16
        %v2373 = vrot.slane %v2371, 5
        %v2374 = vshll.u32 %v2279, 16
        %v2376 = vrot.slane %v2374, 6
        %v2377 = vor.u32 %v2373, %v2376
        %v2378 = vsel %vm1040, %v2369, %v2377
        %v2379 = vrot.slane %v2377, 4
        %v2381 = vshrl.u32 %v2280, 16
        %v2383 = vrot.slane %v2381, 5
        %v2384 = vshll.u32 %v2280, 16
        %v2386 = vrot.slane %v2384, 6
        %v2387 = vor.u32 %v2383, %v2386
        %v2388 = vsel %vm1040, %v2379, %v2387
        %2399 = vst [vmem:[#allocation5 + $0xc] sm:$0xf] %v2298
        %2400 = vst [vmem:[#allocation5 + $0x20] sm:$0xf] %v2308
        %2401 = vst [vmem:[#allocation5 + $0x34] sm:$0xf] %v2318
        %2402 = vst [vmem:[#allocation5 + $0x48] sm:$0xf] %v2328
        %2403 = vst [vmem:[#allocation5 + $0x5c] sm:$0xf] %v2338
        %2404 = vst [vmem:[#allocation5 + $0x70] sm:$0xf] %v2348
        %2405 = vst [vmem:[#allocation5 + $0x84] sm:$0xf] %v2358
        %2406 = vst [vmem:[#allocation5 + $0x98] sm:$0xf] %v2368
        %2407 = vst [vmem:[#allocation5 + $0xac] sm:$0xf] %v2378
        %2408 = vst [vmem:[#allocation5 + $0xc0] sm:$0xf] %v2388
        %v2409 = vld [vmem:[#allocation4] sm:$0xc]
        %v2410 = vld [vmem:[#allocation4 + $0x4] sm:$0xf]
        %v2411 = vld [vmem:[#allocation4 + $0x8] sm:$0xf]
        %v2412 = vld [vmem:[#allocation4 + $0xc] sm:$0xf]
        %v2413 = vld [vmem:[#allocation4 + $0x10] sm:$0xf]
        %v2414 = vld [vmem:[#allocation4 + $0x14] sm:$0xf]
        %v2415 = vld [vmem:[#allocation4 + $0x18] sm:$0xf]
        %v2416 = vld [vmem:[#allocation4 + $0x1c] sm:$0xf]
        %v2417 = vld [vmem:[#allocation4 + $0x20] sm:$0xf]
        %v2418 = vld [vmem:[#allocation4 + $0x24] sm:$0xf]
        %v2419 = vld [vmem:[#allocation4 + $0x28] sm:$0x3]
        %v2431 = vrot.slane %v2409, 6
        %v2432 = vrot.slane %v2431, 4
        %v2433 = vrot.slane %v2410, 6
        %v2434 = vsel %vm1193, %v2432, %v2433
        %v2435 = vrot.slane %v2433, 4
        %v2436 = vrot.slane %v2411, 6
        %v2437 = vsel %vm1193, %v2435, %v2436
        %v2438 = vrot.slane %v2436, 4
        %v2439 = vrot.slane %v2412, 6
        %v2440 = vsel %vm1193, %v2438, %v2439
        %v2441 = vrot.slane %v2439, 4
        %v2442 = vrot.slane %v2413, 6
        %v2443 = vsel %vm1193, %v2441, %v2442
        %v2444 = vrot.slane %v2442, 4
        %v2445 = vrot.slane %v2414, 6
        %v2446 = vsel %vm1193, %v2444, %v2445
        %v2447 = vrot.slane %v2445, 4
        %v2448 = vrot.slane %v2415, 6
        %v2449 = vsel %vm1193, %v2447, %v2448
        %v2450 = vrot.slane %v2448, 4
        %v2451 = vrot.slane %v2416, 6
        %v2452 = vsel %vm1193, %v2450, %v2451
        %v2453 = vrot.slane %v2451, 4
        %v2454 = vrot.slane %v2417, 6
        %v2455 = vsel %vm1193, %v2453, %v2454
        %v2456 = vrot.slane %v2454, 4
        %v2457 = vrot.slane %v2418, 6
        %v2458 = vsel %vm1193, %v2456, %v2457
        %v2459 = vrot.slane %v2457, 4
        %v2460 = vrot.slane %v2419, 6
        %v2461 = vsel %vm1193, %v2459, %v2460
        %2472 = vst [vmem:[#allocation5 + $0x10] sm:$0xf] %v2434
        %2473 = vst [vmem:[#allocation5 + $0x24] sm:$0xf] %v2437
        %2474 = vst [vmem:[#allocation5 + $0x38] sm:$0xf] %v2440
        %2475 = vst [vmem:[#allocation5 + $0x4c] sm:$0xf] %v2443
        %2476 = vst [vmem:[#allocation5 + $0x60] sm:$0xf] %v2446
        %2477 = vst [vmem:[#allocation5 + $0x74] sm:$0xf] %v2449
        %2478 = vst [vmem:[#allocation5 + $0x88] sm:$0xf] %v2452
        %2479 = vst [vmem:[#allocation5 + $0x9c] sm:$0xf] %v2455
        %2480 = vst [vmem:[#allocation5 + $0xb0] sm:$0xf] %v2458
        %2481 = vst [vmem:[#allocation5 + $0xc4] sm:$0xf] %v2461
        %v2482 = vld [vmem:[#allocation5] sm:$0xff]
        %v2483 = vld [vmem:[#allocation5 + $0x8] sm:$0xff]
        %v2484 = vld [vmem:[#allocation5 + $0x10] sm:$0xf]
        %v2485 = vld [vmem:[#allocation5 + $0x14] sm:$0xff]
        %v2486 = vld [vmem:[#allocation5 + $0x1c] sm:$0xff]
        %v2487 = vld [vmem:[#allocation5 + $0x24] sm:$0xf]
        %v2488 = vld [vmem:[#allocation5 + $0x28] sm:$0xff]
        %v2489 = vld [vmem:[#allocation5 + $0x30] sm:$0xff]
        %v2490 = vld [vmem:[#allocation5 + $0x38] sm:$0xf]
        %v2491 = vld [vmem:[#allocation5 + $0x3c] sm:$0xff]
        %v2492 = vld [vmem:[#allocation5 + $0x44] sm:$0xff]
        %v2493 = vld [vmem:[#allocation5 + $0x4c] sm:$0xf]
        %v2494 = vld [vmem:[#allocation5 + $0x50] sm:$0xff]
        %v2495 = vld [vmem:[#allocation5 + $0x58] sm:$0xff]
        %v2496 = vld [vmem:[#allocation5 + $0x60] sm:$0xf]
        %v2497 = vld [vmem:[#allocation5 + $0x64] sm:$0xff]
        %v2498 = vld [vmem:[#allocation5 + $0x6c] sm:$0xff]
        %v2499 = vld [vmem:[#allocation5 + $0x74] sm:$0xf]
        %v2500 = vld [vmem:[#allocation5 + $0x78] sm:$0xff]
        %v2501 = vld [vmem:[#allocation5 + $0x80] sm:$0xff]
        %v2502 = vld [vmem:[#allocation5 + $0x88] sm:$0xf]
        %v2503 = vld [vmem:[#allocation5 + $0x8c] sm:$0xff]
        %v2504 = vld [vmem:[#allocation5 + $0x94] sm:$0xff]
        %v2505 = vld [vmem:[#allocation5 + $0x9c] sm:$0xf]
        %v2506 = vld [vmem:[#allocation5 + $0xa0] sm:$0xff]
        %v2507 = vld [vmem:[#allocation5 + $0xa8] sm:$0xff]
        %v2508 = vld [vmem:[#allocation5 + $0xb0] sm:$0xf]
        %v2509 = vld [vmem:[#allocation5 + $0xb4] sm:$0xff]
        %v2510 = vld [vmem:[#allocation5 + $0xbc] sm:$0xff]
        %v2511 = vld [vmem:[#allocation5 + $0xc4] sm:$0xf]
        %v2512 = vld [vmem:[#allocation10] sm:$0xf]
        %v2513 = vld [vmem:[#allocation10 + $0x4] sm:$0xf]
        %v2514 = vld [vmem:[#allocation10 + $0x8] sm:$0xf]
        %v2515 = vld [vmem:[#allocation10 + $0xc] sm:$0xf]
        %v2516 = vld [vmem:[#allocation10 + $0x10] sm:$0xf]
        %v2517 = vld [vmem:[#allocation10 + $0x14] sm:$0xf]
        %v2518 = vld [vmem:[#allocation10 + $0x18] sm:$0xf]
        %v2519 = vld [vmem:[#allocation10 + $0x1c] sm:$0xf]
        %v2520 = vld [vmem:[#allocation10 + $0x20] sm:$0xf]
        %v2521 = vld [vmem:[#allocation10 + $0x24] sm:$0xf]
        %v2522 = vld [vmem:[#allocation10 + $0x28] sm:$0xf]
        %v2523 = vld [vmem:[#allocation10 + $0x2c] sm:$0xf]
        %v2524 = vld [vmem:[#allocation10 + $0x30] sm:$0xf]
        %v2525 = vld [vmem:[#allocation10 + $0x34] sm:$0xf]
        %v2526 = vld [vmem:[#allocation10 + $0x38] sm:$0xf]
        %v2527 = vld [vmem:[#allocation10 + $0x3c] sm:$0xf]
        %v2528 = vld [vmem:[#allocation10 + $0x40] sm:$0xf]
        %v2529 = vld [vmem:[#allocation10 + $0x44] sm:$0xf]
        %v2530 = vld [vmem:[#allocation10 + $0x48] sm:$0xf]
        %v2531 = vld [vmem:[#allocation10 + $0x4c] sm:$0xf]
        %v2532 = vld [vmem:[#allocation10 + $0x50] sm:$0xf]
        %v2533 = vld [vmem:[#allocation10 + $0x54] sm:$0xf]
        %v2534 = vld [vmem:[#allocation10 + $0x58] sm:$0xf]
        %v2535 = vld [vmem:[#allocation10 + $0x5c] sm:$0xf]
        %v2536 = vld [vmem:[#allocation10 + $0x60] sm:$0xf]
        %v2537 = vld [vmem:[#allocation10 + $0x64] sm:$0xf]
        %v2538 = vld [vmem:[#allocation10 + $0x68] sm:$0xf]
        %v2539 = vld [vmem:[#allocation10 + $0x6c] sm:$0xf]
        %v2540 = vld [vmem:[#allocation10 + $0x70] sm:$0xf]
        %v2541 = vld [vmem:[#allocation10 + $0x74] sm:$0xf]
        %v2542 = vld [vmem:[#allocation10 + $0x78] sm:$0xf]
        %v2543 = vld [vmem:[#allocation10 + $0x7c] sm:$0xf]
        %v2544 = vld [vmem:[#allocation10 + $0x80] sm:$0xf]
        %v2545 = vld [vmem:[#allocation10 + $0x84] sm:$0xf]
        %v2546 = vld [vmem:[#allocation10 + $0x88] sm:$0xf]
        %v2547 = vld [vmem:[#allocation10 + $0x8c] sm:$0xf]
        %v2548 = vld [vmem:[#allocation10 + $0x90] sm:$0xf]
        %v2549 = vld [vmem:[#allocation10 + $0x94] sm:$0xf]
        %v2550 = vld [vmem:[#allocation10 + $0x98] sm:$0xf]
        %v2551 = vld [vmem:[#allocation10 + $0x9c] sm:$0xf]
        %v2552 = vld [vmem:[#allocation10 + $0xa0] sm:$0xf]
        %v2553 = vld [vmem:[#allocation10 + $0xa4] sm:$0xf]
        %v2554 = vld [vmem:[#allocation10 + $0xa8] sm:$0xf]
        %v2555 = vld [vmem:[#allocation10 + $0xac] sm:$0xf]
        %v2556 = vld [vmem:[#allocation10 + $0xb0] sm:$0xf]
        %v2557 = vld [vmem:[#allocation10 + $0xb4] sm:$0xf]
        %v2558 = vld [vmem:[#allocation10 + $0xb8] sm:$0xf]
        %v2559 = vld [vmem:[#allocation10 + $0xbc] sm:$0xf]
        %v2560 = vld [vmem:[#allocation10 + $0xc0] sm:$0xf]
        %v2561 = vld [vmem:[#allocation10 + $0xc4] sm:$0xf]
        %v2562 = vld [vmem:[#allocation10 + $0xc8] sm:$0xf]
        %v2563 = vld [vmem:[#allocation10 + $0xcc] sm:$0xf]
        %v2564 = vld [vmem:[#allocation10 + $0xd0] sm:$0xf]
        %v2565 = vld [vmem:[#allocation10 + $0xd4] sm:$0xf]
        %v2566 = vld [vmem:[#allocation10 + $0xd8] sm:$0xf]
        %v2567 = vld [vmem:[#allocation10 + $0xdc] sm:$0xf]
        %v2568 = vld [vmem:[#allocation10 + $0xe0] sm:$0xf]
        %v2569 = vld [vmem:[#allocation10 + $0xe4] sm:$0xf]
        %v2570 = vld [vmem:[#allocation10 + $0xe8] sm:$0xf]
        %v2571 = vld [vmem:[#allocation10 + $0xec] sm:$0xf]
        %v2572 = vld [vmem:[#allocation10 + $0xf0] sm:$0xf]
        %v2573 = vld [vmem:[#allocation10 + $0xf4] sm:$0xf]
        %v2574 = vld [vmem:[#allocation10 + $0xf8] sm:$0xf]
        %v2575 = vld [vmem:[#allocation10 + $0xfc] sm:$0xf]
        %v2576 = vld [vmem:[#allocation10 + $0x100] sm:$0xf]
        %v2577 = vld [vmem:[#allocation10 + $0x104] sm:$0xf]
        %v2578 = vld [vmem:[#allocation10 + $0x108] sm:$0xf]
        %v2579 = vld [vmem:[#allocation10 + $0x10c] sm:$0xf]
        %v2580 = vld [vmem:[#allocation10 + $0x110] sm:$0xf]
        %v2581 = vld [vmem:[#allocation10 + $0x114] sm:$0xf]
        %v2582 = vld [vmem:[#allocation10 + $0x118] sm:$0xf]
        %v2583 = vld [vmem:[#allocation10 + $0x11c] sm:$0xf]
        %v2584 = vld [vmem:[#allocation10 + $0x120] sm:$0xf]
        %v2585 = vld [vmem:[#allocation10 + $0x124] sm:$0xf]
        %v2586 = vld [vmem:[#allocation10 + $0x128] sm:$0xf]
        %v2587 = vld [vmem:[#allocation10 + $0x12c] sm:$0xf]
        %v2588 = vld [vmem:[#allocation10 + $0x130] sm:$0xf]
        %v2589 = vld [vmem:[#allocation10 + $0x134] sm:$0xf]
        %v2590 = vld [vmem:[#allocation10 + $0x138] sm:$0xf]
        %v2591 = vld [vmem:[#allocation10 + $0x13c] sm:$0xf]
        %v2592 = vld [vmem:[%s6] sm:$0x1]
        %v2594 = vlaneseq
        %v2595 = vshrl.u32 %v2594, 7
        %v2596 = vsub.s32 0, %v2595
        %v2597 = vrot.slane %v2592, %v2596
        %v2629 = vunpack.c.l.b16 %v2482
        %v2630 = vunpack.c.h.b16 %v2482
        %v2631 = vunpack.c.l.b16 %v2483
        %v2632 = vunpack.c.h.b16 %v2483
        %v2633 = vunpack.c.l.b16 %v2484
        %v2634 = vunpack.c.l.b16 %v2485
        %v2635 = vunpack.c.h.b16 %v2485
        %v2636 = vunpack.c.l.b16 %v2486
        %v2637 = vunpack.c.h.b16 %v2486
        %v2638 = vunpack.c.l.b16 %v2487
        %v2639 = vunpack.c.l.b16 %v2488
        %v2640 = vunpack.c.h.b16 %v2488
        %v2641 = vunpack.c.l.b16 %v2489
        %v2642 = vunpack.c.h.b16 %v2489
        %v2643 = vunpack.c.l.b16 %v2490
        %v2644 = vunpack.c.l.b16 %v2491
        %v2645 = vunpack.c.h.b16 %v2491
        %v2646 = vunpack.c.l.b16 %v2492
        %v2647 = vunpack.c.h.b16 %v2492
        %v2648 = vunpack.c.l.b16 %v2493
        %v2649 = vunpack.c.l.b16 %v2494
        %v2650 = vunpack.c.h.b16 %v2494
        %v2651 = vunpack.c.l.b16 %v2495
        %v2652 = vunpack.c.h.b16 %v2495
        %v2653 = vunpack.c.l.b16 %v2496
        %v2654 = vunpack.c.l.b16 %v2497
        %v2655 = vunpack.c.h.b16 %v2497
        %v2656 = vunpack.c.l.b16 %v2498
        %v2657 = vunpack.c.h.b16 %v2498
        %v2658 = vunpack.c.l.b16 %v2499
        %v2659 = vunpack.c.l.b16 %v2500
        %v2660 = vunpack.c.h.b16 %v2500
        %v2661 = vunpack.c.l.b16 %v2501
        %v2662 = vunpack.c.h.b16 %v2501
        %v2663 = vunpack.c.l.b16 %v2502
        %v2664 = vunpack.c.l.b16 %v2503
        %v2665 = vunpack.c.h.b16 %v2503
        %v2666 = vunpack.c.l.b16 %v2504
        %v2667 = vunpack.c.h.b16 %v2504
        %v2668 = vunpack.c.l.b16 %v2505
        %v2669 = vunpack.c.l.b16 %v2506
        %v2670 = vunpack.c.h.b16 %v2506
        %v2671 = vunpack.c.l.b16 %v2507
        %v2672 = vunpack.c.h.b16 %v2507
        %v2673 = vunpack.c.l.b16 %v2508
        %v2674 = vunpack.c.l.b16 %v2509
        %v2675 = vunpack.c.h.b16 %v2509
        %v2676 = vunpack.c.l.b16 %v2510
        %v2677 = vunpack.c.h.b16 %v2510
        %v2678 = vunpack.c.l.b16 %v2511
        %v2679 = vpack.c.b16 %v2634, %v2629
        %v2680 = vpack.c.b16 %v2635, %v2630
        %v2681 = vpack.c.b16 %v2636, %v2631
        %v2682 = vpack.c.b16 %v2637, %v2632
        %v2683 = vpack.c.b16 %v2638, %v2633
        %v2684 = vpack.c.b16 %v2644, %v2639
        %v2685 = vpack.c.b16 %v2645, %v2640
        %v2686 = vpack.c.b16 %v2646, %v2641
        %v2687 = vpack.c.b16 %v2647, %v2642
        %v2688 = vpack.c.b16 %v2648, %v2643
        %v2689 = vpack.c.b16 %v2654, %v2649
        %v2690 = vpack.c.b16 %v2655, %v2650
        %v2691 = vpack.c.b16 %v2656, %v2651
        %v2692 = vpack.c.b16 %v2657, %v2652
        %v2693 = vpack.c.b16 %v2658, %v2653
        %v2694 = vpack.c.b16 %v2664, %v2659
        %v2695 = vpack.c.b16 %v2665, %v2660
        %v2696 = vpack.c.b16 %v2666, %v2661
        %v2697 = vpack.c.b16 %v2667, %v2662
        %v2698 = vpack.c.b16 %v2668, %v2663
        %v2699 = vpack.c.b16 %v2674, %v2669
        %v2700 = vpack.c.b16 %v2675, %v2670
        %v2701 = vpack.c.b16 %v2676, %v2671
        %v2702 = vpack.c.b16 %v2677, %v2672
        %v2703 = vpack.c.b16 %v2678, %v2673
        %v2809 = vunpack.c.l.b16 %v2512
        %v2810 = vunpack.c.l.b16 %v2513
        %v2811 = vunpack.c.l.b16 %v2514
        %v2812 = vunpack.c.l.b16 %v2515
        %v2813 = vunpack.c.l.b16 %v2516
        %v2814 = vunpack.c.l.b16 %v2517
        %v2815 = vunpack.c.l.b16 %v2518
        %v2816 = vunpack.c.l.b16 %v2519
        %v2817 = vunpack.c.l.b16 %v2520
        %v2818 = vunpack.c.l.b16 %v2521
        %v2819 = vunpack.c.l.b16 %v2522
        %v2820 = vunpack.c.l.b16 %v2523
        %v2821 = vunpack.c.l.b16 %v2524
        %v2822 = vunpack.c.l.b16 %v2525
        %v2823 = vunpack.c.l.b16 %v2526
        %v2824 = vunpack.c.l.b16 %v2527
        %v2825 = vunpack.c.l.b16 %v2528
        %v2826 = vunpack.c.l.b16 %v2529
        %v2827 = vunpack.c.l.b16 %v2530
        %v2828 = vunpack.c.l.b16 %v2531
        %v2829 = vunpack.c.l.b16 %v2532
        %v2830 = vunpack.c.l.b16 %v2533
        %v2831 = vunpack.c.l.b16 %v2534
        %v2832 = vunpack.c.l.b16 %v2535
        %v2833 = vunpack.c.l.b16 %v2536
        %v2834 = vunpack.c.l.b16 %v2537
        %v2835 = vunpack.c.l.b16 %v2538
        %v2836 = vunpack.c.l.b16 %v2539
        %v2837 = vunpack.c.l.b16 %v2540
        %v2838 = vunpack.c.l.b16 %v2541
        %v2839 = vunpack.c.l.b16 %v2542
        %v2840 = vunpack.c.l.b16 %v2543
        %v2841 = vunpack.c.l.b16 %v2544
        %v2842 = vunpack.c.l.b16 %v2545
        %v2843 = vunpack.c.l.b16 %v2546
        %v2844 = vunpack.c.l.b16 %v2547
        %v2845 = vunpack.c.l.b16 %v2548
        %v2846 = vunpack.c.l.b16 %v2549
        %v2847 = vunpack.c.l.b16 %v2550
        %v2848 = vunpack.c.l.b16 %v2551
        %v2849 = vunpack.c.l.b16 %v2552
        %v2850 = vunpack.c.l.b16 %v2553
        %v2851 = vunpack.c.l.b16 %v2554
        %v2852 = vunpack.c.l.b16 %v2555
        %v2853 = vunpack.c.l.b16 %v2556
        %v2854 = vunpack.c.l.b16 %v2557
        %v2855 = vunpack.c.l.b16 %v2558
        %v2856 = vunpack.c.l.b16 %v2559
        %v2857 = vunpack.c.l.b16 %v2560
        %v2858 = vunpack.c.l.b16 %v2561
        %v2859 = vunpack.c.l.b16 %v2562
        %v2860 = vunpack.c.l.b16 %v2563
        %v2861 = vunpack.c.l.b16 %v2564
        %v2862 = vunpack.c.l.b16 %v2565
        %v2863 = vunpack.c.l.b16 %v2566
        %v2864 = vunpack.c.l.b16 %v2567
        %v2865 = vunpack.c.l.b16 %v2568
        %v2866 = vunpack.c.l.b16 %v2569
        %v2867 = vunpack.c.l.b16 %v2570
        %v2868 = vunpack.c.l.b16 %v2571
        %v2869 = vunpack.c.l.b16 %v2572
        %v2870 = vunpack.c.l.b16 %v2573
        %v2871 = vunpack.c.l.b16 %v2574
        %v2872 = vunpack.c.l.b16 %v2575
        %v2873 = vunpack.c.l.b16 %v2576
        %v2874 = vunpack.c.l.b16 %v2577
        %v2875 = vunpack.c.l.b16 %v2578
        %v2876 = vunpack.c.l.b16 %v2579
        %v2877 = vunpack.c.l.b16 %v2580
        %v2878 = vunpack.c.l.b16 %v2581
        %v2879 = vunpack.c.l.b16 %v2582
        %v2880 = vunpack.c.l.b16 %v2583
        %v2881 = vunpack.c.l.b16 %v2584
        %v2882 = vunpack.c.l.b16 %v2585
        %v2883 = vunpack.c.l.b16 %v2586
        %v2884 = vunpack.c.l.b16 %v2587
        %v2885 = vunpack.c.l.b16 %v2588
        %v2886 = vunpack.c.l.b16 %v2589
        %v2887 = vunpack.c.l.b16 %v2590
        %v2888 = vunpack.c.l.b16 %v2591
        %v2889 = vpack.c.b16 %v2810, %v2809
        %v2890 = vpack.c.b16 %v2812, %v2811
        %v2891 = vpack.c.b16 %v2814, %v2813
        %v2892 = vpack.c.b16 %v2816, %v2815
        %v2893 = vpack.c.b16 %v2818, %v2817
        %v2894 = vpack.c.b16 %v2820, %v2819
        %v2895 = vpack.c.b16 %v2822, %v2821
        %v2896 = vpack.c.b16 %v2824, %v2823
        %v2897 = vpack.c.b16 %v2826, %v2825
        %v2898 = vpack.c.b16 %v2828, %v2827
        %v2899 = vpack.c.b16 %v2830, %v2829
        %v2900 = vpack.c.b16 %v2832, %v2831
        %v2901 = vpack.c.b16 %v2834, %v2833
        %v2902 = vpack.c.b16 %v2836, %v2835
        %v2903 = vpack.c.b16 %v2838, %v2837
        %v2904 = vpack.c.b16 %v2840, %v2839
        %v2905 = vpack.c.b16 %v2842, %v2841
        %v2906 = vpack.c.b16 %v2844, %v2843
        %v2907 = vpack.c.b16 %v2846, %v2845
        %v2908 = vpack.c.b16 %v2848, %v2847
        %v2909 = vpack.c.b16 %v2850, %v2849
        %v2910 = vpack.c.b16 %v2852, %v2851
        %v2911 = vpack.c.b16 %v2854, %v2853
        %v2912 = vpack.c.b16 %v2856, %v2855
        %v2913 = vpack.c.b16 %v2858, %v2857
        %v2914 = vpack.c.b16 %v2860, %v2859
        %v2915 = vpack.c.b16 %v2862, %v2861
        %v2916 = vpack.c.b16 %v2864, %v2863
        %v2917 = vpack.c.b16 %v2866, %v2865
        %v2918 = vpack.c.b16 %v2868, %v2867
        %v2919 = vpack.c.b16 %v2870, %v2869
        %v2920 = vpack.c.b16 %v2872, %v2871
        %v2921 = vpack.c.b16 %v2874, %v2873
        %v2922 = vpack.c.b16 %v2876, %v2875
        %v2923 = vpack.c.b16 %v2878, %v2877
        %v2924 = vpack.c.b16 %v2880, %v2879
        %v2925 = vpack.c.b16 %v2882, %v2881
        %v2926 = vpack.c.b16 %v2884, %v2883
        %v2927 = vpack.c.b16 %v2886, %v2885
        %v2928 = vpack.c.b16 %v2888, %v2887
        %2969 = vmatprep.subr.bf16.mxu0 0
        %2970 = vmatpush1.bf16.msra.mxu0 %v2896
        %2971 = vmatprep.subr.bf16.mxu0 0
        %2972 = vmatpush1.bf16.msra.mxu0 %v2895
        %2973 = vmatprep.subr.bf16.mxu0 0
        %2974 = vmatpush1.bf16.msra.mxu0 %v2894
        %2975 = vmatprep.subr.bf16.mxu0 0
        %2976 = vmatpush1.bf16.msra.mxu0 %v2893
        %2977 = vmatprep.subr.bf16.mxu0 0
        %2978 = vmatpush1.bf16.msra.mxu0 %v2892
        %2979 = vmatprep.subr.bf16.mxu0 0
        %2980 = vmatpush1.bf16.msra.mxu0 %v2891
        %2981 = vmatprep.subr.bf16.mxu0 0
        %2982 = vmatpush1.bf16.msra.mxu0 %v2890
        %2983 = vmatprep.subr.bf16.mxu0 0
        %2984 = vmatpush1.bf16.msra.mxu0 %v2889
        %2985 = vmatprep.subr.bf16.mxu0 0
        %2986 = vmatpush2.bf16.msra.mxu0 %v2904
        %2987 = vmatprep.subr.bf16.mxu0 0
        %2988 = vmatpush2.bf16.msra.mxu0 %v2903
        %2989 = vmatprep.subr.bf16.mxu0 0
        %2990 = vmatpush2.bf16.msra.mxu0 %v2902
        %2991 = vmatprep.subr.bf16.mxu0 0
        %2992 = vmatpush2.bf16.msra.mxu0 %v2901
        %2993 = vmatprep.subr.bf16.mxu0 0
        %2994 = vmatpush2.bf16.msra.mxu0 %v2900
        %2995 = vmatprep.subr.bf16.mxu0 0
        %2996 = vmatpush2.bf16.msra.mxu0 %v2899
        %2997 = vmatprep.subr.bf16.mxu0 0
        %2998 = vmatpush2.bf16.msra.mxu0 %v2898
        %2999 = vmatprep.subr.bf16.mxu0 0
        %3000 = vmatpush2.bf16.msra.mxu0 %v2897
        %3001 = vmatprep.mubr.bf16.mxu0 %v2680
        %3002 = vmatmul.mubr.bf16.gmra.mxu0 %v2679
        %v3003 = vpop.f32.mrf.mxu0
        %v3004 = vadd.f32 %v2597, %v3003
        %v3005 = vpop.f32.mrf.mxu0
        %v3006 = vpop.f32.mrf.mxu0
        %v3007 = vadd.f32 %v2597, %v3006
        %v3008 = vpop.f32.mrf.mxu0
        %3009 = vmatprep.mubr.bf16.mxu0 %v2685
        %3010 = vmatmul.mubr.bf16.gmra.mxu0 %v2684
        %v3011 = vpop.f32.mrf.mxu0
        %v3012 = vadd.f32 %v2597, %v3011
        %v3013 = vpop.f32.mrf.mxu0
        %v3014 = vpop.f32.mrf.mxu0
        %v3015 = vadd.f32 %v2597, %v3014
        %v3016 = vpop.f32.mrf.mxu0
        %3017 = vmatprep.mubr.bf16.mxu0 %v2690
        %3018 = vmatmul.mubr.bf16.gmra.mxu0 %v2689
        %v3019 = vpop.f32.mrf.mxu0
        %v3020 = vadd.f32 %v2597, %v3019
        %v3021 = vpop.f32.mrf.mxu0
        %v3022 = vpop.f32.mrf.mxu0
        %v3023 = vadd.f32 %v2597, %v3022
        %v3024 = vpop.f32.mrf.mxu0
        %3025 = vmatprep.mubr.bf16.mxu0 %v2695
        %3026 = vmatmul.mubr.bf16.gmra.mxu0 %v2694
        %v3027 = vpop.f32.mrf.mxu0
        %v3028 = vadd.f32 %v2597, %v3027
        %v3029 = vpop.f32.mrf.mxu0
        %v3030 = vpop.f32.mrf.mxu0
        %v3031 = vadd.f32 %v2597, %v3030
        %v3032 = vpop.f32.mrf.mxu0
        %3033 = vmatprep.mubr.bf16.mxu0 %v2700
        %3034 = vmatmul.mubr.bf16.gmra.mxu0 %v2699
        %v3035 = vpop.f32.mrf.mxu0
        %v3036 = vadd.f32 %v2597, %v3035
        %v3037 = vpop.f32.mrf.mxu0
        %v3038 = vpop.f32.mrf.mxu0
        %v3039 = vadd.f32 %v2597, %v3038
        %v3040 = vpop.f32.mrf.mxu0
        %3041 = vdwg.mxu0
        %3042 = vmatprep.subr.bf16.mxu0 0
        %3043 = vmatpush1.bf16.msra.mxu0 %v2912
        %3044 = vmatprep.subr.bf16.mxu0 0
        %3045 = vmatpush1.bf16.msra.mxu0 %v2911
        %3046 = vmatprep.subr.bf16.mxu0 0
        %3047 = vmatpush1.bf16.msra.mxu0 %v2910
        %3048 = vmatprep.subr.bf16.mxu0 0
        %3049 = vmatpush1.bf16.msra.mxu0 %v2909
        %3050 = vmatprep.subr.bf16.mxu0 0
        %3051 = vmatpush1.bf16.msra.mxu0 %v2908
        %3052 = vmatprep.subr.bf16.mxu0 0
        %3053 = vmatpush1.bf16.msra.mxu0 %v2907
        %3054 = vmatprep.subr.bf16.mxu0 0
        %3055 = vmatpush1.bf16.msra.mxu0 %v2906
        %3056 = vmatprep.subr.bf16.mxu0 0
        %3057 = vmatpush1.bf16.msra.mxu0 %v2905
        %3058 = vmatprep.subr.bf16.mxu0 0
        %3059 = vmatpush2.bf16.msra.mxu0 %v2920
        %3060 = vmatprep.subr.bf16.mxu0 0
        %3061 = vmatpush2.bf16.msra.mxu0 %v2919
        %3062 = vmatprep.subr.bf16.mxu0 0
        %3063 = vmatpush2.bf16.msra.mxu0 %v2918
        %3064 = vmatprep.subr.bf16.mxu0 0
        %3065 = vmatpush2.bf16.msra.mxu0 %v2917
        %3066 = vmatprep.subr.bf16.mxu0 0
        %3067 = vmatpush2.bf16.msra.mxu0 %v2916
        %3068 = vmatprep.subr.bf16.mxu0 0
        %3069 = vmatpush2.bf16.msra.mxu0 %v2915
        %3070 = vmatprep.subr.bf16.mxu0 0
        %3071 = vmatpush2.bf16.msra.mxu0 %v2914
        %3072 = vmatprep.subr.bf16.mxu0 0
        %3073 = vmatpush2.bf16.msra.mxu0 %v2913
        %3074 = vmatprep.mubr.bf16.mxu0 %v2682
        %3075 = vmatmul.mubr.bf16.gmra.mxu0 %v2681
        %v3076 = vpop.f32.mrf.mxu0
        %v3077 = vadd.f32 %v3004, %v3076
        %v3078 = vpop.f32.mrf.mxu0
        %v3079 = vpop.f32.mrf.mxu0
        %v3080 = vadd.f32 %v3007, %v3079
        %v3081 = vpop.f32.mrf.mxu0
        %3082 = vmatprep.mubr.bf16.mxu0 %v2687
        %3083 = vmatmul.mubr.bf16.gmra.mxu0 %v2686
        %v3084 = vpop.f32.mrf.mxu0
        %v3085 = vadd.f32 %v3012, %v3084
        %v3086 = vpop.f32.mrf.mxu0
        %v3087 = vpop.f32.mrf.mxu0
        %v3088 = vadd.f32 %v3015, %v3087
        %v3089 = vpop.f32.mrf.mxu0
        %3090 = vmatprep.mubr.bf16.mxu0 %v2692
        %3091 = vmatmul.mubr.bf16.gmra.mxu0 %v2691
        %v3092 = vpop.f32.mrf.mxu0
        %v3093 = vadd.f32 %v3020, %v3092
        %v3094 = vpop.f32.mrf.mxu0
        %v3095 = vpop.f32.mrf.mxu0
        %v3096 = vadd.f32 %v3023, %v3095
        %v3097 = vpop.f32.mrf.mxu0
        %3098 = vmatprep.mubr.bf16.mxu0 %v2697
        %3099 = vmatmul.mubr.bf16.gmra.mxu0 %v2696
        %v3100 = vpop.f32.mrf.mxu0
        %v3101 = vadd.f32 %v3028, %v3100
        %v3102 = vpop.f32.mrf.mxu0
        %v3103 = vpop.f32.mrf.mxu0
        %v3104 = vadd.f32 %v3031, %v3103
        %v3105 = vpop.f32.mrf.mxu0
        %3106 = vmatprep.mubr.bf16.mxu0 %v2702
        %3107 = vmatmul.mubr.bf16.gmra.mxu0 %v2701
        %v3108 = vpop.f32.mrf.mxu0
        %v3109 = vadd.f32 %v3036, %v3108
        %v3110 = vpop.f32.mrf.mxu0
        %v3111 = vpop.f32.mrf.mxu0
        %v3112 = vadd.f32 %v3039, %v3111
        %v3113 = vpop.f32.mrf.mxu0
        %3114 = vdwg.mxu0
        %3115 = vmatprep.subr.bf16.mxu0 0
        %3116 = vmatpush1.bf16.msra.mxu0 %v2928
        %3117 = vmatprep.subr.bf16.mxu0 0
        %3118 = vmatpush1.bf16.msra.mxu0 %v2927
        %3119 = vmatprep.subr.bf16.mxu0 0
        %3120 = vmatpush1.bf16.msra.mxu0 %v2926
        %3121 = vmatprep.subr.bf16.mxu0 0
        %3122 = vmatpush1.bf16.msra.mxu0 %v2925
        %3123 = vmatprep.subr.bf16.mxu0 0
        %3124 = vmatpush1.bf16.msra.mxu0 %v2924
        %3125 = vmatprep.subr.bf16.mxu0 0
        %3126 = vmatpush1.bf16.msra.mxu0 %v2923
        %3127 = vmatprep.subr.bf16.mxu0 0
        %3128 = vmatpush1.bf16.msra.mxu0 %v2922
        %3129 = vmatprep.subr.bf16.mxu0 0
        %3130 = vmatpush1.bf16.msra.mxu0 %v2921
        %3131 = vmatprep.subr.bf16.mxu0 0
        %3132 = vmatpush2.bf16.msra.mxu0 0
        %3133 = vmatprep.subr.bf16.mxu0 0
        %3134 = vmatpush2.bf16.msra.mxu0 0
        %3135 = vmatprep.subr.bf16.mxu0 0
        %3136 = vmatpush2.bf16.msra.mxu0 0
        %3137 = vmatprep.subr.bf16.mxu0 0
        %3138 = vmatpush2.bf16.msra.mxu0 0
        %3139 = vmatprep.subr.bf16.mxu0 0
        %3140 = vmatpush2.bf16.msra.mxu0 0
        %3141 = vmatprep.subr.bf16.mxu0 0
        %3142 = vmatpush2.bf16.msra.mxu0 0
        %3143 = vmatprep.subr.bf16.mxu0 0
        %3144 = vmatpush2.bf16.msra.mxu0 0
        %3145 = vmatprep.subr.bf16.mxu0 0
        %3146 = vmatpush2.bf16.msra.mxu0 0
        %3147 = vmatprep.mubr.bf16.mxu0 0
        %3148 = vmatmul.mubr.bf16.gmra.mxu0 %v2683
        %v3149 = vpop.f32.mrf.mxu0
        %v3150 = vadd.f32 %v3077, %v3149
        %v3151 = vpop.f32.mrf.mxu0
        %v3152 = vpop.f32.mrf.mxu0
        %v3153 = vadd.f32 %v3080, %v3152
        %v3154 = vpop.f32.mrf.mxu0
        %3155 = vmatprep.mubr.bf16.mxu0 0
        %3156 = vmatmul.mubr.bf16.gmra.mxu0 %v2688
        %v3157 = vpop.f32.mrf.mxu0
        %v3158 = vadd.f32 %v3085, %v3157
        %v3159 = vpop.f32.mrf.mxu0
        %v3160 = vpop.f32.mrf.mxu0
        %v3161 = vadd.f32 %v3088, %v3160
        %v3162 = vpop.f32.mrf.mxu0
        %3163 = vmatprep.mubr.bf16.mxu0 0
        %3164 = vmatmul.mubr.bf16.gmra.mxu0 %v2693
        %v3165 = vpop.f32.mrf.mxu0
        %v3166 = vadd.f32 %v3093, %v3165
        %v3167 = vpop.f32.mrf.mxu0
        %v3168 = vpop.f32.mrf.mxu0
        %v3169 = vadd.f32 %v3096, %v3168
        %v3170 = vpop.f32.mrf.mxu0
        %3171 = vmatprep.mubr.bf16.mxu0 0
        %3172 = vmatmul.mubr.bf16.gmra.mxu0 %v2698
        %v3173 = vpop.f32.mrf.mxu0
        %v3174 = vadd.f32 %v3101, %v3173
        %v3175 = vpop.f32.mrf.mxu0
        %v3176 = vpop.f32.mrf.mxu0
        %v3177 = vadd.f32 %v3104, %v3176
        %v3178 = vpop.f32.mrf.mxu0
        %3179 = vmatprep.mubr.bf16.mxu0 0
        %3180 = vmatmul.mubr.bf16.gmra.mxu0 %v2703
        %v3181 = vpop.f32.mrf.mxu0
        %v3182 = vadd.f32 %v3109, %v3181
        %v3183 = vpop.f32.mrf.mxu0
        %v3184 = vpop.f32.mrf.mxu0
        %v3185 = vadd.f32 %v3112, %v3184
        %v3186 = vpop.f32.mrf.mxu0
        %3187 = vdwg.mxu0
        %v3188 = vtanh.pop %v3150
        %v3189 = vtanh.pop %v3153
        %v3190 = vtanh.pop %v3158
        %v3191 = vtanh.pop %v3161
        %v3192 = vtanh.pop %v3166
        %v3193 = vtanh.pop %v3169
        %v3194 = vtanh.pop %v3174
        %v3195 = vtanh.pop %v3177
        %v3196 = vtanh.pop %v3182
        %v3197 = vtanh.pop %v3185
        %v3198 = vpack.c.bf16 %v3189, %v3188
        %v3199 = vpack.c.bf16 %v3191, %v3190
        %v3200 = vpack.c.bf16 %v3193, %v3192
        %v3201 = vpack.c.bf16 %v3195, %v3194
        %v3202 = vpack.c.bf16 %v3197, %v3196
        %v3208 = vunpack.c.l.b16 %v3198
        %v3209 = vunpack.c.h.b16 %v3198
        %v3210 = vunpack.c.l.b16 %v3199
        %v3211 = vunpack.c.h.b16 %v3199
        %v3212 = vunpack.c.l.b16 %v3200
        %v3213 = vunpack.c.h.b16 %v3200
        %v3214 = vunpack.c.l.b16 %v3201
        %v3215 = vunpack.c.h.b16 %v3201
        %v3216 = vunpack.c.l.b16 %v3202
        %v3217 = vunpack.c.h.b16 %v3202
        %v3218 = vpack.c.b16 %v3208, %v3208
        %v3219 = vpack.c.b16 %v3209, %v3209
        %v3220 = vpack.c.b16 %v3210, %v3210
        %v3221 = vpack.c.b16 %v3211, %v3211
        %v3222 = vpack.c.b16 %v3212, %v3212
        %v3223 = vpack.c.b16 %v3213, %v3213
        %v3224 = vpack.c.b16 %v3214, %v3214
        %v3225 = vpack.c.b16 %v3215, %v3215
        %v3226 = vpack.c.b16 %v3216, %v3216
        %v3227 = vpack.c.b16 %v3217, %v3217
        %v3228 = vrot.slane %v3218, 7
        %v3229 = vrot.slane %v3228, 4
        %v3230 = vrot.slane %v3219, 7
        %v3231 = vsel %vm741, %v3229, %v3230
        %v3232 = vrot.slane %v3230, 4
        %v3233 = vrot.slane %v3220, 7
        %v3234 = vsel %vm741, %v3232, %v3233
        %v3235 = vrot.slane %v3233, 4
        %v3236 = vrot.slane %v3221, 7
        %v3237 = vsel %vm741, %v3235, %v3236
        %v3238 = vrot.slane %v3236, 4
        %v3239 = vrot.slane %v3222, 7
        %v3240 = vsel %vm741, %v3238, %v3239
        %v3241 = vrot.slane %v3239, 4
        %v3242 = vrot.slane %v3223, 7
        %v3243 = vsel %vm741, %v3241, %v3242
        %v3244 = vrot.slane %v3242, 4
        %v3245 = vrot.slane %v3224, 7
        %v3246 = vsel %vm741, %v3244, %v3245
        %v3247 = vrot.slane %v3245, 4
        %v3248 = vrot.slane %v3225, 7
        %v3249 = vsel %vm741, %v3247, %v3248
        %v3250 = vrot.slane %v3248, 4
        %v3251 = vrot.slane %v3226, 7
        %v3252 = vsel %vm741, %v3250, %v3251
        %v3253 = vrot.slane %v3251, 4
        %v3254 = vrot.slane %v3227, 7
        %v3255 = vsel %vm741, %v3253, %v3254
        %v3256 = vrot.slane %v3254, 4
        %3268 = vst [vmem:[#allocation3] sm:$0xe] %v3228
        %3269 = vst [vmem:[#allocation3 + $0x4] sm:$0xf] %v3231
        %3270 = vst [vmem:[#allocation3 + $0x8] sm:$0xf] %v3234
        %3271 = vst [vmem:[#allocation3 + $0xc] sm:$0xf] %v3237
        %3272 = vst [vmem:[#allocation3 + $0x10] sm:$0xf] %v3240
        %3273 = vst [vmem:[#allocation3 + $0x14] sm:$0xf] %v3243
        %3274 = vst [vmem:[#allocation3 + $0x18] sm:$0xf] %v3246
        %3275 = vst [vmem:[#allocation3 + $0x1c] sm:$0xf] %v3249
        %3276 = vst [vmem:[#allocation3 + $0x20] sm:$0xf] %v3252
        %3277 = vst [vmem:[#allocation3 + $0x24] sm:$0xf] %v3255
        %3278 = vst [vmem:[#allocation3 + $0x28] sm:$0x1] %v3256
        %v3279 = vld [vmem:[#allocation3] sm:$0xf]
        %v3280 = vld [vmem:[#allocation3 + $0x4] sm:$0xf]
        %v3281 = vld [vmem:[#allocation3 + $0x8] sm:$0xf]
        %v3282 = vld [vmem:[#allocation3 + $0xc] sm:$0xf]
        %v3283 = vld [vmem:[#allocation3 + $0x10] sm:$0xf]
        %v3284 = vld [vmem:[#allocation3 + $0x14] sm:$0xf]
        %v3285 = vld [vmem:[#allocation3 + $0x18] sm:$0xf]
        %v3286 = vld [vmem:[#allocation3 + $0x1c] sm:$0xf]
        %v3287 = vld [vmem:[#allocation3 + $0x20] sm:$0xf]
        %v3288 = vld [vmem:[#allocation3 + $0x24] sm:$0xf]
        %3289 = vst [vmem:[#allocation5] sm:$0xf] %v3279
        %3290 = vst [vmem:[#allocation5 + $0x14] sm:$0xf] %v3280
        %3291 = vst [vmem:[#allocation5 + $0x28] sm:$0xf] %v3281
        %3292 = vst [vmem:[#allocation5 + $0x3c] sm:$0xf] %v3282
        %3293 = vst [vmem:[#allocation5 + $0x50] sm:$0xf] %v3283
        %3294 = vst [vmem:[#allocation5 + $0x64] sm:$0xf] %v3284
        %3295 = vst [vmem:[#allocation5 + $0x78] sm:$0xf] %v3285
        %3296 = vst [vmem:[#allocation5 + $0x8c] sm:$0xf] %v3286
        %3297 = vst [vmem:[#allocation5 + $0xa0] sm:$0xf] %v3287
        %3298 = vst [vmem:[#allocation5 + $0xb4] sm:$0xf] %v3288
        %v3299 = vld [vmem:[#allocation3] sm:$0xf]
        %v3300 = vld [vmem:[#allocation3 + $0x4] sm:$0xf]
        %v3301 = vld [vmem:[#allocation3 + $0x8] sm:$0xf]
        %v3302 = vld [vmem:[#allocation3 + $0xc] sm:$0xf]
        %v3303 = vld [vmem:[#allocation3 + $0x10] sm:$0xf]
        %v3304 = vld [vmem:[#allocation3 + $0x14] sm:$0xf]
        %v3305 = vld [vmem:[#allocation3 + $0x18] sm:$0xf]
        %v3306 = vld [vmem:[#allocation3 + $0x1c] sm:$0xf]
        %v3307 = vld [vmem:[#allocation3 + $0x20] sm:$0xf]
        %v3308 = vld [vmem:[#allocation3 + $0x24] sm:$0xf]
        %v3309 = vld [vmem:[#allocation3 + $0x28] sm:$0x1]
        %v3311 = vshrl.u32 %v3299, 16
        %v3313 = vrot.slane %v3311, 4
        %v3314 = vshll.u32 %v3299, 16
        %v3316 = vrot.slane %v3314, 5
        %v3317 = vor.u32 %v3313, %v3316
        %v3318 = vrot.slane %v3317, 4
        %v3320 = vshll.u32 %v3300, 16
        %v3322 = vrot.slane %v3320, 5
        %v3323 = vsel %vm826, %v3318, %v3322
        %v3324 = vshrl.u32 %v3300, 16
        %v3326 = vrot.slane %v3324, 4
        %v3327 = vor.u32 %v3326, %v3322
        %v3328 = vrot.slane %v3327, 4
        %v3330 = vshll.u32 %v3301, 16
        %v3332 = vrot.slane %v3330, 5
        %v3333 = vsel %vm826, %v3328, %v3332
        %v3334 = vshrl.u32 %v3301, 16
        %v3336 = vrot.slane %v3334, 4
        %v3337 = vor.u32 %v3336, %v3332
        %v3338 = vrot.slane %v3337, 4
        %v3340 = vshll.u32 %v3302, 16
        %v3342 = vrot.slane %v3340, 5
        %v3343 = vsel %vm826, %v3338, %v3342
        %v3344 = vshrl.u32 %v3302, 16
        %v3346 = vrot.slane %v3344, 4
        %v3347 = vor.u32 %v3346, %v3342
        %v3348 = vrot.slane %v3347, 4
        %v3350 = vshll.u32 %v3303, 16
        %v3352 = vrot.slane %v3350, 5
        %v3353 = vsel %vm826, %v3348, %v3352
        %v3354 = vshrl.u32 %v3303, 16
        %v3356 = vrot.slane %v3354, 4
        %v3357 = vor.u32 %v3356, %v3352
        %v3358 = vrot.slane %v3357, 4
        %v3360 = vshll.u32 %v3304, 16
        %v3362 = vrot.slane %v3360, 5
        %v3363 = vsel %vm826, %v3358, %v3362
        %v3364 = vshrl.u32 %v3304, 16
        %v3366 = vrot.slane %v3364, 4
        %v3367 = vor.u32 %v3366, %v3362
        %v3368 = vrot.slane %v3367, 4
        %v3370 = vshll.u32 %v3305, 16
        %v3372 = vrot.slane %v3370, 5
        %v3373 = vsel %vm826, %v3368, %v3372
        %v3374 = vshrl.u32 %v3305, 16
        %v3376 = vrot.slane %v3374, 4
        %v3377 = vor.u32 %v3376, %v3372
        %v3378 = vrot.slane %v3377, 4
        %v3380 = vshll.u32 %v3306, 16
        %v3382 = vrot.slane %v3380, 5
        %v3383 = vsel %vm826, %v3378, %v3382
        %v3384 = vshrl.u32 %v3306, 16
        %v3386 = vrot.slane %v3384, 4
        %v3387 = vor.u32 %v3386, %v3382
        %v3388 = vrot.slane %v3387, 4
        %v3390 = vshll.u32 %v3307, 16
        %v3392 = vrot.slane %v3390, 5
        %v3393 = vsel %vm826, %v3388, %v3392
        %v3394 = vshrl.u32 %v3307, 16
        %v3396 = vrot.slane %v3394, 4
        %v3397 = vor.u32 %v3396, %v3392
        %v3398 = vrot.slane %v3397, 4
        %v3400 = vshll.u32 %v3308, 16
        %v3402 = vrot.slane %v3400, 5
        %v3403 = vsel %vm826, %v3398, %v3402
        %v3404 = vshrl.u32 %v3308, 16
        %v3406 = vrot.slane %v3404, 4
        %v3407 = vor.u32 %v3406, %v3402
        %v3408 = vrot.slane %v3407, 4
        %v3410 = vshll.u32 %v3309, 16
        %v3412 = vrot.slane %v3410, 5
        %v3413 = vsel %vm826, %v3408, %v3412
        %3424 = vst [vmem:[#allocation5 + $0x4] sm:$0xf] %v3323
        %3425 = vst [vmem:[#allocation5 + $0x18] sm:$0xf] %v3333
        %3426 = vst [vmem:[#allocation5 + $0x2c] sm:$0xf] %v3343
        %3427 = vst [vmem:[#allocation5 + $0x40] sm:$0xf] %v3353
        %3428 = vst [vmem:[#allocation5 + $0x54] sm:$0xf] %v3363
        %3429 = vst [vmem:[#allocation5 + $0x68] sm:$0xf] %v3373
        %3430 = vst [vmem:[#allocation5 + $0x7c] sm:$0xf] %v3383
        %3431 = vst [vmem:[#allocation5 + $0x90] sm:$0xf] %v3393
        %3432 = vst [vmem:[#allocation5 + $0xa4] sm:$0xf] %v3403
        %3433 = vst [vmem:[#allocation5 + $0xb8] sm:$0xf] %v3413
        %v3434 = vld [vmem:[#allocation3] sm:$0xe]
        %v3435 = vld [vmem:[#allocation3 + $0x4] sm:$0xf]
        %v3436 = vld [vmem:[#allocation3 + $0x8] sm:$0xf]
        %v3437 = vld [vmem:[#allocation3 + $0xc] sm:$0xf]
        %v3438 = vld [vmem:[#allocation3 + $0x10] sm:$0xf]
        %v3439 = vld [vmem:[#allocation3 + $0x14] sm:$0xf]
        %v3440 = vld [vmem:[#allocation3 + $0x18] sm:$0xf]
        %v3441 = vld [vmem:[#allocation3 + $0x1c] sm:$0xf]
        %v3442 = vld [vmem:[#allocation3 + $0x20] sm:$0xf]
        %v3443 = vld [vmem:[#allocation3 + $0x24] sm:$0xf]
        %v3444 = vld [vmem:[#allocation3 + $0x28] sm:$0x1]
        %v3456 = vrot.slane %v3434, 5
        %v3457 = vrot.slane %v3456, 4
        %v3458 = vrot.slane %v3435, 5
        %v3459 = vsel %vm975, %v3457, %v3458
        %v3460 = vrot.slane %v3458, 4
        %v3461 = vrot.slane %v3436, 5
        %v3462 = vsel %vm975, %v3460, %v3461
        %v3463 = vrot.slane %v3461, 4
        %v3464 = vrot.slane %v3437, 5
        %v3465 = vsel %vm975, %v3463, %v3464
        %v3466 = vrot.slane %v3464, 4
        %v3467 = vrot.slane %v3438, 5
        %v3468 = vsel %vm975, %v3466, %v3467
        %v3469 = vrot.slane %v3467, 4
        %v3470 = vrot.slane %v3439, 5
        %v3471 = vsel %vm975, %v3469, %v3470
        %v3472 = vrot.slane %v3470, 4
        %v3473 = vrot.slane %v3440, 5
        %v3474 = vsel %vm975, %v3472, %v3473
        %v3475 = vrot.slane %v3473, 4
        %v3476 = vrot.slane %v3441, 5
        %v3477 = vsel %vm975, %v3475, %v3476
        %v3478 = vrot.slane %v3476, 4
        %v3479 = vrot.slane %v3442, 5
        %v3480 = vsel %vm975, %v3478, %v3479
        %v3481 = vrot.slane %v3479, 4
        %v3482 = vrot.slane %v3443, 5
        %v3483 = vsel %vm975, %v3481, %v3482
        %v3484 = vrot.slane %v3482, 4
        %v3485 = vrot.slane %v3444, 5
        %v3486 = vsel %vm975, %v3484, %v3485
        %3497 = vst [vmem:[#allocation5 + $0x8] sm:$0xf] %v3459
        %3498 = vst [vmem:[#allocation5 + $0x1c] sm:$0xf] %v3462
        %3499 = vst [vmem:[#allocation5 + $0x30] sm:$0xf] %v3465
        %3500 = vst [vmem:[#allocation5 + $0x44] sm:$0xf] %v3468
        %3501 = vst [vmem:[#allocation5 + $0x58] sm:$0xf] %v3471
        %3502 = vst [vmem:[#allocation5 + $0x6c] sm:$0xf] %v3474
        %3503 = vst [vmem:[#allocation5 + $0x80] sm:$0xf] %v3477
        %3504 = vst [vmem:[#allocation5 + $0x94] sm:$0xf] %v3480
        %3505 = vst [vmem:[#allocation5 + $0xa8] sm:$0xf] %v3483
        %3506 = vst [vmem:[#allocation5 + $0xbc] sm:$0xf] %v3486
        %v3507 = vld [vmem:[#allocation3] sm:$0xe]
        %v3508 = vld [vmem:[#allocation3 + $0x4] sm:$0xf]
        %v3509 = vld [vmem:[#allocation3 + $0x8] sm:$0xf]
        %v3510 = vld [vmem:[#allocation3 + $0xc] sm:$0xf]
        %v3511 = vld [vmem:[#allocation3 + $0x10] sm:$0xf]
        %v3512 = vld [vmem:[#allocation3 + $0x14] sm:$0xf]
        %v3513 = vld [vmem:[#allocation3 + $0x18] sm:$0xf]
        %v3514 = vld [vmem:[#allocation3 + $0x1c] sm:$0xf]
        %v3515 = vld [vmem:[#allocation3 + $0x20] sm:$0xf]
        %v3516 = vld [vmem:[#allocation3 + $0x24] sm:$0xf]
        %v3517 = vld [vmem:[#allocation3 + $0x28] sm:$0x3]
        %v3519 = vshrl.u32 %v3507, 16
        %v3521 = vrot.slane %v3519, 5
        %v3522 = vshll.u32 %v3507, 16
        %v3524 = vrot.slane %v3522, 6
        %v3525 = vor.u32 %v3521, %v3524
        %v3526 = vrot.slane %v3525, 4
        %v3528 = vshrl.u32 %v3508, 16
        %v3530 = vrot.slane %v3528, 5
        %v3531 = vshll.u32 %v3508, 16
        %v3533 = vrot.slane %v3531, 6
        %v3534 = vor.u32 %v3530, %v3533
        %v3535 = vsel %vm1040, %v3526, %v3534
        %v3536 = vrot.slane %v3534, 4
        %v3538 = vshrl.u32 %v3509, 16
        %v3540 = vrot.slane %v3538, 5
        %v3541 = vshll.u32 %v3509, 16
        %v3543 = vrot.slane %v3541, 6
        %v3544 = vor.u32 %v3540, %v3543
        %v3545 = vsel %vm1040, %v3536, %v3544
        %v3546 = vrot.slane %v3544, 4
        %v3548 = vshrl.u32 %v3510, 16
        %v3550 = vrot.slane %v3548, 5
        %v3551 = vshll.u32 %v3510, 16
        %v3553 = vrot.slane %v3551, 6
        %v3554 = vor.u32 %v3550, %v3553
        %v3555 = vsel %vm1040, %v3546, %v3554
        %v3556 = vrot.slane %v3554, 4
        %v3558 = vshrl.u32 %v3511, 16
        %v3560 = vrot.slane %v3558, 5
        %v3561 = vshll.u32 %v3511, 16
        %v3563 = vrot.slane %v3561, 6
        %v3564 = vor.u32 %v3560, %v3563
        %v3565 = vsel %vm1040, %v3556, %v3564
        %v3566 = vrot.slane %v3564, 4
        %v3568 = vshrl.u32 %v3512, 16
        %v3570 = vrot.slane %v3568, 5
        %v3571 = vshll.u32 %v3512, 16
        %v3573 = vrot.slane %v3571, 6
        %v3574 = vor.u32 %v3570, %v3573
        %v3575 = vsel %vm1040, %v3566, %v3574
        %v3576 = vrot.slane %v3574, 4
        %v3578 = vshrl.u32 %v3513, 16
        %v3580 = vrot.slane %v3578, 5
        %v3581 = vshll.u32 %v3513, 16
        %v3583 = vrot.slane %v3581, 6
        %v3584 = vor.u32 %v3580, %v3583
        %v3585 = vsel %vm1040, %v3576, %v3584
        %v3586 = vrot.slane %v3584, 4
        %v3588 = vshrl.u32 %v3514, 16
        %v3590 = vrot.slane %v3588, 5
        %v3591 = vshll.u32 %v3514, 16
        %v3593 = vrot.slane %v3591, 6
        %v3594 = vor.u32 %v3590, %v3593
        %v3595 = vsel %vm1040, %v3586, %v3594
        %v3596 = vrot.slane %v3594, 4
        %v3598 = vshrl.u32 %v3515, 16
        %v3600 = vrot.slane %v3598, 5
        %v3601 = vshll.u32 %v3515, 16
        %v3603 = vrot.slane %v3601, 6
        %v3604 = vor.u32 %v3600, %v3603
        %v3605 = vsel %vm1040, %v3596, %v3604
        %v3606 = vrot.slane %v3604, 4
        %v3608 = vshrl.u32 %v3516, 16
        %v3610 = vrot.slane %v3608, 5
        %v3611 = vshll.u32 %v3516, 16
        %v3613 = vrot.slane %v3611, 6
        %v3614 = vor.u32 %v3610, %v3613
        %v3615 = vsel %vm1040, %v3606, %v3614
        %v3616 = vrot.slane %v3614, 4
        %v3618 = vshrl.u32 %v3517, 16
        %v3620 = vrot.slane %v3618, 5
        %v3621 = vshll.u32 %v3517, 16
        %v3623 = vrot.slane %v3621, 6
        %v3624 = vor.u32 %v3620, %v3623
        %v3625 = vsel %vm1040, %v3616, %v3624
        %3636 = vst [vmem:[#allocation5 + $0xc] sm:$0xf] %v3535
        %3637 = vst [vmem:[#allocation5 + $0x20] sm:$0xf] %v3545
        %3638 = vst [vmem:[#allocation5 + $0x34] sm:$0xf] %v3555
        %3639 = vst [vmem:[#allocation5 + $0x48] sm:$0xf] %v3565
        %3640 = vst [vmem:[#allocation5 + $0x5c] sm:$0xf] %v3575
        %3641 = vst [vmem:[#allocation5 + $0x70] sm:$0xf] %v3585
        %3642 = vst [vmem:[#allocation5 + $0x84] sm:$0xf] %v3595
        %3643 = vst [vmem:[#allocation5 + $0x98] sm:$0xf] %v3605
        %3644 = vst [vmem:[#allocation5 + $0xac] sm:$0xf] %v3615
        %3645 = vst [vmem:[#allocation5 + $0xc0] sm:$0xf] %v3625
        %v3646 = vld [vmem:[#allocation3] sm:$0xc]
        %v3647 = vld [vmem:[#allocation3 + $0x4] sm:$0xf]
        %v3648 = vld [vmem:[#allocation3 + $0x8] sm:$0xf]
        %v3649 = vld [vmem:[#allocation3 + $0xc] sm:$0xf]
        %v3650 = vld [vmem:[#allocation3 + $0x10] sm:$0xf]
        %v3651 = vld [vmem:[#allocation3 + $0x14] sm:$0xf]
        %v3652 = vld [vmem:[#allocation3 + $0x18] sm:$0xf]
        %v3653 = vld [vmem:[#allocation3 + $0x1c] sm:$0xf]
        %v3654 = vld [vmem:[#allocation3 + $0x20] sm:$0xf]
        %v3655 = vld [vmem:[#allocation3 + $0x24] sm:$0xf]
        %v3656 = vld [vmem:[#allocation3 + $0x28] sm:$0x3]
        %v3668 = vrot.slane %v3646, 6
        %v3669 = vrot.slane %v3668, 4
        %v3670 = vrot.slane %v3647, 6
        %v3671 = vsel %vm1193, %v3669, %v3670
        %v3672 = vrot.slane %v3670, 4
        %v3673 = vrot.slane %v3648, 6
        %v3674 = vsel %vm1193, %v3672, %v3673
        %v3675 = vrot.slane %v3673, 4
        %v3676 = vrot.slane %v3649, 6
        %v3677 = vsel %vm1193, %v3675, %v3676
        %v3678 = vrot.slane %v3676, 4
        %v3679 = vrot.slane %v3650, 6
        %v3680 = vsel %vm1193, %v3678, %v3679
        %v3681 = vrot.slane %v3679, 4
        %v3682 = vrot.slane %v3651, 6
        %v3683 = vsel %vm1193, %v3681, %v3682
        %v3684 = vrot.slane %v3682, 4
        %v3685 = vrot.slane %v3652, 6
        %v3686 = vsel %vm1193, %v3684, %v3685
        %v3687 = vrot.slane %v3685, 4
        %v3688 = vrot.slane %v3653, 6
        %v3689 = vsel %vm1193, %v3687, %v3688
        %v3690 = vrot.slane %v3688, 4
        %v3691 = vrot.slane %v3654, 6
        %v3692 = vsel %vm1193, %v3690, %v3691
        %v3693 = vrot.slane %v3691, 4
        %v3694 = vrot.slane %v3655, 6
        %v3695 = vsel %vm1193, %v3693, %v3694
        %v3696 = vrot.slane %v3694, 4
        %v3697 = vrot.slane %v3656, 6
        %v3698 = vsel %vm1193, %v3696, %v3697
        %3709 = vst [vmem:[#allocation5 + $0x10] sm:$0xf] %v3671
        %3710 = vst [vmem:[#allocation5 + $0x24] sm:$0xf] %v3674
        %3711 = vst [vmem:[#allocation5 + $0x38] sm:$0xf] %v3677
        %3712 = vst [vmem:[#allocation5 + $0x4c] sm:$0xf] %v3680
        %3713 = vst [vmem:[#allocation5 + $0x60] sm:$0xf] %v3683
        %3714 = vst [vmem:[#allocation5 + $0x74] sm:$0xf] %v3686
        %3715 = vst [vmem:[#allocation5 + $0x88] sm:$0xf] %v3689
        %3716 = vst [vmem:[#allocation5 + $0x9c] sm:$0xf] %v3692
        %3717 = vst [vmem:[#allocation5 + $0xb0] sm:$0xf] %v3695
        %3718 = vst [vmem:[#allocation5 + $0xc4] sm:$0xf] %v3698
        %v3719 = vld [vmem:[#allocation5] sm:$0xff]
        %v3720 = vld [vmem:[#allocation5 + $0x8] sm:$0xff]
        %v3721 = vld [vmem:[#allocation5 + $0x10] sm:$0xf]
        %v3722 = vld [vmem:[#allocation5 + $0x14] sm:$0xff]
        %v3723 = vld [vmem:[#allocation5 + $0x1c] sm:$0xff]
        %v3724 = vld [vmem:[#allocation5 + $0x24] sm:$0xf]
        %v3725 = vld [vmem:[#allocation5 + $0x28] sm:$0xff]
        %v3726 = vld [vmem:[#allocation5 + $0x30] sm:$0xff]
        %v3727 = vld [vmem:[#allocation5 + $0x38] sm:$0xf]
        %v3728 = vld [vmem:[#allocation5 + $0x3c] sm:$0xff]
        %v3729 = vld [vmem:[#allocation5 + $0x44] sm:$0xff]
        %v3730 = vld [vmem:[#allocation5 + $0x4c] sm:$0xf]
        %v3731 = vld [vmem:[#allocation5 + $0x50] sm:$0xff]
        %v3732 = vld [vmem:[#allocation5 + $0x58] sm:$0xff]
        %v3733 = vld [vmem:[#allocation5 + $0x60] sm:$0xf]
        %v3734 = vld [vmem:[#allocation5 + $0x64] sm:$0xff]
        %v3735 = vld [vmem:[#allocation5 + $0x6c] sm:$0xff]
        %v3736 = vld [vmem:[#allocation5 + $0x74] sm:$0xf]
        %v3737 = vld [vmem:[#allocation5 + $0x78] sm:$0xff]
        %v3738 = vld [vmem:[#allocation5 + $0x80] sm:$0xff]
        %v3739 = vld [vmem:[#allocation5 + $0x88] sm:$0xf]
        %v3740 = vld [vmem:[#allocation5 + $0x8c] sm:$0xff]
        %v3741 = vld [vmem:[#allocation5 + $0x94] sm:$0xff]
        %v3742 = vld [vmem:[#allocation5 + $0x9c] sm:$0xf]
        %v3743 = vld [vmem:[#allocation5 + $0xa0] sm:$0xff]
        %v3744 = vld [vmem:[#allocation5 + $0xa8] sm:$0xff]
        %v3745 = vld [vmem:[#allocation5 + $0xb0] sm:$0xf]
        %v3746 = vld [vmem:[#allocation5 + $0xb4] sm:$0xff]
        %v3747 = vld [vmem:[#allocation5 + $0xbc] sm:$0xff]
        %v3748 = vld [vmem:[#allocation5 + $0xc4] sm:$0xf]
        %v3749 = vld [vmem:[#allocation12] sm:$0xf]
        %v3750 = vld [vmem:[#allocation12 + $0x4] sm:$0xf]
        %v3751 = vld [vmem:[#allocation12 + $0x8] sm:$0xf]
        %v3752 = vld [vmem:[#allocation12 + $0xc] sm:$0xf]
        %v3753 = vld [vmem:[#allocation12 + $0x10] sm:$0xf]
        %v3754 = vld [vmem:[#allocation12 + $0x14] sm:$0xf]
        %v3755 = vld [vmem:[#allocation12 + $0x18] sm:$0xf]
        %v3756 = vld [vmem:[#allocation12 + $0x1c] sm:$0xf]
        %v3757 = vld [vmem:[#allocation12 + $0x20] sm:$0xf]
        %v3758 = vld [vmem:[#allocation12 + $0x24] sm:$0xf]
        %v3759 = vld [vmem:[#allocation12 + $0x28] sm:$0xf]
        %v3760 = vld [vmem:[#allocation12 + $0x2c] sm:$0xf]
        %v3761 = vld [vmem:[#allocation12 + $0x30] sm:$0xf]
        %v3762 = vld [vmem:[#allocation12 + $0x34] sm:$0xf]
        %v3763 = vld [vmem:[#allocation12 + $0x38] sm:$0xf]
        %v3764 = vld [vmem:[#allocation12 + $0x3c] sm:$0xf]
        %v3765 = vld [vmem:[#allocation12 + $0x40] sm:$0xf]
        %v3766 = vld [vmem:[#allocation12 + $0x44] sm:$0xf]
        %v3767 = vld [vmem:[#allocation12 + $0x48] sm:$0xf]
        %v3768 = vld [vmem:[#allocation12 + $0x4c] sm:$0xf]
        %v3769 = vld [vmem:[#allocation12 + $0x50] sm:$0xf]
        %v3770 = vld [vmem:[#allocation12 + $0x54] sm:$0xf]
        %v3771 = vld [vmem:[#allocation12 + $0x58] sm:$0xf]
        %v3772 = vld [vmem:[#allocation12 + $0x5c] sm:$0xf]
        %v3773 = vld [vmem:[#allocation12 + $0x60] sm:$0xf]
        %v3774 = vld [vmem:[#allocation12 + $0x64] sm:$0xf]
        %v3775 = vld [vmem:[#allocation12 + $0x68] sm:$0xf]
        %v3776 = vld [vmem:[#allocation12 + $0x6c] sm:$0xf]
        %v3777 = vld [vmem:[#allocation12 + $0x70] sm:$0xf]
        %v3778 = vld [vmem:[#allocation12 + $0x74] sm:$0xf]
        %v3779 = vld [vmem:[#allocation12 + $0x78] sm:$0xf]
        %v3780 = vld [vmem:[#allocation12 + $0x7c] sm:$0xf]
        %v3781 = vld [vmem:[#allocation12 + $0x80] sm:$0xf]
        %v3782 = vld [vmem:[#allocation12 + $0x84] sm:$0xf]
        %v3783 = vld [vmem:[#allocation12 + $0x88] sm:$0xf]
        %v3784 = vld [vmem:[#allocation12 + $0x8c] sm:$0xf]
        %v3785 = vld [vmem:[#allocation12 + $0x90] sm:$0xf]
        %v3786 = vld [vmem:[#allocation12 + $0x94] sm:$0xf]
        %v3787 = vld [vmem:[#allocation12 + $0x98] sm:$0xf]
        %v3788 = vld [vmem:[#allocation12 + $0x9c] sm:$0xf]
        %v3789 = vld [vmem:[#allocation12 + $0xa0] sm:$0xf]
        %v3790 = vld [vmem:[#allocation12 + $0xa4] sm:$0xf]
        %v3791 = vld [vmem:[#allocation12 + $0xa8] sm:$0xf]
        %v3792 = vld [vmem:[#allocation12 + $0xac] sm:$0xf]
        %v3793 = vld [vmem:[#allocation12 + $0xb0] sm:$0xf]
        %v3794 = vld [vmem:[#allocation12 + $0xb4] sm:$0xf]
        %v3795 = vld [vmem:[#allocation12 + $0xb8] sm:$0xf]
        %v3796 = vld [vmem:[#allocation12 + $0xbc] sm:$0xf]
        %v3797 = vld [vmem:[#allocation12 + $0xc0] sm:$0xf]
        %v3798 = vld [vmem:[#allocation12 + $0xc4] sm:$0xf]
        %v3799 = vld [vmem:[#allocation12 + $0xc8] sm:$0xf]
        %v3800 = vld [vmem:[#allocation12 + $0xcc] sm:$0xf]
        %v3801 = vld [vmem:[#allocation12 + $0xd0] sm:$0xf]
        %v3802 = vld [vmem:[#allocation12 + $0xd4] sm:$0xf]
        %v3803 = vld [vmem:[#allocation12 + $0xd8] sm:$0xf]
        %v3804 = vld [vmem:[#allocation12 + $0xdc] sm:$0xf]
        %v3805 = vld [vmem:[#allocation12 + $0xe0] sm:$0xf]
        %v3806 = vld [vmem:[#allocation12 + $0xe4] sm:$0xf]
        %v3807 = vld [vmem:[#allocation12 + $0xe8] sm:$0xf]
        %v3808 = vld [vmem:[#allocation12 + $0xec] sm:$0xf]
        %v3809 = vld [vmem:[#allocation12 + $0xf0] sm:$0xf]
        %v3810 = vld [vmem:[#allocation12 + $0xf4] sm:$0xf]
        %v3811 = vld [vmem:[#allocation12 + $0xf8] sm:$0xf]
        %v3812 = vld [vmem:[#allocation12 + $0xfc] sm:$0xf]
        %v3813 = vld [vmem:[#allocation12 + $0x100] sm:$0xf]
        %v3814 = vld [vmem:[#allocation12 + $0x104] sm:$0xf]
        %v3815 = vld [vmem:[#allocation12 + $0x108] sm:$0xf]
        %v3816 = vld [vmem:[#allocation12 + $0x10c] sm:$0xf]
        %v3817 = vld [vmem:[#allocation12 + $0x110] sm:$0xf]
        %v3818 = vld [vmem:[#allocation12 + $0x114] sm:$0xf]
        %v3819 = vld [vmem:[#allocation12 + $0x118] sm:$0xf]
        %v3820 = vld [vmem:[#allocation12 + $0x11c] sm:$0xf]
        %v3821 = vld [vmem:[#allocation12 + $0x120] sm:$0xf]
        %v3822 = vld [vmem:[#allocation12 + $0x124] sm:$0xf]
        %v3823 = vld [vmem:[#allocation12 + $0x128] sm:$0xf]
        %v3824 = vld [vmem:[#allocation12 + $0x12c] sm:$0xf]
        %v3825 = vld [vmem:[#allocation12 + $0x130] sm:$0xf]
        %v3826 = vld [vmem:[#allocation12 + $0x134] sm:$0xf]
        %v3827 = vld [vmem:[#allocation12 + $0x138] sm:$0xf]
        %v3828 = vld [vmem:[#allocation12 + $0x13c] sm:$0xf]
        %v3829 = vld [vmem:[%s8] sm:$0x1]
        %v3831 = vlaneseq
        %v3832 = vshrl.u32 %v3831, 7
        %v3833 = vsub.s32 0, %v3832
        %v3834 = vrot.slane %v3829, %v3833
        %v3866 = vunpack.c.l.b16 %v3719
        %v3867 = vunpack.c.h.b16 %v3719
        %v3868 = vunpack.c.l.b16 %v3720
        %v3869 = vunpack.c.h.b16 %v3720
        %v3870 = vunpack.c.l.b16 %v3721
        %v3871 = vunpack.c.l.b16 %v3722
        %v3872 = vunpack.c.h.b16 %v3722
        %v3873 = vunpack.c.l.b16 %v3723
        %v3874 = vunpack.c.h.b16 %v3723
        %v3875 = vunpack.c.l.b16 %v3724
        %v3876 = vunpack.c.l.b16 %v3725
        %v3877 = vunpack.c.h.b16 %v3725
        %v3878 = vunpack.c.l.b16 %v3726
        %v3879 = vunpack.c.h.b16 %v3726
        %v3880 = vunpack.c.l.b16 %v3727
        %v3881 = vunpack.c.l.b16 %v3728
        %v3882 = vunpack.c.h.b16 %v3728
        %v3883 = vunpack.c.l.b16 %v3729
        %v3884 = vunpack.c.h.b16 %v3729
        %v3885 = vunpack.c.l.b16 %v3730
        %v3886 = vunpack.c.l.b16 %v3731
        %v3887 = vunpack.c.h.b16 %v3731
        %v3888 = vunpack.c.l.b16 %v3732
        %v3889 = vunpack.c.h.b16 %v3732
        %v3890 = vunpack.c.l.b16 %v3733
        %v3891 = vunpack.c.l.b16 %v3734
        %v3892 = vunpack.c.h.b16 %v3734
        %v3893 = vunpack.c.l.b16 %v3735
        %v3894 = vunpack.c.h.b16 %v3735
        %v3895 = vunpack.c.l.b16 %v3736
        %v3896 = vunpack.c.l.b16 %v3737
        %v3897 = vunpack.c.h.b16 %v3737
        %v3898 = vunpack.c.l.b16 %v3738
        %v3899 = vunpack.c.h.b16 %v3738
        %v3900 = vunpack.c.l.b16 %v3739
        %v3901 = vunpack.c.l.b16 %v3740
        %v3902 = vunpack.c.h.b16 %v3740
        %v3903 = vunpack.c.l.b16 %v3741
        %v3904 = vunpack.c.h.b16 %v3741
        %v3905 = vunpack.c.l.b16 %v3742
        %v3906 = vunpack.c.l.b16 %v3743
        %v3907 = vunpack.c.h.b16 %v3743
        %v3908 = vunpack.c.l.b16 %v3744
        %v3909 = vunpack.c.h.b16 %v3744
        %v3910 = vunpack.c.l.b16 %v3745
        %v3911 = vunpack.c.l.b16 %v3746
        %v3912 = vunpack.c.h.b16 %v3746
        %v3913 = vunpack.c.l.b16 %v3747
        %v3914 = vunpack.c.h.b16 %v3747
        %v3915 = vunpack.c.l.b16 %v3748
        %v3916 = vpack.c.b16 %v3871, %v3866
        %v3917 = vpack.c.b16 %v3872, %v3867
        %v3918 = vpack.c.b16 %v3873, %v3868
        %v3919 = vpack.c.b16 %v3874, %v3869
        %v3920 = vpack.c.b16 %v3875, %v3870
        %v3921 = vpack.c.b16 %v3881, %v3876
        %v3922 = vpack.c.b16 %v3882, %v3877
        %v3923 = vpack.c.b16 %v3883, %v3878
        %v3924 = vpack.c.b16 %v3884, %v3879
        %v3925 = vpack.c.b16 %v3885, %v3880
        %v3926 = vpack.c.b16 %v3891, %v3886
        %v3927 = vpack.c.b16 %v3892, %v3887
        %v3928 = vpack.c.b16 %v3893, %v3888
        %v3929 = vpack.c.b16 %v3894, %v3889
        %v3930 = vpack.c.b16 %v3895, %v3890
        %v3931 = vpack.c.b16 %v3901, %v3896
        %v3932 = vpack.c.b16 %v3902, %v3897
        %v3933 = vpack.c.b16 %v3903, %v3898
        %v3934 = vpack.c.b16 %v3904, %v3899
        %v3935 = vpack.c.b16 %v3905, %v3900
        %v3936 = vpack.c.b16 %v3911, %v3906
        %v3937 = vpack.c.b16 %v3912, %v3907
        %v3938 = vpack.c.b16 %v3913, %v3908
        %v3939 = vpack.c.b16 %v3914, %v3909
        %v3940 = vpack.c.b16 %v3915, %v3910
        %v4046 = vunpack.c.l.b16 %v3749
        %v4047 = vunpack.c.l.b16 %v3750
        %v4048 = vunpack.c.l.b16 %v3751
        %v4049 = vunpack.c.l.b16 %v3752
        %v4050 = vunpack.c.l.b16 %v3753
        %v4051 = vunpack.c.l.b16 %v3754
        %v4052 = vunpack.c.l.b16 %v3755
        %v4053 = vunpack.c.l.b16 %v3756
        %v4054 = vunpack.c.l.b16 %v3757
        %v4055 = vunpack.c.l.b16 %v3758
        %v4056 = vunpack.c.l.b16 %v3759
        %v4057 = vunpack.c.l.b16 %v3760
        %v4058 = vunpack.c.l.b16 %v3761
        %v4059 = vunpack.c.l.b16 %v3762
        %v4060 = vunpack.c.l.b16 %v3763
        %v4061 = vunpack.c.l.b16 %v3764
        %v4062 = vunpack.c.l.b16 %v3765
        %v4063 = vunpack.c.l.b16 %v3766
        %v4064 = vunpack.c.l.b16 %v3767
        %v4065 = vunpack.c.l.b16 %v3768
        %v4066 = vunpack.c.l.b16 %v3769
        %v4067 = vunpack.c.l.b16 %v3770
        %v4068 = vunpack.c.l.b16 %v3771
        %v4069 = vunpack.c.l.b16 %v3772
        %v4070 = vunpack.c.l.b16 %v3773
        %v4071 = vunpack.c.l.b16 %v3774
        %v4072 = vunpack.c.l.b16 %v3775
        %v4073 = vunpack.c.l.b16 %v3776
        %v4074 = vunpack.c.l.b16 %v3777
        %v4075 = vunpack.c.l.b16 %v3778
        %v4076 = vunpack.c.l.b16 %v3779
        %v4077 = vunpack.c.l.b16 %v3780
        %v4078 = vunpack.c.l.b16 %v3781
        %v4079 = vunpack.c.l.b16 %v3782
        %v4080 = vunpack.c.l.b16 %v3783
        %v4081 = vunpack.c.l.b16 %v3784
        %v4082 = vunpack.c.l.b16 %v3785
        %v4083 = vunpack.c.l.b16 %v3786
        %v4084 = vunpack.c.l.b16 %v3787
        %v4085 = vunpack.c.l.b16 %v3788
        %v4086 = vunpack.c.l.b16 %v3789
        %v4087 = vunpack.c.l.b16 %v3790
        %v4088 = vunpack.c.l.b16 %v3791
        %v4089 = vunpack.c.l.b16 %v3792
        %v4090 = vunpack.c.l.b16 %v3793
        %v4091 = vunpack.c.l.b16 %v3794
        %v4092 = vunpack.c.l.b16 %v3795
        %v4093 = vunpack.c.l.b16 %v3796
        %v4094 = vunpack.c.l.b16 %v3797
        %v4095 = vunpack.c.l.b16 %v3798
        %v4096 = vunpack.c.l.b16 %v3799
        %v4097 = vunpack.c.l.b16 %v3800
        %v4098 = vunpack.c.l.b16 %v3801
        %v4099 = vunpack.c.l.b16 %v3802
        %v4100 = vunpack.c.l.b16 %v3803
        %v4101 = vunpack.c.l.b16 %v3804
        %v4102 = vunpack.c.l.b16 %v3805
        %v4103 = vunpack.c.l.b16 %v3806
        %v4104 = vunpack.c.l.b16 %v3807
        %v4105 = vunpack.c.l.b16 %v3808
        %v4106 = vunpack.c.l.b16 %v3809
        %v4107 = vunpack.c.l.b16 %v3810
        %v4108 = vunpack.c.l.b16 %v3811
        %v4109 = vunpack.c.l.b16 %v3812
        %v4110 = vunpack.c.l.b16 %v3813
        %v4111 = vunpack.c.l.b16 %v3814
        %v4112 = vunpack.c.l.b16 %v3815
        %v4113 = vunpack.c.l.b16 %v3816
        %v4114 = vunpack.c.l.b16 %v3817
        %v4115 = vunpack.c.l.b16 %v3818
        %v4116 = vunpack.c.l.b16 %v3819
        %v4117 = vunpack.c.l.b16 %v3820
        %v4118 = vunpack.c.l.b16 %v3821
        %v4119 = vunpack.c.l.b16 %v3822
        %v4120 = vunpack.c.l.b16 %v3823
        %v4121 = vunpack.c.l.b16 %v3824
        %v4122 = vunpack.c.l.b16 %v3825
        %v4123 = vunpack.c.l.b16 %v3826
        %v4124 = vunpack.c.l.b16 %v3827
        %v4125 = vunpack.c.l.b16 %v3828
        %v4126 = vpack.c.b16 %v4047, %v4046
        %v4127 = vpack.c.b16 %v4049, %v4048
        %v4128 = vpack.c.b16 %v4051, %v4050
        %v4129 = vpack.c.b16 %v4053, %v4052
        %v4130 = vpack.c.b16 %v4055, %v4054
        %v4131 = vpack.c.b16 %v4057, %v4056
        %v4132 = vpack.c.b16 %v4059, %v4058
        %v4133 = vpack.c.b16 %v4061, %v4060
        %v4134 = vpack.c.b16 %v4063, %v4062
        %v4135 = vpack.c.b16 %v4065, %v4064
        %v4136 = vpack.c.b16 %v4067, %v4066
        %v4137 = vpack.c.b16 %v4069, %v4068
        %v4138 = vpack.c.b16 %v4071, %v4070
        %v4139 = vpack.c.b16 %v4073, %v4072
        %v4140 = vpack.c.b16 %v4075, %v4074
        %v4141 = vpack.c.b16 %v4077, %v4076
        %v4142 = vpack.c.b16 %v4079, %v4078
        %v4143 = vpack.c.b16 %v4081, %v4080
        %v4144 = vpack.c.b16 %v4083, %v4082
        %v4145 = vpack.c.b16 %v4085, %v4084
        %v4146 = vpack.c.b16 %v4087, %v4086
        %v4147 = vpack.c.b16 %v4089, %v4088
        %v4148 = vpack.c.b16 %v4091, %v4090
        %v4149 = vpack.c.b16 %v4093, %v4092
        %v4150 = vpack.c.b16 %v4095, %v4094
        %v4151 = vpack.c.b16 %v4097, %v4096
        %v4152 = vpack.c.b16 %v4099, %v4098
        %v4153 = vpack.c.b16 %v4101, %v4100
        %v4154 = vpack.c.b16 %v4103, %v4102
        %v4155 = vpack.c.b16 %v4105, %v4104
        %v4156 = vpack.c.b16 %v4107, %v4106
        %v4157 = vpack.c.b16 %v4109, %v4108
        %v4158 = vpack.c.b16 %v4111, %v4110
        %v4159 = vpack.c.b16 %v4113, %v4112
        %v4160 = vpack.c.b16 %v4115, %v4114
        %v4161 = vpack.c.b16 %v4117, %v4116
        %v4162 = vpack.c.b16 %v4119, %v4118
        %v4163 = vpack.c.b16 %v4121, %v4120
        %v4164 = vpack.c.b16 %v4123, %v4122
        %v4165 = vpack.c.b16 %v4125, %v4124
        %4206 = vmatprep.subr.bf16.mxu0 0
        %4207 = vmatpush1.bf16.msra.mxu0 %v4133
        %4208 = vmatprep.subr.bf16.mxu0 0
        %4209 = vmatpush1.bf16.msra.mxu0 %v4132
        %4210 = vmatprep.subr.bf16.mxu0 0
        %4211 = vmatpush1.bf16.msra.mxu0 %v4131
        %4212 = vmatprep.subr.bf16.mxu0 0
        %4213 = vmatpush1.bf16.msra.mxu0 %v4130
        %4214 = vmatprep.subr.bf16.mxu0 0
        %4215 = vmatpush1.bf16.msra.mxu0 %v4129
        %4216 = vmatprep.subr.bf16.mxu0 0
        %4217 = vmatpush1.bf16.msra.mxu0 %v4128
        %4218 = vmatprep.subr.bf16.mxu0 0
        %4219 = vmatpush1.bf16.msra.mxu0 %v4127
        %4220 = vmatprep.subr.bf16.mxu0 0
        %4221 = vmatpush1.bf16.msra.mxu0 %v4126
        %4222 = vmatprep.subr.bf16.mxu0 0
        %4223 = vmatpush2.bf16.msra.mxu0 %v4141
        %4224 = vmatprep.subr.bf16.mxu0 0
        %4225 = vmatpush2.bf16.msra.mxu0 %v4140
        %4226 = vmatprep.subr.bf16.mxu0 0
        %4227 = vmatpush2.bf16.msra.mxu0 %v4139
        %4228 = vmatprep.subr.bf16.mxu0 0
        %4229 = vmatpush2.bf16.msra.mxu0 %v4138
        %4230 = vmatprep.subr.bf16.mxu0 0
        %4231 = vmatpush2.bf16.msra.mxu0 %v4137
        %4232 = vmatprep.subr.bf16.mxu0 0
        %4233 = vmatpush2.bf16.msra.mxu0 %v4136
        %4234 = vmatprep.subr.bf16.mxu0 0
        %4235 = vmatpush2.bf16.msra.mxu0 %v4135
        %4236 = vmatprep.subr.bf16.mxu0 0
        %4237 = vmatpush2.bf16.msra.mxu0 %v4134
        %4238 = vmatprep.mubr.bf16.mxu0 %v3917
        %4239 = vmatmul.mubr.bf16.gmra.mxu0 %v3916
        %v4240 = vpop.f32.mrf.mxu0
        %v4241 = vadd.f32 %v3834, %v4240
        %v4242 = vpop.f32.mrf.mxu0
        %v4243 = vpop.f32.mrf.mxu0
        %v4244 = vadd.f32 %v3834, %v4243
        %v4245 = vpop.f32.mrf.mxu0
        %4246 = vmatprep.mubr.bf16.mxu0 %v3922
        %4247 = vmatmul.mubr.bf16.gmra.mxu0 %v3921
        %v4248 = vpop.f32.mrf.mxu0
        %v4249 = vadd.f32 %v3834, %v4248
        %v4250 = vpop.f32.mrf.mxu0
        %v4251 = vpop.f32.mrf.mxu0
        %v4252 = vadd.f32 %v3834, %v4251
        %v4253 = vpop.f32.mrf.mxu0
        %4254 = vmatprep.mubr.bf16.mxu0 %v3927
        %4255 = vmatmul.mubr.bf16.gmra.mxu0 %v3926
        %v4256 = vpop.f32.mrf.mxu0
        %v4257 = vadd.f32 %v3834, %v4256
        %v4258 = vpop.f32.mrf.mxu0
        %v4259 = vpop.f32.mrf.mxu0
        %v4260 = vadd.f32 %v3834, %v4259
        %v4261 = vpop.f32.mrf.mxu0
        %4262 = vmatprep.mubr.bf16.mxu0 %v3932
        %4263 = vmatmul.mubr.bf16.gmra.mxu0 %v3931
        %v4264 = vpop.f32.mrf.mxu0
        %v4265 = vadd.f32 %v3834, %v4264
        %v4266 = vpop.f32.mrf.mxu0
        %v4267 = vpop.f32.mrf.mxu0
        %v4268 = vadd.f32 %v3834, %v4267
        %v4269 = vpop.f32.mrf.mxu0
        %4270 = vmatprep.mubr.bf16.mxu0 %v3937
        %4271 = vmatmul.mubr.bf16.gmra.mxu0 %v3936
        %v4272 = vpop.f32.mrf.mxu0
        %v4273 = vadd.f32 %v3834, %v4272
        %v4274 = vpop.f32.mrf.mxu0
        %v4275 = vpop.f32.mrf.mxu0
        %v4276 = vadd.f32 %v3834, %v4275
        %v4277 = vpop.f32.mrf.mxu0
        %4278 = vdwg.mxu0
        %4279 = vmatprep.subr.bf16.mxu0 0
        %4280 = vmatpush1.bf16.msra.mxu0 %v4149
        %4281 = vmatprep.subr.bf16.mxu0 0
        %4282 = vmatpush1.bf16.msra.mxu0 %v4148
        %4283 = vmatprep.subr.bf16.mxu0 0
        %4284 = vmatpush1.bf16.msra.mxu0 %v4147
        %4285 = vmatprep.subr.bf16.mxu0 0
        %4286 = vmatpush1.bf16.msra.mxu0 %v4146
        %4287 = vmatprep.subr.bf16.mxu0 0
        %4288 = vmatpush1.bf16.msra.mxu0 %v4145
        %4289 = vmatprep.subr.bf16.mxu0 0
        %4290 = vmatpush1.bf16.msra.mxu0 %v4144
        %4291 = vmatprep.subr.bf16.mxu0 0
        %4292 = vmatpush1.bf16.msra.mxu0 %v4143
        %4293 = vmatprep.subr.bf16.mxu0 0
        %4294 = vmatpush1.bf16.msra.mxu0 %v4142
        %4295 = vmatprep.subr.bf16.mxu0 0
        %4296 = vmatpush2.bf16.msra.mxu0 %v4157
        %4297 = vmatprep.subr.bf16.mxu0 0
        %4298 = vmatpush2.bf16.msra.mxu0 %v4156
        %4299 = vmatprep.subr.bf16.mxu0 0
        %4300 = vmatpush2.bf16.msra.mxu0 %v4155
        %4301 = vmatprep.subr.bf16.mxu0 0
        %4302 = vmatpush2.bf16.msra.mxu0 %v4154
        %4303 = vmatprep.subr.bf16.mxu0 0
        %4304 = vmatpush2.bf16.msra.mxu0 %v4153
        %4305 = vmatprep.subr.bf16.mxu0 0
        %4306 = vmatpush2.bf16.msra.mxu0 %v4152
        %4307 = vmatprep.subr.bf16.mxu0 0
        %4308 = vmatpush2.bf16.msra.mxu0 %v4151
        %4309 = vmatprep.subr.bf16.mxu0 0
        %4310 = vmatpush2.bf16.msra.mxu0 %v4150
        %4311 = vmatprep.mubr.bf16.mxu0 %v3919
        %4312 = vmatmul.mubr.bf16.gmra.mxu0 %v3918
        %v4313 = vpop.f32.mrf.mxu0
        %v4314 = vadd.f32 %v4241, %v4313
        %v4315 = vpop.f32.mrf.mxu0
        %v4316 = vpop.f32.mrf.mxu0
        %v4317 = vadd.f32 %v4244, %v4316
        %v4318 = vpop.f32.mrf.mxu0
        %4319 = vmatprep.mubr.bf16.mxu0 %v3924
        %4320 = vmatmul.mubr.bf16.gmra.mxu0 %v3923
        %v4321 = vpop.f32.mrf.mxu0
        %v4322 = vadd.f32 %v4249, %v4321
        %v4323 = vpop.f32.mrf.mxu0
        %v4324 = vpop.f32.mrf.mxu0
        %v4325 = vadd.f32 %v4252, %v4324
        %v4326 = vpop.f32.mrf.mxu0
        %4327 = vmatprep.mubr.bf16.mxu0 %v3929
        %4328 = vmatmul.mubr.bf16.gmra.mxu0 %v3928
        %v4329 = vpop.f32.mrf.mxu0
        %v4330 = vadd.f32 %v4257, %v4329
        %v4331 = vpop.f32.mrf.mxu0
        %v4332 = vpop.f32.mrf.mxu0
        %v4333 = vadd.f32 %v4260, %v4332
        %v4334 = vpop.f32.mrf.mxu0
        %4335 = vmatprep.mubr.bf16.mxu0 %v3934
        %4336 = vmatmul.mubr.bf16.gmra.mxu0 %v3933
        %v4337 = vpop.f32.mrf.mxu0
        %v4338 = vadd.f32 %v4265, %v4337
        %v4339 = vpop.f32.mrf.mxu0
        %v4340 = vpop.f32.mrf.mxu0
        %v4341 = vadd.f32 %v4268, %v4340
        %v4342 = vpop.f32.mrf.mxu0
        %4343 = vmatprep.mubr.bf16.mxu0 %v3939
        %4344 = vmatmul.mubr.bf16.gmra.mxu0 %v3938
        %v4345 = vpop.f32.mrf.mxu0
        %v4346 = vadd.f32 %v4273, %v4345
        %v4347 = vpop.f32.mrf.mxu0
        %v4348 = vpop.f32.mrf.mxu0
        %v4349 = vadd.f32 %v4276, %v4348
        %v4350 = vpop.f32.mrf.mxu0
        %4351 = vdwg.mxu0
        %4352 = vmatprep.subr.bf16.mxu0 0
        %4353 = vmatpush1.bf16.msra.mxu0 %v4165
        %4354 = vmatprep.subr.bf16.mxu0 0
        %4355 = vmatpush1.bf16.msra.mxu0 %v4164
        %4356 = vmatprep.subr.bf16.mxu0 0
        %4357 = vmatpush1.bf16.msra.mxu0 %v4163
        %4358 = vmatprep.subr.bf16.mxu0 0
        %4359 = vmatpush1.bf16.msra.mxu0 %v4162
        %4360 = vmatprep.subr.bf16.mxu0 0
        %4361 = vmatpush1.bf16.msra.mxu0 %v4161
        %4362 = vmatprep.subr.bf16.mxu0 0
        %4363 = vmatpush1.bf16.msra.mxu0 %v4160
        %4364 = vmatprep.subr.bf16.mxu0 0
        %4365 = vmatpush1.bf16.msra.mxu0 %v4159
        %4366 = vmatprep.subr.bf16.mxu0 0
        %4367 = vmatpush1.bf16.msra.mxu0 %v4158
        %4368 = vmatprep.subr.bf16.mxu0 0
        %4369 = vmatpush2.bf16.msra.mxu0 0
        %4370 = vmatprep.subr.bf16.mxu0 0
        %4371 = vmatpush2.bf16.msra.mxu0 0
        %4372 = vmatprep.subr.bf16.mxu0 0
        %4373 = vmatpush2.bf16.msra.mxu0 0
        %4374 = vmatprep.subr.bf16.mxu0 0
        %4375 = vmatpush2.bf16.msra.mxu0 0
        %4376 = vmatprep.subr.bf16.mxu0 0
        %4377 = vmatpush2.bf16.msra.mxu0 0
        %4378 = vmatprep.subr.bf16.mxu0 0
        %4379 = vmatpush2.bf16.msra.mxu0 0
        %4380 = vmatprep.subr.bf16.mxu0 0
        %4381 = vmatpush2.bf16.msra.mxu0 0
        %4382 = vmatprep.subr.bf16.mxu0 0
        %4383 = vmatpush2.bf16.msra.mxu0 0
        %4384 = vmatprep.mubr.bf16.mxu0 0
        %4385 = vmatmul.mubr.bf16.gmra.mxu0 %v3920
        %v4386 = vpop.f32.mrf.mxu0
        %v4387 = vadd.f32 %v4314, %v4386
        %v4388 = vpop.f32.mrf.mxu0
        %v4389 = vpop.f32.mrf.mxu0
        %v4390 = vadd.f32 %v4317, %v4389
        %v4391 = vpop.f32.mrf.mxu0
        %4392 = vmatprep.mubr.bf16.mxu0 0
        %4393 = vmatmul.mubr.bf16.gmra.mxu0 %v3925
        %v4394 = vpop.f32.mrf.mxu0
        %v4395 = vadd.f32 %v4322, %v4394
        %v4396 = vpop.f32.mrf.mxu0
        %v4397 = vpop.f32.mrf.mxu0
        %v4398 = vadd.f32 %v4325, %v4397
        %v4399 = vpop.f32.mrf.mxu0
        %4400 = vmatprep.mubr.bf16.mxu0 0
        %4401 = vmatmul.mubr.bf16.gmra.mxu0 %v3930
        %v4402 = vpop.f32.mrf.mxu0
        %v4403 = vadd.f32 %v4330, %v4402
        %v4404 = vpop.f32.mrf.mxu0
        %v4405 = vpop.f32.mrf.mxu0
        %v4406 = vadd.f32 %v4333, %v4405
        %v4407 = vpop.f32.mrf.mxu0
        %4408 = vmatprep.mubr.bf16.mxu0 0
        %4409 = vmatmul.mubr.bf16.gmra.mxu0 %v3935
        %v4410 = vpop.f32.mrf.mxu0
        %v4411 = vadd.f32 %v4338, %v4410
        %v4412 = vpop.f32.mrf.mxu0
        %v4413 = vpop.f32.mrf.mxu0
        %v4414 = vadd.f32 %v4341, %v4413
        %v4415 = vpop.f32.mrf.mxu0
        %4416 = vmatprep.mubr.bf16.mxu0 0
        %4417 = vmatmul.mubr.bf16.gmra.mxu0 %v3940
        %v4418 = vpop.f32.mrf.mxu0
        %v4419 = vadd.f32 %v4346, %v4418
        %v4420 = vpop.f32.mrf.mxu0
        %v4421 = vpop.f32.mrf.mxu0
        %v4422 = vadd.f32 %v4349, %v4421
        %v4423 = vpop.f32.mrf.mxu0
        %4424 = vdwg.mxu0
        %v4425 = vtanh.pop %v4387
        %v4426 = vtanh.pop %v4390
        %v4427 = vtanh.pop %v4395
        %v4428 = vtanh.pop %v4398
        %v4429 = vtanh.pop %v4403
        %v4430 = vtanh.pop %v4406
        %v4431 = vtanh.pop %v4411
        %v4432 = vtanh.pop %v4414
        %v4433 = vtanh.pop %v4419
        %v4434 = vtanh.pop %v4422
        %v4435 = vpack.c.bf16 %v4426, %v4425
        %v4436 = vpack.c.bf16 %v4428, %v4427
        %v4437 = vpack.c.bf16 %v4430, %v4429
        %v4438 = vpack.c.bf16 %v4432, %v4431
        %v4439 = vpack.c.bf16 %v4434, %v4433
        %v4445 = vunpack.c.l.b16 %v4435
        %v4446 = vunpack.c.h.b16 %v4435
        %v4447 = vunpack.c.l.b16 %v4436
        %v4448 = vunpack.c.h.b16 %v4436
        %v4449 = vunpack.c.l.b16 %v4437
        %v4450 = vunpack.c.h.b16 %v4437
        %v4451 = vunpack.c.l.b16 %v4438
        %v4452 = vunpack.c.h.b16 %v4438
        %v4453 = vunpack.c.l.b16 %v4439
        %v4454 = vunpack.c.h.b16 %v4439
        %v4455 = vpack.c.b16 %v4445, %v4445
        %v4456 = vpack.c.b16 %v4446, %v4446
        %v4457 = vpack.c.b16 %v4447, %v4447
        %v4458 = vpack.c.b16 %v4448, %v4448
        %v4459 = vpack.c.b16 %v4449, %v4449
        %v4460 = vpack.c.b16 %v4450, %v4450
        %v4461 = vpack.c.b16 %v4451, %v4451
        %v4462 = vpack.c.b16 %v4452, %v4452
        %v4463 = vpack.c.b16 %v4453, %v4453
        %v4464 = vpack.c.b16 %v4454, %v4454
        %v4465 = vrot.slane %v4455, 7
        %v4466 = vrot.slane %v4465, 4
        %v4467 = vrot.slane %v4456, 7
        %v4468 = vsel %vm741, %v4466, %v4467
        %v4469 = vrot.slane %v4467, 4
        %v4470 = vrot.slane %v4457, 7
        %v4471 = vsel %vm741, %v4469, %v4470
        %v4472 = vrot.slane %v4470, 4
        %v4473 = vrot.slane %v4458, 7
        %v4474 = vsel %vm741, %v4472, %v4473
        %v4475 = vrot.slane %v4473, 4
        %v4476 = vrot.slane %v4459, 7
        %v4477 = vsel %vm741, %v4475, %v4476
        %v4478 = vrot.slane %v4476, 4
        %v4479 = vrot.slane %v4460, 7
        %v4480 = vsel %vm741, %v4478, %v4479
        %v4481 = vrot.slane %v4479, 4
        %v4482 = vrot.slane %v4461, 7
        %v4483 = vsel %vm741, %v4481, %v4482
        %v4484 = vrot.slane %v4482, 4
        %v4485 = vrot.slane %v4462, 7
        %v4486 = vsel %vm741, %v4484, %v4485
        %v4487 = vrot.slane %v4485, 4
        %v4488 = vrot.slane %v4463, 7
        %v4489 = vsel %vm741, %v4487, %v4488
        %v4490 = vrot.slane %v4488, 4
        %v4491 = vrot.slane %v4464, 7
        %v4492 = vsel %vm741, %v4490, %v4491
        %v4493 = vrot.slane %v4491, 4
        %4505 = vst [vmem:[#allocation4] sm:$0xe] %v4465
        %4506 = vst [vmem:[#allocation4 + $0x4] sm:$0xf] %v4468
        %4507 = vst [vmem:[#allocation4 + $0x8] sm:$0xf] %v4471
        %4508 = vst [vmem:[#allocation4 + $0xc] sm:$0xf] %v4474
        %4509 = vst [vmem:[#allocation4 + $0x10] sm:$0xf] %v4477
        %4510 = vst [vmem:[#allocation4 + $0x14] sm:$0xf] %v4480
        %4511 = vst [vmem:[#allocation4 + $0x18] sm:$0xf] %v4483
        %4512 = vst [vmem:[#allocation4 + $0x1c] sm:$0xf] %v4486
        %4513 = vst [vmem:[#allocation4 + $0x20] sm:$0xf] %v4489
        %4514 = vst [vmem:[#allocation4 + $0x24] sm:$0xf] %v4492
        %4515 = vst [vmem:[#allocation4 + $0x28] sm:$0x1] %v4493
        %v4516 = vld [vmem:[#allocation4] sm:$0xf]
        %v4517 = vld [vmem:[#allocation4 + $0x4] sm:$0xf]
        %v4518 = vld [vmem:[#allocation4 + $0x8] sm:$0xf]
        %v4519 = vld [vmem:[#allocation4 + $0xc] sm:$0xf]
        %v4520 = vld [vmem:[#allocation4 + $0x10] sm:$0xf]
        %v4521 = vld [vmem:[#allocation4 + $0x14] sm:$0xf]
        %v4522 = vld [vmem:[#allocation4 + $0x18] sm:$0xf]
        %v4523 = vld [vmem:[#allocation4 + $0x1c] sm:$0xf]
        %v4524 = vld [vmem:[#allocation4 + $0x20] sm:$0xf]
        %v4525 = vld [vmem:[#allocation4 + $0x24] sm:$0xf]
        %v4526 = vunpack.c.l.bf16 %v4516
        %v4527 = vunpack.c.l.bf16 %v4517
        %v4528 = vunpack.c.l.bf16 %v4518
        %v4529 = vunpack.c.l.bf16 %v4519
        %v4530 = vunpack.c.l.bf16 %v4520
        %v4531 = vunpack.c.l.bf16 %v4521
        %v4532 = vunpack.c.l.bf16 %v4522
        %v4533 = vunpack.c.l.bf16 %v4523
        %v4534 = vunpack.c.l.bf16 %v4524
        %v4535 = vunpack.c.l.bf16 %v4525
        %v4536 = vld [vmem:[%s9] sm:$0x1]
        %v4537 = vlaneseq
        %v4538 = vshrl.u32 %v4537, 7
        %v4539 = vsub.s32 0, %v4538
        %v4540 = vrot.slane %v4536, %v4539
        %v4541 = vmul.f32 %v4526, %v4540
        %v4542 = vmul.f32 %v4527, %v4540
        %v4543 = vmul.f32 %v4528, %v4540
        %v4544 = vmul.f32 %v4529, %v4540
        %v4545 = vmul.f32 %v4530, %v4540
        %v4546 = vmul.f32 %v4531, %v4540
        %v4547 = vmul.f32 %v4532, %v4540
        %v4548 = vmul.f32 %v4533, %v4540
        %v4549 = vmul.f32 %v4534, %v4540
        %v4550 = vmul.f32 %v4535, %v4540
        %v4551 = vadd.f32 %v4541, 0.0
        %v4552 = vadd.f32 %v4542, 0.0
        %v4553 = vadd.f32 %v4543, 0.0
        %v4554 = vadd.f32 %v4544, 0.0
        %v4555 = vadd.f32 %v4545, 0.0
        %v4556 = vadd.f32 %v4546, 0.0
        %v4557 = vadd.f32 %v4547, 0.0
        %v4558 = vadd.f32 %v4548, 0.0
        %v4559 = vadd.f32 %v4549, 0.0
        %v4560 = vadd.f32 %v4550, 0.0
        %v4561 = vld [vmem:[#allocation4] sm:$0xf]
        %v4562 = vld [vmem:[#allocation4 + $0x4] sm:$0xf]
        %v4563 = vld [vmem:[#allocation4 + $0x8] sm:$0xf]
        %v4564 = vld [vmem:[#allocation4 + $0xc] sm:$0xf]
        %v4565 = vld [vmem:[#allocation4 + $0x10] sm:$0xf]
        %v4566 = vld [vmem:[#allocation4 + $0x14] sm:$0xf]
        %v4567 = vld [vmem:[#allocation4 + $0x18] sm:$0xf]
        %v4568 = vld [vmem:[#allocation4 + $0x1c] sm:$0xf]
        %v4569 = vld [vmem:[#allocation4 + $0x20] sm:$0xf]
        %v4570 = vld [vmem:[#allocation4 + $0x24] sm:$0xf]
        %v4571 = vld [vmem:[#allocation4 + $0x28] sm:$0x1]
        %v4572 = vunpack.c.l.bf16 %v4561
        %v4573 = vunpack.c.l.bf16 %v4562
        %v4574 = vunpack.c.l.bf16 %v4563
        %v4575 = vunpack.c.l.bf16 %v4564
        %v4576 = vunpack.c.l.bf16 %v4565
        %v4577 = vunpack.c.l.bf16 %v4566
        %v4578 = vunpack.c.l.bf16 %v4567
        %v4579 = vunpack.c.l.bf16 %v4568
        %v4580 = vunpack.c.l.bf16 %v4569
        %v4581 = vunpack.c.l.bf16 %v4570
        %v4582 = vunpack.c.l.bf16 %v4571
        %v4583 = vld [vmem:[%s9 + $0x1] sm:$0x1]
        %v4584 = vlaneseq
        %v4585 = vshrl.u32 %v4584, 7
        %v4586 = vsub.s32 0, %v4585
        %v4587 = vrot.slane %v4583, %v4586
        %v4588 = vmul.f32 %v4572, %v4587
        %v4589 = vmul.f32 %v4573, %v4587
        %v4590 = vmul.f32 %v4574, %v4587
        %v4591 = vmul.f32 %v4575, %v4587
        %v4592 = vmul.f32 %v4576, %v4587
        %v4593 = vmul.f32 %v4577, %v4587
        %v4594 = vmul.f32 %v4578, %v4587
        %v4595 = vmul.f32 %v4579, %v4587
        %v4596 = vmul.f32 %v4580, %v4587
        %v4597 = vmul.f32 %v4581, %v4587
        %v4598 = vmul.f32 %v4582, %v4587
        %vm4610 = vcmask 1046528
        %v4611 = vrot.slane %v4588, 1
        %v4612 = vrot.slane %v4589, 1
        %v4613 = vsel %vm4610, %v4611, %v4612
        %v4614 = vrot.slane %v4590, 1
        %v4615 = vsel %vm4610, %v4612, %v4614
        %v4616 = vrot.slane %v4591, 1
        %v4617 = vsel %vm4610, %v4614, %v4616
        %v4618 = vrot.slane %v4592, 1
        %v4619 = vsel %vm4610, %v4616, %v4618
        %v4620 = vrot.slane %v4593, 1
        %v4621 = vsel %vm4610, %v4618, %v4620
        %v4622 = vrot.slane %v4594, 1
        %v4623 = vsel %vm4610, %v4620, %v4622
        %v4624 = vrot.slane %v4595, 1
        %v4625 = vsel %vm4610, %v4622, %v4624
        %v4626 = vrot.slane %v4596, 1
        %v4627 = vsel %vm4610, %v4624, %v4626
        %v4628 = vrot.slane %v4597, 1
        %v4629 = vsel %vm4610, %v4626, %v4628
        %v4630 = vrot.slane %v4598, 1
        %v4631 = vsel %vm4610, %v4628, %v4630
        %v4642 = vadd.f32 %v4551, %v4613
        %v4643 = vadd.f32 %v4552, %v4615
        %v4644 = vadd.f32 %v4553, %v4617
        %v4645 = vadd.f32 %v4554, %v4619
        %v4646 = vadd.f32 %v4555, %v4621
        %v4647 = vadd.f32 %v4556, %v4623
        %v4648 = vadd.f32 %v4557, %v4625
        %v4649 = vadd.f32 %v4558, %v4627
        %v4650 = vadd.f32 %v4559, %v4629
        %v4651 = vadd.f32 %v4560, %v4631
        %v4652 = vld [vmem:[#allocation4] sm:$0xe]
        %v4653 = vunpack.c.l.bf16 %v4652
        %v4654 = vld [vmem:[%s9 + $0x2] sm:$0x1]
        %v4655 = vlaneseq
        %v4656 = vshrl.u32 %v4655, 7
        %v4657 = vsub.s32 0, %v4656
        %v4658 = vrot.slane %v4654, %v4657
        %v4659 = vmul.f32 %v4653, %v4658
        %v4660 = vmul.f32 %v4573, %v4658
        %v4661 = vmul.f32 %v4574, %v4658
        %v4662 = vmul.f32 %v4575, %v4658
        %v4663 = vmul.f32 %v4576, %v4658
        %v4664 = vmul.f32 %v4577, %v4658
        %v4665 = vmul.f32 %v4578, %v4658
        %v4666 = vmul.f32 %v4579, %v4658
        %v4667 = vmul.f32 %v4580, %v4658
        %v4668 = vmul.f32 %v4581, %v4658
        %v4669 = vmul.f32 %v4582, %v4658
        %vm4681 = vcmask 1045504
        %v4682 = vrot.slane %v4659, 2
        %v4683 = vrot.slane %v4660, 2
        %v4684 = vsel %vm4681, %v4682, %v4683
        %v4685 = vrot.slane %v4661, 2
        %v4686 = vsel %vm4681, %v4683, %v4685
        %v4687 = vrot.slane %v4662, 2
        %v4688 = vsel %vm4681, %v4685, %v4687
        %v4689 = vrot.slane %v4663, 2
        %v4690 = vsel %vm4681, %v4687, %v4689
        %v4691 = vrot.slane %v4664, 2
        %v4692 = vsel %vm4681, %v4689, %v4691
        %v4693 = vrot.slane %v4665, 2
        %v4694 = vsel %vm4681, %v4691, %v4693
        %v4695 = vrot.slane %v4666, 2
        %v4696 = vsel %vm4681, %v4693, %v4695
        %v4697 = vrot.slane %v4667, 2
        %v4698 = vsel %vm4681, %v4695, %v4697
        %v4699 = vrot.slane %v4668, 2
        %v4700 = vsel %vm4681, %v4697, %v4699
        %v4701 = vrot.slane %v4669, 2
        %v4702 = vsel %vm4681, %v4699, %v4701
        %v4713 = vadd.f32 %v4642, %v4684
        %v4714 = vadd.f32 %v4643, %v4686
        %v4715 = vadd.f32 %v4644, %v4688
        %v4716 = vadd.f32 %v4645, %v4690
        %v4717 = vadd.f32 %v4646, %v4692
        %v4718 = vadd.f32 %v4647, %v4694
        %v4719 = vadd.f32 %v4648, %v4696
        %v4720 = vadd.f32 %v4649, %v4698
        %v4721 = vadd.f32 %v4650, %v4700
        %v4722 = vadd.f32 %v4651, %v4702
        %v4723 = vld [vmem:[#allocation4 + $0x28] sm:$0x3]
        %v4724 = vunpack.c.l.bf16 %v4723
        %v4725 = vld [vmem:[%s9 + $0x3] sm:$0x1]
        %v4726 = vlaneseq
        %v4727 = vshrl.u32 %v4726, 7
        %v4728 = vsub.s32 0, %v4727
        %v4729 = vrot.slane %v4725, %v4728
        %v4730 = vmul.f32 %v4653, %v4729
        %v4731 = vmul.f32 %v4573, %v4729
        %v4732 = vmul.f32 %v4574, %v4729
        %v4733 = vmul.f32 %v4575, %v4729
        %v4734 = vmul.f32 %v4576, %v4729
        %v4735 = vmul.f32 %v4577, %v4729
        %v4736 = vmul.f32 %v4578, %v4729
        %v4737 = vmul.f32 %v4579, %v4729
        %v4738 = vmul.f32 %v4580, %v4729
        %v4739 = vmul.f32 %v4581, %v4729
        %v4740 = vmul.f32 %v4724, %v4729
        %vm4752 = vcmask 1044480
        %v4753 = vrot.slane %v4730, 3
        %v4754 = vrot.slane %v4731, 3
        %v4755 = vsel %vm4752, %v4753, %v4754
        %v4756 = vrot.slane %v4732, 3
        %v4757 = vsel %vm4752, %v4754, %v4756
        %v4758 = vrot.slane %v4733, 3
        %v4759 = vsel %vm4752, %v4756, %v4758
        %v4760 = vrot.slane %v4734, 3
        %v4761 = vsel %vm4752, %v4758, %v4760
        %v4762 = vrot.slane %v4735, 3
        %v4763 = vsel %vm4752, %v4760, %v4762
        %v4764 = vrot.slane %v4736, 3
        %v4765 = vsel %vm4752, %v4762, %v4764
        %v4766 = vrot.slane %v4737, 3
        %v4767 = vsel %vm4752, %v4764, %v4766
        %v4768 = vrot.slane %v4738, 3
        %v4769 = vsel %vm4752, %v4766, %v4768
        %v4770 = vrot.slane %v4739, 3
        %v4771 = vsel %vm4752, %v4768, %v4770
        %v4772 = vrot.slane %v4740, 3
        %v4773 = vsel %vm4752, %v4770, %v4772
        %v4784 = vadd.f32 %v4713, %v4755
        %v4785 = vadd.f32 %v4714, %v4757
        %v4786 = vadd.f32 %v4715, %v4759
        %v4787 = vadd.f32 %v4716, %v4761
        %v4788 = vadd.f32 %v4717, %v4763
        %v4789 = vadd.f32 %v4718, %v4765
        %v4790 = vadd.f32 %v4719, %v4767
        %v4791 = vadd.f32 %v4720, %v4769
        %v4792 = vadd.f32 %v4721, %v4771
        %v4793 = vadd.f32 %v4722, %v4773
        %v4794 = vld [vmem:[#allocation4] sm:$0xc]
        %v4795 = vunpack.c.l.bf16 %v4794
        %v4796 = vld [vmem:[%s9 + $0x4] sm:$0x1]
        %v4797 = vlaneseq
        %v4798 = vshrl.u32 %v4797, 7
        %v4799 = vsub.s32 0, %v4798
        %v4800 = vrot.slane %v4796, %v4799
        %v4801 = vmul.f32 %v4795, %v4800
        %v4802 = vmul.f32 %v4573, %v4800
        %v4803 = vmul.f32 %v4574, %v4800
        %v4804 = vmul.f32 %v4575, %v4800
        %v4805 = vmul.f32 %v4576, %v4800
        %v4806 = vmul.f32 %v4577, %v4800
        %v4807 = vmul.f32 %v4578, %v4800
        %v4808 = vmul.f32 %v4579, %v4800
        %v4809 = vmul.f32 %v4580, %v4800
        %v4810 = vmul.f32 %v4581, %v4800
        %v4811 = vmul.f32 %v4724, %v4800
        %vm4823 = vcmask 1043456
        %v4824 = vrot.slane %v4801, 4
        %v4825 = vrot.slane %v4802, 4
        %v4826 = vsel %vm4823, %v4824, %v4825
        %v4827 = vrot.slane %v4803, 4
        %v4828 = vsel %vm4823, %v4825, %v4827
        %v4829 = vrot.slane %v4804, 4
        %v4830 = vsel %vm4823, %v4827, %v4829
        %v4831 = vrot.slane %v4805, 4
        %v4832 = vsel %vm4823, %v4829, %v4831
        %v4833 = vrot.slane %v4806, 4
        %v4834 = vsel %vm4823, %v4831, %v4833
        %v4835 = vrot.slane %v4807, 4
        %v4836 = vsel %vm4823, %v4833, %v4835
        %v4837 = vrot.slane %v4808, 4
        %v4838 = vsel %vm4823, %v4835, %v4837
        %v4839 = vrot.slane %v4809, 4
        %v4840 = vsel %vm4823, %v4837, %v4839
        %v4841 = vrot.slane %v4810, 4
        %v4842 = vsel %vm4823, %v4839, %v4841
        %v4843 = vrot.slane %v4811, 4
        %v4844 = vsel %vm4823, %v4841, %v4843
        %v4855 = vadd.f32 %v4784, %v4826
        %v4856 = vadd.f32 %v4785, %v4828
        %v4857 = vadd.f32 %v4786, %v4830
        %v4858 = vadd.f32 %v4787, %v4832
        %v4859 = vadd.f32 %v4788, %v4834
        %v4860 = vadd.f32 %v4789, %v4836
        %v4861 = vadd.f32 %v4790, %v4838
        %v4862 = vadd.f32 %v4791, %v4840
        %v4863 = vadd.f32 %v4792, %v4842
        %v4864 = vadd.f32 %v4793, %v4844
        %4865 = vadd.xlane.f32.xlu0 %v4855
        %v4866 = vpop.xlane.xlu0 %4865
        %4867 = vadd.xlane.f32.xlu0 %v4856
        %v4868 = vpop.xlane.xlu0 %4867
        %4869 = vadd.xlane.f32.xlu0 %v4857
        %v4870 = vpop.xlane.xlu0 %4869
        %4871 = vadd.xlane.f32.xlu0 %v4858
        %v4872 = vpop.xlane.xlu0 %4871
        %4873 = vadd.xlane.f32.xlu0 %v4859
        %v4874 = vpop.xlane.xlu0 %4873
        %4875 = vadd.xlane.f32.xlu0 %v4860
        %v4876 = vpop.xlane.xlu0 %4875
        %4877 = vadd.xlane.f32.xlu0 %v4861
        %v4878 = vpop.xlane.xlu0 %4877
        %4879 = vadd.xlane.f32.xlu0 %v4862
        %v4880 = vpop.xlane.xlu0 %4879
        %4881 = vadd.xlane.f32.xlu0 %v4863
        %v4882 = vpop.xlane.xlu0 %4881
        %4883 = vadd.xlane.f32.xlu0 %v4864
        %v4884 = vpop.xlane.xlu0 %4883
        %v4885 = vld [vmem:[#allocation6] sm:$0x1]
        %4887 = vset.pattern.permute.xlu0 0
        %4888 = vperm.xlu0 %4887, %v4885
        %v4889 = vpop.permute.xlu0 %4888
        %v4891 = vlaneseq
        %v4892 = vshrl.u32 %v4891, 7
        %v4893 = vsub.s32 0, %v4892
        %v4894 = vrot.slane %v4889, %v4893
        %v4895 = vadd.f32 %v4866, %v4894
        %v4896 = vadd.f32 %v4868, %v4894
        %v4897 = vadd.f32 %v4870, %v4894
        %v4898 = vadd.f32 %v4872, %v4894
        %v4899 = vadd.f32 %v4874, %v4894
        %v4900 = vadd.f32 %v4876, %v4894
        %v4901 = vadd.f32 %v4878, %v4894
        %v4902 = vadd.f32 %v4880, %v4894
        %v4903 = vadd.f32 %v4882, %v4894
        %v4904 = vadd.f32 %v4884, %v4894
        %4905 = vst [vmem:[%s424] sm:$0x1] 0.0
        %v4916 = vlaneseq
        %v4917 = vand.u32 %v4916, 127
        %v4918 = vlaneseq
        %v4919 = vshrl.u32 %v4918, 7
        %v4920 = vsub.s32 %v4917, %v4919
        %v4921 = vrot.slane %v4895, %v4920
        %v4922 = vadd.s32 %v4917, 4294967288
        %v4923 = vlaneseq
        %v4924 = vshrl.u32 %v4923, 7
        %v4925 = vsub.s32 %v4922, %v4924
        %v4926 = vrot.slane %v4896, %v4925
        %vm4927 = vcmask 130112
        %v4928 = vsel %vm4927, %v4926, %v4921
        %v4929 = vadd.s32 %v4917, 4294967280
        %v4930 = vlaneseq
        %v4931 = vshrl.u32 %v4930, 7
        %v4932 = vsub.s32 %v4929, %v4931
        %v4933 = vrot.slane %v4897, %v4932
        %vm4934 = vcmask 195712
        %v4935 = vsel %vm4934, %v4933, %v4928
        %v4936 = vadd.s32 %v4917, 4294967272
        %v4937 = vlaneseq
        %v4938 = vshrl.u32 %v4937, 7
        %v4939 = vsub.s32 %v4936, %v4938
        %v4940 = vrot.slane %v4898, %v4939
        %vm4941 = vcmask 261312
        %v4942 = vsel %vm4941, %v4940, %v4935
        %v4943 = vadd.s32 %v4917, 4294967264
        %v4944 = vlaneseq
        %v4945 = vshrl.u32 %v4944, 7
        %v4946 = vsub.s32 %v4943, %v4945
        %v4947 = vrot.slane %v4899, %v4946
        %vm4948 = vcmask 326912
        %v4949 = vsel %vm4948, %v4947, %v4942
        %v4950 = vadd.s32 %v4917, 4294967256
        %v4951 = vlaneseq
        %v4952 = vshrl.u32 %v4951, 7
        %v4953 = vsub.s32 %v4950, %v4952
        %v4954 = vrot.slane %v4900, %v4953
        %vm4955 = vcmask 392512
        %v4956 = vsel %vm4955, %v4954, %v4949
        %v4957 = vadd.s32 %v4917, 4294967248
        %v4958 = vlaneseq
        %v4959 = vshrl.u32 %v4958, 7
        %v4960 = vsub.s32 %v4957, %v4959
        %v4961 = vrot.slane %v4901, %v4960
        %vm4962 = vcmask 458112
        %v4963 = vsel %vm4962, %v4961, %v4956
        %v4964 = vadd.s32 %v4917, 4294967240
        %v4965 = vlaneseq
        %v4966 = vshrl.u32 %v4965, 7
        %v4967 = vsub.s32 %v4964, %v4966
        %v4968 = vrot.slane %v4902, %v4967
        %vm4969 = vcmask 523712
        %v4970 = vsel %vm4969, %v4968, %v4963
        %v4971 = vadd.s32 %v4917, 4294967232
        %v4972 = vlaneseq
        %v4973 = vshrl.u32 %v4972, 7
        %v4974 = vsub.s32 %v4971, %v4973
        %v4975 = vrot.slane %v4903, %v4974
        %vm4976 = vcmask 589312
        %v4977 = vsel %vm4976, %v4975, %v4970
        %v4978 = vadd.s32 %v4917, 4294967224
        %v4979 = vlaneseq
        %v4980 = vshrl.u32 %v4979, 7
        %v4981 = vsub.s32 %v4978, %v4980
        %v4982 = vrot.slane %v4904, %v4981
        %vm4983 = vcmask 654912
        %v4984 = vsel %vm4983, %v4982, %v4977
        %vm4986 = vcmask 647168
        %4987 = vst.msk [vmem:[%s424] sm:$0x1] %vm4986, %v4984
        %s4988 = sand.u32 %s273, 1
        %s4989 = scalar_lea.sflag [#allocation9], %s4988
        %s4990 = sand.u32 %s273, 1
        %s4991 = scalar_lea.vmem [#allocation13], %s4990
        // Predicated region
        $region77: #{postnet_forward.1} parent=63 // pred_check
          %p4992 = pneg %p283
        $region78: #{postnet_forward.1} parent=63 // pred_check_branch
          %4994 = sbr.rel (%p4992) target = $region80
        $region79: #{postnet_forward.1} parent=63 // pred_region
          %s4996 = ssub.s32 16, 16
          %4997 = vsyncadd %s4989, %s4996
          %s4998 = smul.addr %s29, 16
          %s4999 = scalar_lea.hbm %s11, %s4998
          %s5001 = sshll.u32 %s4991, 4
          %s5002 = int_to_ptr.vmem [resolvable:$true] %s5001
          %5004 = dma.vmem_to_hbm [thread:$0]  %s5002, 16, %s4999, %s4989
        $region80: #{postnet_forward.1} parent=63 // pred_fallthru
          _
      $region64: #{postnet_forward.1} parent=5 // pred_fallthru
        _
      %p5005 = scmp.le.s32.totalorder 2, %s24
      // Predicated region
      $region81: #{postnet_forward.1} parent=5 // pred_check
        %p5006 = pneg %p5005
      $region82: #{postnet_forward.1} parent=5 // pred_check_branch
        %5008 = sbr.rel (%p5006) target = $region84
      $region83: #{postnet_forward.1} parent=5 // pred_region
        %s5009 = ssub.s32 %s24, 2
        // Predicated region
        $region85: #{postnet_forward.1} parent=83 // pred_check
          %p5010 = pneg %p289
        $region86: #{postnet_forward.1} parent=83 // pred_check_branch
          %5012 = sbr.rel (%p5010) target = $region88
        $region87: #{postnet_forward.1} parent=83 // pred_region
          %s5013 = sand.u32 %s274, 1
          %s5014 = scalar_lea.sflag [#allocation9], %s5013
          %s5015 = sand.u32 %s274, 1
          %s5016 = scalar_lea.vmem [#allocation13], %s5015
          %5017 = dma.done %s5014, 16
        $region88: #{postnet_forward.1} parent=83 // pred_fallthru
          _
      $region84: #{postnet_forward.1} parent=5 // pred_fallthru
        _
    $region6: #{postnet_forward.1} parent=1 // loop_footer
      %s28 = sadd.s32 1, %s24
    $region7: #{postnet_forward.1} parent=1 // loop_footer_branch
      %23 = sbr.rel target = $region3
    $region8: #{postnet_forward.1} parent=1 // loop_exit
      _
    %5018 = vsyncpa [#allocation8], 1
    %s5019 = scalar_lea.sflag [#allocation8], 1
    %5020 = vsyncpa %s5019, 1
    %5021 = vsyncpa [#allocation11], 1
    %5022 = vsyncpa [#allocation9], 1
    %s5023 = scalar_lea.sflag [#allocation9], 1
    %5024 = vsyncpa %s5023, 1

</llo_original>
